<compile_context>
chip_gen: v7x
topology: tpu7x:2x2x1
jax: 0.10.0
libtpu: 0.0.40
codegen_flags: <defaults>
</compile_context>

<pallas_src>
import functools

import jax
import jax.numpy as jnp
from jax.experimental import pallas as pl
from jax.experimental.pallas import tpu as pltpu


def _encoder_kernel(x_ref, *refs, seq_len, batch, num_layers):
    """Fused multi-layer LSTM forward; single invocation (no grid).

    Positional refs after x_ref:
      [wih_t, whh_t, bias] * num_layers   (inputs, kernel layout)
      out_ref (T*B, H), hn_ref (L,B,H), cn_ref (L,B,H)   (outputs)
      xg_scr (T*B, 4H), act_scr (T*B, H)                 (VMEM scratch)
    x_ref is time-major flattened: row index = t * batch + b.
    """
    T, B = seq_len, batch
    w_refs = refs[:3 * num_layers]
    out_ref, hn_ref, cn_ref, xg_scr, act_scr = refs[3 * num_layers:]
    H = hn_ref.shape[2]

    def run_layer(layer, x_val, dst_ref):
        wih_ref, whh_ref, b_ref = w_refs[3 * layer:3 * layer + 3]

        # Hoisted input-to-hidden matmul for all T timesteps at once:
        # (T*B, D_in) x (D_in, 4H) -> (T*B, 4H); bias folded in here.
        xg_scr[...] = (jnp.dot(x_val, wih_ref[...],
                               preferred_element_type=jnp.float32)
                       + b_ref[...])

        h = jnp.zeros((B, H), jnp.float32)
        c = jnp.zeros((B, H), jnp.float32)
        # Static, fully-unrolled time recurrence (T is small).
        for t in range(T):
            gates = xg_scr[t * B:(t + 1) * B, :] + jnp.dot(
                h, whh_ref[...], preferred_element_type=jnp.float32)
            # torch gate order: [i, f, g, o]
            i_g = jax.nn.sigmoid(gates[:, 0 * H:1 * H])
            f_g = jax.nn.sigmoid(gates[:, 1 * H:2 * H])
            g_g = jnp.tanh(gates[:, 2 * H:3 * H])
            o_g = jax.nn.sigmoid(gates[:, 3 * H:4 * H])
            c = f_g * c + i_g * g_g
            h = o_g * jnp.tanh(c)
            dst_ref[t * B:(t + 1) * B, :] = h.astype(dst_ref.dtype)

        # Final states written once per layer (not per timestep).
        hn_ref[layer] = h.astype(hn_ref.dtype)
        cn_ref[layer] = c.astype(cn_ref.dtype)

    cur = x_ref[...]  # (T*B, D_in) of the current layer
    for layer in range(num_layers):
        last = layer == num_layers - 1
        dst = out_ref if last else act_scr
        run_layer(layer, cur, dst)
        if not last:
            cur = act_scr[...]  # layer output stays in VMEM, no HBM round trip


def prepare_encoder_params(torch_style_params):
    """One-time conversion from PyTorch layout to kernel layout.

    Input per layer: (w_ih (4H, D_in), w_hh (4H, H), b_ih (4H,), b_hh (4H,)).
    Output per layer: (w_ih^T (D_in, 4H), w_hh^T (H, 4H), b_ih+b_hh (1, 4H)).
    """
    prepped = []
    for (w_ih, w_hh, b_ih, b_hh) in torch_style_params:
        prepped.append((
            jnp.asarray(jnp.transpose(w_ih), jnp.float32),
            jnp.asarray(jnp.transpose(w_hh), jnp.float32),
            jnp.asarray((b_ih + b_hh).reshape(1, -1), jnp.float32),
        ))
    return tuple(prepped)


@jax.jit
def encoder_forward(x, prepped_params):
    """Equivalent of Encoder.forward.

    x              : (B, T, input_size) float32 (batch_first, like PyTorch)
    prepped_params : output of prepare_encoder_params
    returns (output (B,T,H), hn (L,B,H), cn (L,B,H)); h0/c0 are zeros.
    """
    B, T, D = x.shape
    num_layers = len(prepped_params)
    H = prepped_params[0][1].shape[0]

    # time-major, flattened: row = t * B + b
    x_tm = jnp.transpose(x, (1, 0, 2)).reshape(T * B, D)

    flat_w = []
    for p in prepped_params:
        flat_w.extend(p)
    n_in = 1 + len(flat_w)

    kernel = functools.partial(_encoder_kernel, seq_len=T, batch=B,
                               num_layers=num_layers)

    out_flat, hn, cn = pl.pallas_call(
        kernel,
        out_shape=(
            jax.ShapeDtypeStruct((T * B, H), x.dtype),
            jax.ShapeDtypeStruct((num_layers, B, H), x.dtype),
            jax.ShapeDtypeStruct((num_layers, B, H), x.dtype),
        ),
        in_specs=[pl.BlockSpec(memory_space=pltpu.MemorySpace.VMEM)] * n_in,
        out_specs=(
            pl.BlockSpec(memory_space=pltpu.MemorySpace.VMEM),
            pl.BlockSpec(memory_space=pltpu.MemorySpace.VMEM),
            pl.BlockSpec(memory_space=pltpu.MemorySpace.VMEM),
        ),
        scratch_shapes=[
            pltpu.VMEM((T * B, 4 * H), jnp.float32),  # hoisted x @ W_ih^T (+b)
            pltpu.VMEM((T * B, H), jnp.float32),      # intermediate layer output
        ],
    )(x_tm, *flat_w)

    output = out_flat.reshape(T, B, H).transpose(1, 0, 2)  # back to (B, T, H)
    return output, hn, cn


def init_lstm_params(key, input_size, hidden_size, num_layers):
    """Deterministic PyTorch-style init: U(-1/sqrt(H), 1/sqrt(H)), torch shapes."""
    bound = 1.0 / jnp.sqrt(jnp.float32(hidden_size))
    params = []
    for layer in range(num_layers):
        d_in = input_size if layer == 0 else hidden_size
        key, k1, k2, k3, k4 = jax.random.split(key, 5)
        w_ih = jax.random.uniform(k1, (4 * hidden_size, d_in), jnp.float32, -bound, bound)
        w_hh = jax.random.uniform(k2, (4 * hidden_size, hidden_size), jnp.float32, -bound, bound)
        b_ih = jax.random.uniform(k3, (4 * hidden_size,), jnp.float32, -bound, bound)
        b_hh = jax.random.uniform(k4, (4 * hidden_size,), jnp.float32, -bound, bound)
        params.append((w_ih, w_hh, b_ih, b_hh))
    return tuple(params)


def _encoder_forward_ref(x, torch_params, hidden_size):
    """Pure-JAX reference (mirrors torch.nn.LSTM math) for correctness check."""
    B, T, _ = x.shape
    H = hidden_size
    layer_in = x
    hs, cs = [], []
    for (w_ih, w_hh, b_ih, b_hh) in torch_params:
        h = jnp.zeros((B, H), jnp.float32)
        c = jnp.zeros((B, H), jnp.float32)
        outs = []
        for t in range(T):
            x_t = layer_in[:, t, :]
            gates = x_t @ w_ih.T + h @ w_hh.T + b_ih + b_hh
            i_g = jax.nn.sigmoid(gates[:, 0 * H:1 * H])
            f_g = jax.nn.sigmoid(gates[:, 1 * H:2 * H])
            g_g = jnp.tanh(gates[:, 2 * H:3 * H])
            o_g = jax.nn.sigmoid(gates[:, 3 * H:4 * H])
            c = f_g * c + i_g * g_g
            h = o_g * jnp.tanh(c)
            outs.append(h)
        layer_in = jnp.stack(outs, axis=1)
        hs.append(h)
        cs.append(c)
    return layer_in, jnp.stack(hs, axis=0), jnp.stack(cs, axis=0)


if __name__ == "__main__":
    # Shapes consistent with the module (hidden_size=128, input_size=100, num_layers=2).
    batch = 2
    seq_len = 8
    input_size = 100
    hidden_size = 128
    num_layers = 2

    key = jax.random.PRNGKey(0)
    key, kx, kp = jax.random.split(key, 3)
    x = jax.random.normal(kx, (batch, seq_len, input_size), jnp.float32)

    torch_params = init_lstm_params(kp, input_size, hidden_size, num_layers)
    params = prepare_encoder_params(torch_params)  # one-time layout conversion

    output, hn, cn = encoder_forward(x, params)
    jax.block_until_ready((output, hn, cn))

    # Correctness check against a pure-JAX reference of the same LSTM math.
    out_r, hn_r, cn_r = _encoder_forward_ref(x, torch_params, hidden_size)
    assert output.shape == (batch, seq_len, hidden_size)
    assert hn.shape == (num_layers, batch, hidden_size)
    assert cn.shape == (num_layers, batch, hidden_size)
    assert jnp.allclose(output, out_r, atol=1e-5, rtol=1e-5)
    assert jnp.allclose(hn, hn_r, atol=1e-5, rtol=1e-5)
    assert jnp.allclose(cn, cn_r, atol=1e-5, rtol=1e-5)

    print("KERNEL_OK")
</pallas_src>

<mosaic_0001>
module attributes {stable_mosaic.version = 11 : i64} {
  func.func @_encoder_kernel(%arg0: memref<16x100xf32, #tpu.memory_space<vmem>>, %arg1: memref<100x512xf32, #tpu.memory_space<vmem>>, %arg2: memref<128x512xf32, #tpu.memory_space<vmem>>, %arg3: memref<1x512xf32, #tpu.memory_space<vmem>>, %arg4: memref<128x512xf32, #tpu.memory_space<vmem>>, %arg5: memref<128x512xf32, #tpu.memory_space<vmem>>, %arg6: memref<1x512xf32, #tpu.memory_space<vmem>>, %arg7: memref<16x128xf32, #tpu.memory_space<vmem>>, %arg8: memref<2x2x128xf32, #tpu.memory_space<vmem>>, %arg9: memref<2x2x128xf32, #tpu.memory_space<vmem>>, %arg10: memref<16x512xf32, #tpu.memory_space<vmem>>, %arg11: memref<16x128xf32, #tpu.memory_space<vmem>>) attributes {dimension_semantics = [], scalar_prefetch = 0 : i64, scratch_operands = 2 : i64, tpu.core_type = #tpu.core_type<tc>} {
    %c0 = arith.constant 0 : index
    %c0_0 = arith.constant 0 : index
    %0 = vector.load %arg0[%c0, %c0_0] : memref<16x100xf32, #tpu.memory_space<vmem>>, vector<16x100xf32>
    %c0_1 = arith.constant 0 : index
    %c0_2 = arith.constant 0 : index
    %1 = vector.load %arg1[%c0_1, %c0_2] : memref<100x512xf32, #tpu.memory_space<vmem>>, vector<100x512xf32>
    %cst = arith.constant dense<0.000000e+00> : vector<16x512xf32>
    %2 = tpu.matmul %0, %1, %cst {dimension_numbers = #tpu.dot_dimension_numbers<[1], [0], [0], [1], [0, 0, 1, 1], [], []>} : vector<16x100xf32>, vector<100x512xf32>, vector<16x512xf32> -> vector<16x512xf32>
    %c0_3 = arith.constant 0 : index
    %c0_4 = arith.constant 0 : index
    %3 = vector.load %arg3[%c0_3, %c0_4] : memref<1x512xf32, #tpu.memory_space<vmem>>, vector<1x512xf32>
    %4 = vector.broadcast %3 : vector<1x512xf32> to vector<16x512xf32>
    %5 = arith.addf %2, %4 : vector<16x512xf32>
    %c0_5 = arith.constant 0 : index
    %c0_6 = arith.constant 0 : index
    %6 = vector.load %arg10[%c0_5, %c0_6] : memref<16x512xf32, #tpu.memory_space<vmem>>, vector<16x512xf32>
    tpu.vector_store %arg10[%c0_5, %c0_6], %5 {strides = array<i32>} : memref<16x512xf32, #tpu.memory_space<vmem>>, vector<16x512xf32>,
    %cst_7 = arith.constant 0.000000e+00 : f32
    %7 = vector.broadcast %cst_7 : f32 to vector<2x128xf32>
    %cst_8 = arith.constant 0.000000e+00 : f32
    %8 = vector.broadcast %cst_8 : f32 to vector<2x128xf32>
    %c0_9 = arith.constant 0 : index
    %c0_10 = arith.constant 0 : index
    %9 = vector.load %arg10[%c0_9, %c0_10] : memref<16x512xf32, #tpu.memory_space<vmem>>, vector<2x512xf32>
    %c0_11 = arith.constant 0 : index
    %c0_12 = arith.constant 0 : index
    %10 = vector.load %arg2[%c0_11, %c0_12] : memref<128x512xf32, #tpu.memory_space<vmem>>, vector<128x512xf32>
    %cst_13 = arith.constant dense<0.000000e+00> : vector<2x512xf32>
    %11 = tpu.matmul %7, %10, %cst_13 {dimension_numbers = #tpu.dot_dimension_numbers<[1], [0], [0], [1], [0, 0, 1, 1], [], []>} : vector<2x128xf32>, vector<128x512xf32>, vector<2x512xf32> -> vector<2x512xf32>
    %12 = arith.addf %9, %11 : vector<2x512xf32>
    %13 = vector.extract_strided_slice %12 {offsets = [0, 0], sizes = [2, 128], strides = [1, 1]} : vector<2x512xf32> to vector<2x128xf32>
    %14 = arith.negf %13 : vector<2x128xf32>
    %15 = math.exp %14 : vector<2x128xf32>
    %cst_14 = arith.constant 1.000000e+00 : f32
    %16 = vector.broadcast %cst_14 : f32 to vector<2x128xf32>
    %17 = arith.addf %16, %15 : vector<2x128xf32>
    %18 = arith.divf %16, %17 : vector<2x128xf32>
    %19 = vector.extract_strided_slice %12 {offsets = [0, 128], sizes = [2, 128], strides = [1, 1]} : vector<2x512xf32> to vector<2x128xf32>
    %20 = arith.negf %19 : vector<2x128xf32>
    %21 = math.exp %20 : vector<2x128xf32>
    %cst_15 = arith.constant 1.000000e+00 : f32
    %22 = vector.broadcast %cst_15 : f32 to vector<2x128xf32>
    %23 = arith.addf %22, %21 : vector<2x128xf32>
    %24 = arith.divf %22, %23 : vector<2x128xf32>
    %25 = vector.extract_strided_slice %12 {offsets = [0, 256], sizes = [2, 128], strides = [1, 1]} : vector<2x512xf32> to vector<2x128xf32>
    %26 = math.tanh %25 : vector<2x128xf32>
    %27 = vector.extract_strided_slice %12 {offsets = [0, 384], sizes = [2, 128], strides = [1, 1]} : vector<2x512xf32> to vector<2x128xf32>
    %28 = arith.negf %27 : vector<2x128xf32>
    %29 = math.exp %28 : vector<2x128xf32>
    %cst_16 = arith.constant 1.000000e+00 : f32
    %30 = vector.broadcast %cst_16 : f32 to vector<2x128xf32>
    %31 = arith.addf %30, %29 : vector<2x128xf32>
    %32 = arith.divf %30, %31 : vector<2x128xf32>
    %33 = arith.mulf %24, %8 : vector<2x128xf32>
    %34 = arith.mulf %18, %26 : vector<2x128xf32>
    %35 = arith.addf %33, %34 : vector<2x128xf32>
    %36 = math.tanh %35 : vector<2x128xf32>
    %37 = arith.mulf %32, %36 : vector<2x128xf32>
    %c0_17 = arith.constant 0 : index
    %c0_18 = arith.constant 0 : index
    %38 = vector.load %arg11[%c0_17, %c0_18] : memref<16x128xf32, #tpu.memory_space<vmem>>, vector<2x128xf32>
    tpu.vector_store %arg11[%c0_17, %c0_18], %37 {strides = array<i32>} : memref<16x128xf32, #tpu.memory_space<vmem>>, vector<2x128xf32>,
    %c2 = arith.constant 2 : index
    %c0_19 = arith.constant 0 : index
    %39 = vector.load %arg10[%c2, %c0_19] : memref<16x512xf32, #tpu.memory_space<vmem>>, vector<2x512xf32>
    %c0_20 = arith.constant 0 : index
    %c0_21 = arith.constant 0 : index
    %40 = vector.load %arg2[%c0_20, %c0_21] : memref<128x512xf32, #tpu.memory_space<vmem>>, vector<128x512xf32>
    %cst_22 = arith.constant dense<0.000000e+00> : vector<2x512xf32>
    %41 = tpu.matmul %37, %40, %cst_22 {dimension_numbers = #tpu.dot_dimension_numbers<[1], [0], [0], [1], [0, 0, 1, 1], [], []>} : vector<2x128xf32>, vector<128x512xf32>, vector<2x512xf32> -> vector<2x512xf32>
    %42 = arith.addf %39, %41 : vector<2x512xf32>
    %43 = vector.extract_strided_slice %42 {offsets = [0, 0], sizes = [2, 128], strides = [1, 1]} : vector<2x512xf32> to vector<2x128xf32>
    %44 = arith.negf %43 : vector<2x128xf32>
    %45 = math.exp %44 : vector<2x128xf32>
    %cst_23 = arith.constant 1.000000e+00 : f32
    %46 = vector.broadcast %cst_23 : f32 to vector<2x128xf32>
    %47 = arith.addf %46, %45 : vector<2x128xf32>
    %48 = arith.divf %46, %47 : vector<2x128xf32>
    %49 = vector.extract_strided_slice %42 {offsets = [0, 128], sizes = [2, 128], strides = [1, 1]} : vector<2x512xf32> to vector<2x128xf32>
    %50 = arith.negf %49 : vector<2x128xf32>
    %51 = math.exp %50 : vector<2x128xf32>
    %cst_24 = arith.constant 1.000000e+00 : f32
    %52 = vector.broadcast %cst_24 : f32 to vector<2x128xf32>
    %53 = arith.addf %52, %51 : vector<2x128xf32>
    %54 = arith.divf %52, %53 : vector<2x128xf32>
    %55 = vector.extract_strided_slice %42 {offsets = [0, 256], sizes = [2, 128], strides = [1, 1]} : vector<2x512xf32> to vector<2x128xf32>
    %56 = math.tanh %55 : vector<2x128xf32>
    %57 = vector.extract_strided_slice %42 {offsets = [0, 384], sizes = [2, 128], strides = [1, 1]} : vector<2x512xf32> to vector<2x128xf32>
    %58 = arith.negf %57 : vector<2x128xf32>
    %59 = math.exp %58 : vector<2x128xf32>
    %cst_25 = arith.constant 1.000000e+00 : f32
    %60 = vector.broadcast %cst_25 : f32 to vector<2x128xf32>
    %61 = arith.addf %60, %59 : vector<2x128xf32>
    %62 = arith.divf %60, %61 : vector<2x128xf32>
    %63 = arith.mulf %54, %35 : vector<2x128xf32>
    %64 = arith.mulf %48, %56 : vector<2x128xf32>
    %65 = arith.addf %63, %64 : vector<2x128xf32>
    %66 = math.tanh %65 : vector<2x128xf32>
    %67 = arith.mulf %62, %66 : vector<2x128xf32>
    %c2_26 = arith.constant 2 : index
    %c0_27 = arith.constant 0 : index
    %68 = vector.load %arg11[%c2_26, %c0_27] : memref<16x128xf32, #tpu.memory_space<vmem>>, vector<2x128xf32>
    tpu.vector_store %arg11[%c2_26, %c0_27], %67 {strides = array<i32>} : memref<16x128xf32, #tpu.memory_space<vmem>>, vector<2x128xf32>,
    %c4 = arith.constant 4 : index
    %c0_28 = arith.constant 0 : index
    %69 = vector.load %arg10[%c4, %c0_28] : memref<16x512xf32, #tpu.memory_space<vmem>>, vector<2x512xf32>
    %c0_29 = arith.constant 0 : index
    %c0_30 = arith.constant 0 : index
    %70 = vector.load %arg2[%c0_29, %c0_30] : memref<128x512xf32, #tpu.memory_space<vmem>>, vector<128x512xf32>
    %cst_31 = arith.constant dense<0.000000e+00> : vector<2x512xf32>
    %71 = tpu.matmul %67, %70, %cst_31 {dimension_numbers = #tpu.dot_dimension_numbers<[1], [0], [0], [1], [0, 0, 1, 1], [], []>} : vector<2x128xf32>, vector<128x512xf32>, vector<2x512xf32> -> vector<2x512xf32>
    %72 = arith.addf %69, %71 : vector<2x512xf32>
    %73 = vector.extract_strided_slice %72 {offsets = [0, 0], sizes = [2, 128], strides = [1, 1]} : vector<2x512xf32> to vector<2x128xf32>
    %74 = arith.negf %73 : vector<2x128xf32>
    %75 = math.exp %74 : vector<2x128xf32>
    %cst_32 = arith.constant 1.000000e+00 : f32
    %76 = vector.broadcast %cst_32 : f32 to vector<2x128xf32>
    %77 = arith.addf %76, %75 : vector<2x128xf32>
    %78 = arith.divf %76, %77 : vector<2x128xf32>
    %79 = vector.extract_strided_slice %72 {offsets = [0, 128], sizes = [2, 128], strides = [1, 1]} : vector<2x512xf32> to vector<2x128xf32>
    %80 = arith.negf %79 : vector<2x128xf32>
    %81 = math.exp %80 : vector<2x128xf32>
    %cst_33 = arith.constant 1.000000e+00 : f32
    %82 = vector.broadcast %cst_33 : f32 to vector<2x128xf32>
    %83 = arith.addf %82, %81 : vector<2x128xf32>
    %84 = arith.divf %82, %83 : vector<2x128xf32>
    %85 = vector.extract_strided_slice %72 {offsets = [0, 256], sizes = [2, 128], strides = [1, 1]} : vector<2x512xf32> to vector<2x128xf32>
    %86 = math.tanh %85 : vector<2x128xf32>
    %87 = vector.extract_strided_slice %72 {offsets = [0, 384], sizes = [2, 128], strides = [1, 1]} : vector<2x512xf32> to vector<2x128xf32>
    %88 = arith.negf %87 : vector<2x128xf32>
    %89 = math.exp %88 : vector<2x128xf32>
    %cst_34 = arith.constant 1.000000e+00 : f32
    %90 = vector.broadcast %cst_34 : f32 to vector<2x128xf32>
    %91 = arith.addf %90, %89 : vector<2x128xf32>
    %92 = arith.divf %90, %91 : vector<2x128xf32>
    %93 = arith.mulf %84, %65 : vector<2x128xf32>
    %94 = arith.mulf %78, %86 : vector<2x128xf32>
    %95 = arith.addf %93, %94 : vector<2x128xf32>
    %96 = math.tanh %95 : vector<2x128xf32>
    %97 = arith.mulf %92, %96 : vector<2x128xf32>
    %c4_35 = arith.constant 4 : index
    %c0_36 = arith.constant 0 : index
    %98 = vector.load %arg11[%c4_35, %c0_36] : memref<16x128xf32, #tpu.memory_space<vmem>>, vector<2x128xf32>
    tpu.vector_store %arg11[%c4_35, %c0_36], %97 {strides = array<i32>} : memref<16x128xf32, #tpu.memory_space<vmem>>, vector<2x128xf32>,
    %c6 = arith.constant 6 : index
    %c0_37 = arith.constant 0 : index
    %99 = vector.load %arg10[%c6, %c0_37] : memref<16x512xf32, #tpu.memory_space<vmem>>, vector<2x512xf32>
    %c0_38 = arith.constant 0 : index
    %c0_39 = arith.constant 0 : index
    %100 = vector.load %arg2[%c0_38, %c0_39] : memref<128x512xf32, #tpu.memory_space<vmem>>, vector<128x512xf32>
    %cst_40 = arith.constant dense<0.000000e+00> : vector<2x512xf32>
    %101 = tpu.matmul %97, %100, %cst_40 {dimension_numbers = #tpu.dot_dimension_numbers<[1], [0], [0], [1], [0, 0, 1, 1], [], []>} : vector<2x128xf32>, vector<128x512xf32>, vector<2x512xf32> -> vector<2x512xf32>
    %102 = arith.addf %99, %101 : vector<2x512xf32>
    %103 = vector.extract_strided_slice %102 {offsets = [0, 0], sizes = [2, 128], strides = [1, 1]} : vector<2x512xf32> to vector<2x128xf32>
    %104 = arith.negf %103 : vector<2x128xf32>
    %105 = math.exp %104 : vector<2x128xf32>
    %cst_41 = arith.constant 1.000000e+00 : f32
    %106 = vector.broadcast %cst_41 : f32 to vector<2x128xf32>
    %107 = arith.addf %106, %105 : vector<2x128xf32>
    %108 = arith.divf %106, %107 : vector<2x128xf32>
    %109 = vector.extract_strided_slice %102 {offsets = [0, 128], sizes = [2, 128], strides = [1, 1]} : vector<2x512xf32> to vector<2x128xf32>
    %110 = arith.negf %109 : vector<2x128xf32>
    %111 = math.exp %110 : vector<2x128xf32>
    %cst_42 = arith.constant 1.000000e+00 : f32
    %112 = vector.broadcast %cst_42 : f32 to vector<2x128xf32>
    %113 = arith.addf %112, %111 : vector<2x128xf32>
    %114 = arith.divf %112, %113 : vector<2x128xf32>
    %115 = vector.extract_strided_slice %102 {offsets = [0, 256], sizes = [2, 128], strides = [1, 1]} : vector<2x512xf32> to vector<2x128xf32>
    %116 = math.tanh %115 : vector<2x128xf32>
    %117 = vector.extract_strided_slice %102 {offsets = [0, 384], sizes = [2, 128], strides = [1, 1]} : vector<2x512xf32> to vector<2x128xf32>
    %118 = arith.negf %117 : vector<2x128xf32>
    %119 = math.exp %118 : vector<2x128xf32>
    %cst_43 = arith.constant 1.000000e+00 : f32
    %120 = vector.broadcast %cst_43 : f32 to vector<2x128xf32>
    %121 = arith.addf %120, %119 : vector<2x128xf32>
    %122 = arith.divf %120, %121 : vector<2x128xf32>
    %123 = arith.mulf %114, %95 : vector<2x128xf32>
    %124 = arith.mulf %108, %116 : vector<2x128xf32>
    %125 = arith.addf %123, %124 : vector<2x128xf32>
    %126 = math.tanh %125 : vector<2x128xf32>
    %127 = arith.mulf %122, %126 : vector<2x128xf32>
    %c6_44 = arith.constant 6 : index
    %c0_45 = arith.constant 0 : index
    %128 = vector.load %arg11[%c6_44, %c0_45] : memref<16x128xf32, #tpu.memory_space<vmem>>, vector<2x128xf32>
    tpu.vector_store %arg11[%c6_44, %c0_45], %127 {strides = array<i32>} : memref<16x128xf32, #tpu.memory_space<vmem>>, vector<2x128xf32>,
    %c8 = arith.constant 8 : index
    %c0_46 = arith.constant 0 : index
    %129 = vector.load %arg10[%c8, %c0_46] : memref<16x512xf32, #tpu.memory_space<vmem>>, vector<2x512xf32>
    %c0_47 = arith.constant 0 : index
    %c0_48 = arith.constant 0 : index
    %130 = vector.load %arg2[%c0_47, %c0_48] : memref<128x512xf32, #tpu.memory_space<vmem>>, vector<128x512xf32>
    %cst_49 = arith.constant dense<0.000000e+00> : vector<2x512xf32>
    %131 = tpu.matmul %127, %130, %cst_49 {dimension_numbers = #tpu.dot_dimension_numbers<[1], [0], [0], [1], [0, 0, 1, 1], [], []>} : vector<2x128xf32>, vector<128x512xf32>, vector<2x512xf32> -> vector<2x512xf32>
    %132 = arith.addf %129, %131 : vector<2x512xf32>
    %133 = vector.extract_strided_slice %132 {offsets = [0, 0], sizes = [2, 128], strides = [1, 1]} : vector<2x512xf32> to vector<2x128xf32>
    %134 = arith.negf %133 : vector<2x128xf32>
    %135 = math.exp %134 : vector<2x128xf32>
    %cst_50 = arith.constant 1.000000e+00 : f32
    %136 = vector.broadcast %cst_50 : f32 to vector<2x128xf32>
    %137 = arith.addf %136, %135 : vector<2x128xf32>
    %138 = arith.divf %136, %137 : vector<2x128xf32>
    %139 = vector.extract_strided_slice %132 {offsets = [0, 128], sizes = [2, 128], strides = [1, 1]} : vector<2x512xf32> to vector<2x128xf32>
    %140 = arith.negf %139 : vector<2x128xf32>
    %141 = math.exp %140 : vector<2x128xf32>
    %cst_51 = arith.constant 1.000000e+00 : f32
    %142 = vector.broadcast %cst_51 : f32 to vector<2x128xf32>
    %143 = arith.addf %142, %141 : vector<2x128xf32>
    %144 = arith.divf %142, %143 : vector<2x128xf32>
    %145 = vector.extract_strided_slice %132 {offsets = [0, 256], sizes = [2, 128], strides = [1, 1]} : vector<2x512xf32> to vector<2x128xf32>
    %146 = math.tanh %145 : vector<2x128xf32>
    %147 = vector.extract_strided_slice %132 {offsets = [0, 384], sizes = [2, 128], strides = [1, 1]} : vector<2x512xf32> to vector<2x128xf32>
    %148 = arith.negf %147 : vector<2x128xf32>
    %149 = math.exp %148 : vector<2x128xf32>
    %cst_52 = arith.constant 1.000000e+00 : f32
    %150 = vector.broadcast %cst_52 : f32 to vector<2x128xf32>
    %151 = arith.addf %150, %149 : vector<2x128xf32>
    %152 = arith.divf %150, %151 : vector<2x128xf32>
    %153 = arith.mulf %144, %125 : vector<2x128xf32>
    %154 = arith.mulf %138, %146 : vector<2x128xf32>
    %155 = arith.addf %153, %154 : vector<2x128xf32>
    %156 = math.tanh %155 : vector<2x128xf32>
    %157 = arith.mulf %152, %156 : vector<2x128xf32>
    %c8_53 = arith.constant 8 : index
    %c0_54 = arith.constant 0 : index
    %158 = vector.load %arg11[%c8_53, %c0_54] : memref<16x128xf32, #tpu.memory_space<vmem>>, vector<2x128xf32>
    tpu.vector_store %arg11[%c8_53, %c0_54], %157 {strides = array<i32>} : memref<16x128xf32, #tpu.memory_space<vmem>>, vector<2x128xf32>,
    %c10 = arith.constant 10 : index
    %c0_55 = arith.constant 0 : index
    %159 = vector.load %arg10[%c10, %c0_55] : memref<16x512xf32, #tpu.memory_space<vmem>>, vector<2x512xf32>
    %c0_56 = arith.constant 0 : index
    %c0_57 = arith.constant 0 : index
    %160 = vector.load %arg2[%c0_56, %c0_57] : memref<128x512xf32, #tpu.memory_space<vmem>>, vector<128x512xf32>
    %cst_58 = arith.constant dense<0.000000e+00> : vector<2x512xf32>
    %161 = tpu.matmul %157, %160, %cst_58 {dimension_numbers = #tpu.dot_dimension_numbers<[1], [0], [0], [1], [0, 0, 1, 1], [], []>} : vector<2x128xf32>, vector<128x512xf32>, vector<2x512xf32> -> vector<2x512xf32>
    %162 = arith.addf %159, %161 : vector<2x512xf32>
    %163 = vector.extract_strided_slice %162 {offsets = [0, 0], sizes = [2, 128], strides = [1, 1]} : vector<2x512xf32> to vector<2x128xf32>
    %164 = arith.negf %163 : vector<2x128xf32>
    %165 = math.exp %164 : vector<2x128xf32>
    %cst_59 = arith.constant 1.000000e+00 : f32
    %166 = vector.broadcast %cst_59 : f32 to vector<2x128xf32>
    %167 = arith.addf %166, %165 : vector<2x128xf32>
    %168 = arith.divf %166, %167 : vector<2x128xf32>
    %169 = vector.extract_strided_slice %162 {offsets = [0, 128], sizes = [2, 128], strides = [1, 1]} : vector<2x512xf32> to vector<2x128xf32>
    %170 = arith.negf %169 : vector<2x128xf32>
    %171 = math.exp %170 : vector<2x128xf32>
    %cst_60 = arith.constant 1.000000e+00 : f32
    %172 = vector.broadcast %cst_60 : f32 to vector<2x128xf32>
    %173 = arith.addf %172, %171 : vector<2x128xf32>
    %174 = arith.divf %172, %173 : vector<2x128xf32>
    %175 = vector.extract_strided_slice %162 {offsets = [0, 256], sizes = [2, 128], strides = [1, 1]} : vector<2x512xf32> to vector<2x128xf32>
    %176 = math.tanh %175 : vector<2x128xf32>
    %177 = vector.extract_strided_slice %162 {offsets = [0, 384], sizes = [2, 128], strides = [1, 1]} : vector<2x512xf32> to vector<2x128xf32>
    %178 = arith.negf %177 : vector<2x128xf32>
    %179 = math.exp %178 : vector<2x128xf32>
    %cst_61 = arith.constant 1.000000e+00 : f32
    %180 = vector.broadcast %cst_61 : f32 to vector<2x128xf32>
    %181 = arith.addf %180, %179 : vector<2x128xf32>
    %182 = arith.divf %180, %181 : vector<2x128xf32>
    %183 = arith.mulf %174, %155 : vector<2x128xf32>
    %184 = arith.mulf %168, %176 : vector<2x128xf32>
    %185 = arith.addf %183, %184 : vector<2x128xf32>
    %186 = math.tanh %185 : vector<2x128xf32>
    %187 = arith.mulf %182, %186 : vector<2x128xf32>
    %c10_62 = arith.constant 10 : index
    %c0_63 = arith.constant 0 : index
    %188 = vector.load %arg11[%c10_62, %c0_63] : memref<16x128xf32, #tpu.memory_space<vmem>>, vector<2x128xf32>
    tpu.vector_store %arg11[%c10_62, %c0_63], %187 {strides = array<i32>} : memref<16x128xf32, #tpu.memory_space<vmem>>, vector<2x128xf32>,
    %c12 = arith.constant 12 : index
    %c0_64 = arith.constant 0 : index
    %189 = vector.load %arg10[%c12, %c0_64] : memref<16x512xf32, #tpu.memory_space<vmem>>, vector<2x512xf32>
    %c0_65 = arith.constant 0 : index
    %c0_66 = arith.constant 0 : index
    %190 = vector.load %arg2[%c0_65, %c0_66] : memref<128x512xf32, #tpu.memory_space<vmem>>, vector<128x512xf32>
    %cst_67 = arith.constant dense<0.000000e+00> : vector<2x512xf32>
    %191 = tpu.matmul %187, %190, %cst_67 {dimension_numbers = #tpu.dot_dimension_numbers<[1], [0], [0], [1], [0, 0, 1, 1], [], []>} : vector<2x128xf32>, vector<128x512xf32>, vector<2x512xf32> -> vector<2x512xf32>
    %192 = arith.addf %189, %191 : vector<2x512xf32>
    %193 = vector.extract_strided_slice %192 {offsets = [0, 0], sizes = [2, 128], strides = [1, 1]} : vector<2x512xf32> to vector<2x128xf32>
    %194 = arith.negf %193 : vector<2x128xf32>
    %195 = math.exp %194 : vector<2x128xf32>
    %cst_68 = arith.constant 1.000000e+00 : f32
    %196 = vector.broadcast %cst_68 : f32 to vector<2x128xf32>
    %197 = arith.addf %196, %195 : vector<2x128xf32>
    %198 = arith.divf %196, %197 : vector<2x128xf32>
    %199 = vector.extract_strided_slice %192 {offsets = [0, 128], sizes = [2, 128], strides = [1, 1]} : vector<2x512xf32> to vector<2x128xf32>
    %200 = arith.negf %199 : vector<2x128xf32>
    %201 = math.exp %200 : vector<2x128xf32>
    %cst_69 = arith.constant 1.000000e+00 : f32
    %202 = vector.broadcast %cst_69 : f32 to vector<2x128xf32>
    %203 = arith.addf %202, %201 : vector<2x128xf32>
    %204 = arith.divf %202, %203 : vector<2x128xf32>
    %205 = vector.extract_strided_slice %192 {offsets = [0, 256], sizes = [2, 128], strides = [1, 1]} : vector<2x512xf32> to vector<2x128xf32>
    %206 = math.tanh %205 : vector<2x128xf32>
    %207 = vector.extract_strided_slice %192 {offsets = [0, 384], sizes = [2, 128], strides = [1, 1]} : vector<2x512xf32> to vector<2x128xf32>
    %208 = arith.negf %207 : vector<2x128xf32>
    %209 = math.exp %208 : vector<2x128xf32>
    %cst_70 = arith.constant 1.000000e+00 : f32
    %210 = vector.broadcast %cst_70 : f32 to vector<2x128xf32>
    %211 = arith.addf %210, %209 : vector<2x128xf32>
    %212 = arith.divf %210, %211 : vector<2x128xf32>
    %213 = arith.mulf %204, %185 : vector<2x128xf32>
    %214 = arith.mulf %198, %206 : vector<2x128xf32>
    %215 = arith.addf %213, %214 : vector<2x128xf32>
    %216 = math.tanh %215 : vector<2x128xf32>
    %217 = arith.mulf %212, %216 : vector<2x128xf32>
    %c12_71 = arith.constant 12 : index
    %c0_72 = arith.constant 0 : index
    %218 = vector.load %arg11[%c12_71, %c0_72] : memref<16x128xf32, #tpu.memory_space<vmem>>, vector<2x128xf32>
    tpu.vector_store %arg11[%c12_71, %c0_72], %217 {strides = array<i32>} : memref<16x128xf32, #tpu.memory_space<vmem>>, vector<2x128xf32>,
    %c14 = arith.constant 14 : index
    %c0_73 = arith.constant 0 : index
    %219 = vector.load %arg10[%c14, %c0_73] : memref<16x512xf32, #tpu.memory_space<vmem>>, vector<2x512xf32>
    %c0_74 = arith.constant 0 : index
    %c0_75 = arith.constant 0 : index
    %220 = vector.load %arg2[%c0_74, %c0_75] : memref<128x512xf32, #tpu.memory_space<vmem>>, vector<128x512xf32>
    %cst_76 = arith.constant dense<0.000000e+00> : vector<2x512xf32>
    %221 = tpu.matmul %217, %220, %cst_76 {dimension_numbers = #tpu.dot_dimension_numbers<[1], [0], [0], [1], [0, 0, 1, 1], [], []>} : vector<2x128xf32>, vector<128x512xf32>, vector<2x512xf32> -> vector<2x512xf32>
    %222 = arith.addf %219, %221 : vector<2x512xf32>
    %223 = vector.extract_strided_slice %222 {offsets = [0, 0], sizes = [2, 128], strides = [1, 1]} : vector<2x512xf32> to vector<2x128xf32>
    %224 = arith.negf %223 : vector<2x128xf32>
    %225 = math.exp %224 : vector<2x128xf32>
    %cst_77 = arith.constant 1.000000e+00 : f32
    %226 = vector.broadcast %cst_77 : f32 to vector<2x128xf32>
    %227 = arith.addf %226, %225 : vector<2x128xf32>
    %228 = arith.divf %226, %227 : vector<2x128xf32>
    %229 = vector.extract_strided_slice %222 {offsets = [0, 128], sizes = [2, 128], strides = [1, 1]} : vector<2x512xf32> to vector<2x128xf32>
    %230 = arith.negf %229 : vector<2x128xf32>
    %231 = math.exp %230 : vector<2x128xf32>
    %cst_78 = arith.constant 1.000000e+00 : f32
    %232 = vector.broadcast %cst_78 : f32 to vector<2x128xf32>
    %233 = arith.addf %232, %231 : vector<2x128xf32>
    %234 = arith.divf %232, %233 : vector<2x128xf32>
    %235 = vector.extract_strided_slice %222 {offsets = [0, 256], sizes = [2, 128], strides = [1, 1]} : vector<2x512xf32> to vector<2x128xf32>
    %236 = math.tanh %235 : vector<2x128xf32>
    %237 = vector.extract_strided_slice %222 {offsets = [0, 384], sizes = [2, 128], strides = [1, 1]} : vector<2x512xf32> to vector<2x128xf32>
    %238 = arith.negf %237 : vector<2x128xf32>
    %239 = math.exp %238 : vector<2x128xf32>
    %cst_79 = arith.constant 1.000000e+00 : f32
    %240 = vector.broadcast %cst_79 : f32 to vector<2x128xf32>
    %241 = arith.addf %240, %239 : vector<2x128xf32>
    %242 = arith.divf %240, %241 : vector<2x128xf32>
    %243 = arith.mulf %234, %215 : vector<2x128xf32>
    %244 = arith.mulf %228, %236 : vector<2x128xf32>
    %245 = arith.addf %243, %244 : vector<2x128xf32>
    %246 = math.tanh %245 : vector<2x128xf32>
    %247 = arith.mulf %242, %246 : vector<2x128xf32>
    %c14_80 = arith.constant 14 : index
    %c0_81 = arith.constant 0 : index
    %248 = vector.load %arg11[%c14_80, %c0_81] : memref<16x128xf32, #tpu.memory_space<vmem>>, vector<2x128xf32>
    tpu.vector_store %arg11[%c14_80, %c0_81], %247 {strides = array<i32>} : memref<16x128xf32, #tpu.memory_space<vmem>>, vector<2x128xf32>,
    %c0_82 = arith.constant 0 : index
    %c0_83 = arith.constant 0 : index
    %c0_84 = arith.constant 0 : index
    %249 = vector.load %arg8[%c0_82, %c0_83, %c0_84] : memref<2x2x128xf32, #tpu.memory_space<vmem>>, vector<1x2x128xf32>
    %250 = vector.shape_cast %249 : vector<1x2x128xf32> to vector<2x128xf32>
    %251 = vector.shape_cast %247 : vector<2x128xf32> to vector<1x2x128xf32>
    tpu.vector_store %arg8[%c0_82, %c0_83, %c0_84], %251 {strides = array<i32>} : memref<2x2x128xf32, #tpu.memory_space<vmem>>, vector<1x2x128xf32>,
    %c0_85 = arith.constant 0 : index
    %c0_86 = arith.constant 0 : index
    %c0_87 = arith.constant 0 : index
    %252 = vector.load %arg9[%c0_85, %c0_86, %c0_87] : memref<2x2x128xf32, #tpu.memory_space<vmem>>, vector<1x2x128xf32>
    %253 = vector.shape_cast %252 : vector<1x2x128xf32> to vector<2x128xf32>
    %254 = vector.shape_cast %245 : vector<2x128xf32> to vector<1x2x128xf32>
    tpu.vector_store %arg9[%c0_85, %c0_86, %c0_87], %254 {strides = array<i32>} : memref<2x2x128xf32, #tpu.memory_space<vmem>>, vector<1x2x128xf32>,
    %c0_88 = arith.constant 0 : index
    %c0_89 = arith.constant 0 : index
    %255 = vector.load %arg11[%c0_88, %c0_89] : memref<16x128xf32, #tpu.memory_space<vmem>>, vector<16x128xf32>
    %c0_90 = arith.constant 0 : index
    %c0_91 = arith.constant 0 : index
    %256 = vector.load %arg4[%c0_90, %c0_91] : memref<128x512xf32, #tpu.memory_space<vmem>>, vector<128x512xf32>
    %cst_92 = arith.constant dense<0.000000e+00> : vector<16x512xf32>
    %257 = tpu.matmul %255, %256, %cst_92 {dimension_numbers = #tpu.dot_dimension_numbers<[1], [0], [0], [1], [0, 0, 1, 1], [], []>} : vector<16x128xf32>, vector<128x512xf32>, vector<16x512xf32> -> vector<16x512xf32>
    %c0_93 = arith.constant 0 : index
    %c0_94 = arith.constant 0 : index
    %258 = vector.load %arg6[%c0_93, %c0_94] : memref<1x512xf32, #tpu.memory_space<vmem>>, vector<1x512xf32>
    %259 = vector.broadcast %258 : vector<1x512xf32> to vector<16x512xf32>
    %260 = arith.addf %257, %259 : vector<16x512xf32>
    %c0_95 = arith.constant 0 : index
    %c0_96 = arith.constant 0 : index
    %261 = vector.load %arg10[%c0_95, %c0_96] : memref<16x512xf32, #tpu.memory_space<vmem>>, vector<16x512xf32>
    tpu.vector_store %arg10[%c0_95, %c0_96], %260 {strides = array<i32>} : memref<16x512xf32, #tpu.memory_space<vmem>>, vector<16x512xf32>,
    %cst_97 = arith.constant 0.000000e+00 : f32
    %262 = vector.broadcast %cst_97 : f32 to vector<2x128xf32>
    %cst_98 = arith.constant 0.000000e+00 : f32
    %263 = vector.broadcast %cst_98 : f32 to vector<2x128xf32>
    %c0_99 = arith.constant 0 : index
    %c0_100 = arith.constant 0 : index
    %264 = vector.load %arg10[%c0_99, %c0_100] : memref<16x512xf32, #tpu.memory_space<vmem>>, vector<2x512xf32>
    %c0_101 = arith.constant 0 : index
    %c0_102 = arith.constant 0 : index
    %265 = vector.load %arg5[%c0_101, %c0_102] : memref<128x512xf32, #tpu.memory_space<vmem>>, vector<128x512xf32>
    %cst_103 = arith.constant dense<0.000000e+00> : vector<2x512xf32>
    %266 = tpu.matmul %262, %265, %cst_103 {dimension_numbers = #tpu.dot_dimension_numbers<[1], [0], [0], [1], [0, 0, 1, 1], [], []>} : vector<2x128xf32>, vector<128x512xf32>, vector<2x512xf32> -> vector<2x512xf32>
    %267 = arith.addf %264, %266 : vector<2x512xf32>
    %268 = vector.extract_strided_slice %267 {offsets = [0, 0], sizes = [2, 128], strides = [1, 1]} : vector<2x512xf32> to vector<2x128xf32>
    %269 = arith.negf %268 : vector<2x128xf32>
    %270 = math.exp %269 : vector<2x128xf32>
    %cst_104 = arith.constant 1.000000e+00 : f32
    %271 = vector.broadcast %cst_104 : f32 to vector<2x128xf32>
    %272 = arith.addf %271, %270 : vector<2x128xf32>
    %273 = arith.divf %271, %272 : vector<2x128xf32>
    %274 = vector.extract_strided_slice %267 {offsets = [0, 128], sizes = [2, 128], strides = [1, 1]} : vector<2x512xf32> to vector<2x128xf32>
    %275 = arith.negf %274 : vector<2x128xf32>
    %276 = math.exp %275 : vector<2x128xf32>
    %cst_105 = arith.constant 1.000000e+00 : f32
    %277 = vector.broadcast %cst_105 : f32 to vector<2x128xf32>
    %278 = arith.addf %277, %276 : vector<2x128xf32>
    %279 = arith.divf %277, %278 : vector<2x128xf32>
    %280 = vector.extract_strided_slice %267 {offsets = [0, 256], sizes = [2, 128], strides = [1, 1]} : vector<2x512xf32> to vector<2x128xf32>
    %281 = math.tanh %280 : vector<2x128xf32>
    %282 = vector.extract_strided_slice %267 {offsets = [0, 384], sizes = [2, 128], strides = [1, 1]} : vector<2x512xf32> to vector<2x128xf32>
    %283 = arith.negf %282 : vector<2x128xf32>
    %284 = math.exp %283 : vector<2x128xf32>
    %cst_106 = arith.constant 1.000000e+00 : f32
    %285 = vector.broadcast %cst_106 : f32 to vector<2x128xf32>
    %286 = arith.addf %285, %284 : vector<2x128xf32>
    %287 = arith.divf %285, %286 : vector<2x128xf32>
    %288 = arith.mulf %279, %263 : vector<2x128xf32>
    %289 = arith.mulf %273, %281 : vector<2x128xf32>
    %290 = arith.addf %288, %289 : vector<2x128xf32>
    %291 = math.tanh %290 : vector<2x128xf32>
    %292 = arith.mulf %287, %291 : vector<2x128xf32>
    %c0_107 = arith.constant 0 : index
    %c0_108 = arith.constant 0 : index
    %293 = vector.load %arg7[%c0_107, %c0_108] : memref<16x128xf32, #tpu.memory_space<vmem>>, vector<2x128xf32>
    tpu.vector_store %arg7[%c0_107, %c0_108], %292 {strides = array<i32>} : memref<16x128xf32, #tpu.memory_space<vmem>>, vector<2x128xf32>,
    %c2_109 = arith.constant 2 : index
    %c0_110 = arith.constant 0 : index
    %294 = vector.load %arg10[%c2_109, %c0_110] : memref<16x512xf32, #tpu.memory_space<vmem>>, vector<2x512xf32>
    %c0_111 = arith.constant 0 : index
    %c0_112 = arith.constant 0 : index
    %295 = vector.load %arg5[%c0_111, %c0_112] : memref<128x512xf32, #tpu.memory_space<vmem>>, vector<128x512xf32>
    %cst_113 = arith.constant dense<0.000000e+00> : vector<2x512xf32>
    %296 = tpu.matmul %292, %295, %cst_113 {dimension_numbers = #tpu.dot_dimension_numbers<[1], [0], [0], [1], [0, 0, 1, 1], [], []>} : vector<2x128xf32>, vector<128x512xf32>, vector<2x512xf32> -> vector<2x512xf32>
    %297 = arith.addf %294, %296 : vector<2x512xf32>
    %298 = vector.extract_strided_slice %297 {offsets = [0, 0], sizes = [2, 128], strides = [1, 1]} : vector<2x512xf32> to vector<2x128xf32>
    %299 = arith.negf %298 : vector<2x128xf32>
    %300 = math.exp %299 : vector<2x128xf32>
    %cst_114 = arith.constant 1.000000e+00 : f32
    %301 = vector.broadcast %cst_114 : f32 to vector<2x128xf32>
    %302 = arith.addf %301, %300 : vector<2x128xf32>
    %303 = arith.divf %301, %302 : vector<2x128xf32>
    %304 = vector.extract_strided_slice %297 {offsets = [0, 128], sizes = [2, 128], strides = [1, 1]} : vector<2x512xf32> to vector<2x128xf32>
    %305 = arith.negf %304 : vector<2x128xf32>
    %306 = math.exp %305 : vector<2x128xf32>
    %cst_115 = arith.constant 1.000000e+00 : f32
    %307 = vector.broadcast %cst_115 : f32 to vector<2x128xf32>
    %308 = arith.addf %307, %306 : vector<2x128xf32>
    %309 = arith.divf %307, %308 : vector<2x128xf32>
    %310 = vector.extract_strided_slice %297 {offsets = [0, 256], sizes = [2, 128], strides = [1, 1]} : vector<2x512xf32> to vector<2x128xf32>
    %311 = math.tanh %310 : vector<2x128xf32>
    %312 = vector.extract_strided_slice %297 {offsets = [0, 384], sizes = [2, 128], strides = [1, 1]} : vector<2x512xf32> to vector<2x128xf32>
    %313 = arith.negf %312 : vector<2x128xf32>
    %314 = math.exp %313 : vector<2x128xf32>
    %cst_116 = arith.constant 1.000000e+00 : f32
    %315 = vector.broadcast %cst_116 : f32 to vector<2x128xf32>
    %316 = arith.addf %315, %314 : vector<2x128xf32>
    %317 = arith.divf %315, %316 : vector<2x128xf32>
    %318 = arith.mulf %309, %290 : vector<2x128xf32>
    %319 = arith.mulf %303, %311 : vector<2x128xf32>
    %320 = arith.addf %318, %319 : vector<2x128xf32>
    %321 = math.tanh %320 : vector<2x128xf32>
    %322 = arith.mulf %317, %321 : vector<2x128xf32>
    %c2_117 = arith.constant 2 : index
    %c0_118 = arith.constant 0 : index
    %323 = vector.load %arg7[%c2_117, %c0_118] : memref<16x128xf32, #tpu.memory_space<vmem>>, vector<2x128xf32>
    tpu.vector_store %arg7[%c2_117, %c0_118], %322 {strides = array<i32>} : memref<16x128xf32, #tpu.memory_space<vmem>>, vector<2x128xf32>,
    %c4_119 = arith.constant 4 : index
    %c0_120 = arith.constant 0 : index
    %324 = vector.load %arg10[%c4_119, %c0_120] : memref<16x512xf32, #tpu.memory_space<vmem>>, vector<2x512xf32>
    %c0_121 = arith.constant 0 : index
    %c0_122 = arith.constant 0 : index
    %325 = vector.load %arg5[%c0_121, %c0_122] : memref<128x512xf32, #tpu.memory_space<vmem>>, vector<128x512xf32>
    %cst_123 = arith.constant dense<0.000000e+00> : vector<2x512xf32>
    %326 = tpu.matmul %322, %325, %cst_123 {dimension_numbers = #tpu.dot_dimension_numbers<[1], [0], [0], [1], [0, 0, 1, 1], [], []>} : vector<2x128xf32>, vector<128x512xf32>, vector<2x512xf32> -> vector<2x512xf32>
    %327 = arith.addf %324, %326 : vector<2x512xf32>
    %328 = vector.extract_strided_slice %327 {offsets = [0, 0], sizes = [2, 128], strides = [1, 1]} : vector<2x512xf32> to vector<2x128xf32>
    %329 = arith.negf %328 : vector<2x128xf32>
    %330 = math.exp %329 : vector<2x128xf32>
    %cst_124 = arith.constant 1.000000e+00 : f32
    %331 = vector.broadcast %cst_124 : f32 to vector<2x128xf32>
    %332 = arith.addf %331, %330 : vector<2x128xf32>
    %333 = arith.divf %331, %332 : vector<2x128xf32>
    %334 = vector.extract_strided_slice %327 {offsets = [0, 128], sizes = [2, 128], strides = [1, 1]} : vector<2x512xf32> to vector<2x128xf32>
    %335 = arith.negf %334 : vector<2x128xf32>
    %336 = math.exp %335 : vector<2x128xf32>
    %cst_125 = arith.constant 1.000000e+00 : f32
    %337 = vector.broadcast %cst_125 : f32 to vector<2x128xf32>
    %338 = arith.addf %337, %336 : vector<2x128xf32>
    %339 = arith.divf %337, %338 : vector<2x128xf32>
    %340 = vector.extract_strided_slice %327 {offsets = [0, 256], sizes = [2, 128], strides = [1, 1]} : vector<2x512xf32> to vector<2x128xf32>
    %341 = math.tanh %340 : vector<2x128xf32>
    %342 = vector.extract_strided_slice %327 {offsets = [0, 384], sizes = [2, 128], strides = [1, 1]} : vector<2x512xf32> to vector<2x128xf32>
    %343 = arith.negf %342 : vector<2x128xf32>
    %344 = math.exp %343 : vector<2x128xf32>
    %cst_126 = arith.constant 1.000000e+00 : f32
    %345 = vector.broadcast %cst_126 : f32 to vector<2x128xf32>
    %346 = arith.addf %345, %344 : vector<2x128xf32>
    %347 = arith.divf %345, %346 : vector<2x128xf32>
    %348 = arith.mulf %339, %320 : vector<2x128xf32>
    %349 = arith.mulf %333, %341 : vector<2x128xf32>
    %350 = arith.addf %348, %349 : vector<2x128xf32>
    %351 = math.tanh %350 : vector<2x128xf32>
    %352 = arith.mulf %347, %351 : vector<2x128xf32>
    %c4_127 = arith.constant 4 : index
    %c0_128 = arith.constant 0 : index
    %353 = vector.load %arg7[%c4_127, %c0_128] : memref<16x128xf32, #tpu.memory_space<vmem>>, vector<2x128xf32>
    tpu.vector_store %arg7[%c4_127, %c0_128], %352 {strides = array<i32>} : memref<16x128xf32, #tpu.memory_space<vmem>>, vector<2x128xf32>,
    %c6_129 = arith.constant 6 : index
    %c0_130 = arith.constant 0 : index
    %354 = vector.load %arg10[%c6_129, %c0_130] : memref<16x512xf32, #tpu.memory_space<vmem>>, vector<2x512xf32>
    %c0_131 = arith.constant 0 : index
    %c0_132 = arith.constant 0 : index
    %355 = vector.load %arg5[%c0_131, %c0_132] : memref<128x512xf32, #tpu.memory_space<vmem>>, vector<128x512xf32>
    %cst_133 = arith.constant dense<0.000000e+00> : vector<2x512xf32>
    %356 = tpu.matmul %352, %355, %cst_133 {dimension_numbers = #tpu.dot_dimension_numbers<[1], [0], [0], [1], [0, 0, 1, 1], [], []>} : vector<2x128xf32>, vector<128x512xf32>, vector<2x512xf32> -> vector<2x512xf32>
    %357 = arith.addf %354, %356 : vector<2x512xf32>
    %358 = vector.extract_strided_slice %357 {offsets = [0, 0], sizes = [2, 128], strides = [1, 1]} : vector<2x512xf32> to vector<2x128xf32>
    %359 = arith.negf %358 : vector<2x128xf32>
    %360 = math.exp %359 : vector<2x128xf32>
    %cst_134 = arith.constant 1.000000e+00 : f32
    %361 = vector.broadcast %cst_134 : f32 to vector<2x128xf32>
    %362 = arith.addf %361, %360 : vector<2x128xf32>
    %363 = arith.divf %361, %362 : vector<2x128xf32>
    %364 = vector.extract_strided_slice %357 {offsets = [0, 128], sizes = [2, 128], strides = [1, 1]} : vector<2x512xf32> to vector<2x128xf32>
    %365 = arith.negf %364 : vector<2x128xf32>
    %366 = math.exp %365 : vector<2x128xf32>
    %cst_135 = arith.constant 1.000000e+00 : f32
    %367 = vector.broadcast %cst_135 : f32 to vector<2x128xf32>
    %368 = arith.addf %367, %366 : vector<2x128xf32>
    %369 = arith.divf %367, %368 : vector<2x128xf32>
    %370 = vector.extract_strided_slice %357 {offsets = [0, 256], sizes = [2, 128], strides = [1, 1]} : vector<2x512xf32> to vector<2x128xf32>
    %371 = math.tanh %370 : vector<2x128xf32>
    %372 = vector.extract_strided_slice %357 {offsets = [0, 384], sizes = [2, 128], strides = [1, 1]} : vector<2x512xf32> to vector<2x128xf32>
    %373 = arith.negf %372 : vector<2x128xf32>
    %374 = math.exp %373 : vector<2x128xf32>
    %cst_136 = arith.constant 1.000000e+00 : f32
    %375 = vector.broadcast %cst_136 : f32 to vector<2x128xf32>
    %376 = arith.addf %375, %374 : vector<2x128xf32>
    %377 = arith.divf %375, %376 : vector<2x128xf32>
    %378 = arith.mulf %369, %350 : vector<2x128xf32>
    %379 = arith.mulf %363, %371 : vector<2x128xf32>
    %380 = arith.addf %378, %379 : vector<2x128xf32>
    %381 = math.tanh %380 : vector<2x128xf32>
    %382 = arith.mulf %377, %381 : vector<2x128xf32>
    %c6_137 = arith.constant 6 : index
    %c0_138 = arith.constant 0 : index
    %383 = vector.load %arg7[%c6_137, %c0_138] : memref<16x128xf32, #tpu.memory_space<vmem>>, vector<2x128xf32>
    tpu.vector_store %arg7[%c6_137, %c0_138], %382 {strides = array<i32>} : memref<16x128xf32, #tpu.memory_space<vmem>>, vector<2x128xf32>,
    %c8_139 = arith.constant 8 : index
    %c0_140 = arith.constant 0 : index
    %384 = vector.load %arg10[%c8_139, %c0_140] : memref<16x512xf32, #tpu.memory_space<vmem>>, vector<2x512xf32>
    %c0_141 = arith.constant 0 : index
    %c0_142 = arith.constant 0 : index
    %385 = vector.load %arg5[%c0_141, %c0_142] : memref<128x512xf32, #tpu.memory_space<vmem>>, vector<128x512xf32>
    %cst_143 = arith.constant dense<0.000000e+00> : vector<2x512xf32>
    %386 = tpu.matmul %382, %385, %cst_143 {dimension_numbers = #tpu.dot_dimension_numbers<[1], [0], [0], [1], [0, 0, 1, 1], [], []>} : vector<2x128xf32>, vector<128x512xf32>, vector<2x512xf32> -> vector<2x512xf32>
    %387 = arith.addf %384, %386 : vector<2x512xf32>
    %388 = vector.extract_strided_slice %387 {offsets = [0, 0], sizes = [2, 128], strides = [1, 1]} : vector<2x512xf32> to vector<2x128xf32>
    %389 = arith.negf %388 : vector<2x128xf32>
    %390 = math.exp %389 : vector<2x128xf32>
    %cst_144 = arith.constant 1.000000e+00 : f32
    %391 = vector.broadcast %cst_144 : f32 to vector<2x128xf32>
    %392 = arith.addf %391, %390 : vector<2x128xf32>
    %393 = arith.divf %391, %392 : vector<2x128xf32>
    %394 = vector.extract_strided_slice %387 {offsets = [0, 128], sizes = [2, 128], strides = [1, 1]} : vector<2x512xf32> to vector<2x128xf32>
    %395 = arith.negf %394 : vector<2x128xf32>
    %396 = math.exp %395 : vector<2x128xf32>
    %cst_145 = arith.constant 1.000000e+00 : f32
    %397 = vector.broadcast %cst_145 : f32 to vector<2x128xf32>
    %398 = arith.addf %397, %396 : vector<2x128xf32>
    %399 = arith.divf %397, %398 : vector<2x128xf32>
    %400 = vector.extract_strided_slice %387 {offsets = [0, 256], sizes = [2, 128], strides = [1, 1]} : vector<2x512xf32> to vector<2x128xf32>
    %401 = math.tanh %400 : vector<2x128xf32>
    %402 = vector.extract_strided_slice %387 {offsets = [0, 384], sizes = [2, 128], strides = [1, 1]} : vector<2x512xf32> to vector<2x128xf32>
    %403 = arith.negf %402 : vector<2x128xf32>
    %404 = math.exp %403 : vector<2x128xf32>
    %cst_146 = arith.constant 1.000000e+00 : f32
    %405 = vector.broadcast %cst_146 : f32 to vector<2x128xf32>
    %406 = arith.addf %405, %404 : vector<2x128xf32>
    %407 = arith.divf %405, %406 : vector<2x128xf32>
    %408 = arith.mulf %399, %380 : vector<2x128xf32>
    %409 = arith.mulf %393, %401 : vector<2x128xf32>
    %410 = arith.addf %408, %409 : vector<2x128xf32>
    %411 = math.tanh %410 : vector<2x128xf32>
    %412 = arith.mulf %407, %411 : vector<2x128xf32>
    %c8_147 = arith.constant 8 : index
    %c0_148 = arith.constant 0 : index
    %413 = vector.load %arg7[%c8_147, %c0_148] : memref<16x128xf32, #tpu.memory_space<vmem>>, vector<2x128xf32>
    tpu.vector_store %arg7[%c8_147, %c0_148], %412 {strides = array<i32>} : memref<16x128xf32, #tpu.memory_space<vmem>>, vector<2x128xf32>,
    %c10_149 = arith.constant 10 : index
    %c0_150 = arith.constant 0 : index
    %414 = vector.load %arg10[%c10_149, %c0_150] : memref<16x512xf32, #tpu.memory_space<vmem>>, vector<2x512xf32>
    %c0_151 = arith.constant 0 : index
    %c0_152 = arith.constant 0 : index
    %415 = vector.load %arg5[%c0_151, %c0_152] : memref<128x512xf32, #tpu.memory_space<vmem>>, vector<128x512xf32>
    %cst_153 = arith.constant dense<0.000000e+00> : vector<2x512xf32>
    %416 = tpu.matmul %412, %415, %cst_153 {dimension_numbers = #tpu.dot_dimension_numbers<[1], [0], [0], [1], [0, 0, 1, 1], [], []>} : vector<2x128xf32>, vector<128x512xf32>, vector<2x512xf32> -> vector<2x512xf32>
    %417 = arith.addf %414, %416 : vector<2x512xf32>
    %418 = vector.extract_strided_slice %417 {offsets = [0, 0], sizes = [2, 128], strides = [1, 1]} : vector<2x512xf32> to vector<2x128xf32>
    %419 = arith.negf %418 : vector<2x128xf32>
    %420 = math.exp %419 : vector<2x128xf32>
    %cst_154 = arith.constant 1.000000e+00 : f32
    %421 = vector.broadcast %cst_154 : f32 to vector<2x128xf32>
    %422 = arith.addf %421, %420 : vector<2x128xf32>
    %423 = arith.divf %421, %422 : vector<2x128xf32>
    %424 = vector.extract_strided_slice %417 {offsets = [0, 128], sizes = [2, 128], strides = [1, 1]} : vector<2x512xf32> to vector<2x128xf32>
    %425 = arith.negf %424 : vector<2x128xf32>
    %426 = math.exp %425 : vector<2x128xf32>
    %cst_155 = arith.constant 1.000000e+00 : f32
    %427 = vector.broadcast %cst_155 : f32 to vector<2x128xf32>
    %428 = arith.addf %427, %426 : vector<2x128xf32>
    %429 = arith.divf %427, %428 : vector<2x128xf32>
    %430 = vector.extract_strided_slice %417 {offsets = [0, 256], sizes = [2, 128], strides = [1, 1]} : vector<2x512xf32> to vector<2x128xf32>
    %431 = math.tanh %430 : vector<2x128xf32>
    %432 = vector.extract_strided_slice %417 {offsets = [0, 384], sizes = [2, 128], strides = [1, 1]} : vector<2x512xf32> to vector<2x128xf32>
    %433 = arith.negf %432 : vector<2x128xf32>
    %434 = math.exp %433 : vector<2x128xf32>
    %cst_156 = arith.constant 1.000000e+00 : f32
    %435 = vector.broadcast %cst_156 : f32 to vector<2x128xf32>
    %436 = arith.addf %435, %434 : vector<2x128xf32>
    %437 = arith.divf %435, %436 : vector<2x128xf32>
    %438 = arith.mulf %429, %410 : vector<2x128xf32>
    %439 = arith.mulf %423, %431 : vector<2x128xf32>
    %440 = arith.addf %438, %439 : vector<2x128xf32>
    %441 = math.tanh %440 : vector<2x128xf32>
    %442 = arith.mulf %437, %441 : vector<2x128xf32>
    %c10_157 = arith.constant 10 : index
    %c0_158 = arith.constant 0 : index
    %443 = vector.load %arg7[%c10_157, %c0_158] : memref<16x128xf32, #tpu.memory_space<vmem>>, vector<2x128xf32>
    tpu.vector_store %arg7[%c10_157, %c0_158], %442 {strides = array<i32>} : memref<16x128xf32, #tpu.memory_space<vmem>>, vector<2x128xf32>,
    %c12_159 = arith.constant 12 : index
    %c0_160 = arith.constant 0 : index
    %444 = vector.load %arg10[%c12_159, %c0_160] : memref<16x512xf32, #tpu.memory_space<vmem>>, vector<2x512xf32>
    %c0_161 = arith.constant 0 : index
    %c0_162 = arith.constant 0 : index
    %445 = vector.load %arg5[%c0_161, %c0_162] : memref<128x512xf32, #tpu.memory_space<vmem>>, vector<128x512xf32>
    %cst_163 = arith.constant dense<0.000000e+00> : vector<2x512xf32>
    %446 = tpu.matmul %442, %445, %cst_163 {dimension_numbers = #tpu.dot_dimension_numbers<[1], [0], [0], [1], [0, 0, 1, 1], [], []>} : vector<2x128xf32>, vector<128x512xf32>, vector<2x512xf32> -> vector<2x512xf32>
    %447 = arith.addf %444, %446 : vector<2x512xf32>
    %448 = vector.extract_strided_slice %447 {offsets = [0, 0], sizes = [2, 128], strides = [1, 1]} : vector<2x512xf32> to vector<2x128xf32>
    %449 = arith.negf %448 : vector<2x128xf32>
    %450 = math.exp %449 : vector<2x128xf32>
    %cst_164 = arith.constant 1.000000e+00 : f32
    %451 = vector.broadcast %cst_164 : f32 to vector<2x128xf32>
    %452 = arith.addf %451, %450 : vector<2x128xf32>
    %453 = arith.divf %451, %452 : vector<2x128xf32>
    %454 = vector.extract_strided_slice %447 {offsets = [0, 128], sizes = [2, 128], strides = [1, 1]} : vector<2x512xf32> to vector<2x128xf32>
    %455 = arith.negf %454 : vector<2x128xf32>
    %456 = math.exp %455 : vector<2x128xf32>
    %cst_165 = arith.constant 1.000000e+00 : f32
    %457 = vector.broadcast %cst_165 : f32 to vector<2x128xf32>
    %458 = arith.addf %457, %456 : vector<2x128xf32>
    %459 = arith.divf %457, %458 : vector<2x128xf32>
    %460 = vector.extract_strided_slice %447 {offsets = [0, 256], sizes = [2, 128], strides = [1, 1]} : vector<2x512xf32> to vector<2x128xf32>
    %461 = math.tanh %460 : vector<2x128xf32>
    %462 = vector.extract_strided_slice %447 {offsets = [0, 384], sizes = [2, 128], strides = [1, 1]} : vector<2x512xf32> to vector<2x128xf32>
    %463 = arith.negf %462 : vector<2x128xf32>
    %464 = math.exp %463 : vector<2x128xf32>
    %cst_166 = arith.constant 1.000000e+00 : f32
    %465 = vector.broadcast %cst_166 : f32 to vector<2x128xf32>
    %466 = arith.addf %465, %464 : vector<2x128xf32>
    %467 = arith.divf %465, %466 : vector<2x128xf32>
    %468 = arith.mulf %459, %440 : vector<2x128xf32>
    %469 = arith.mulf %453, %461 : vector<2x128xf32>
    %470 = arith.addf %468, %469 : vector<2x128xf32>
    %471 = math.tanh %470 : vector<2x128xf32>
    %472 = arith.mulf %467, %471 : vector<2x128xf32>
    %c12_167 = arith.constant 12 : index
    %c0_168 = arith.constant 0 : index
    %473 = vector.load %arg7[%c12_167, %c0_168] : memref<16x128xf32, #tpu.memory_space<vmem>>, vector<2x128xf32>
    tpu.vector_store %arg7[%c12_167, %c0_168], %472 {strides = array<i32>} : memref<16x128xf32, #tpu.memory_space<vmem>>, vector<2x128xf32>,
    %c14_169 = arith.constant 14 : index
    %c0_170 = arith.constant 0 : index
    %474 = vector.load %arg10[%c14_169, %c0_170] : memref<16x512xf32, #tpu.memory_space<vmem>>, vector<2x512xf32>
    %c0_171 = arith.constant 0 : index
    %c0_172 = arith.constant 0 : index
    %475 = vector.load %arg5[%c0_171, %c0_172] : memref<128x512xf32, #tpu.memory_space<vmem>>, vector<128x512xf32>
    %cst_173 = arith.constant dense<0.000000e+00> : vector<2x512xf32>
    %476 = tpu.matmul %472, %475, %cst_173 {dimension_numbers = #tpu.dot_dimension_numbers<[1], [0], [0], [1], [0, 0, 1, 1], [], []>} : vector<2x128xf32>, vector<128x512xf32>, vector<2x512xf32> -> vector<2x512xf32>
    %477 = arith.addf %474, %476 : vector<2x512xf32>
    %478 = vector.extract_strided_slice %477 {offsets = [0, 0], sizes = [2, 128], strides = [1, 1]} : vector<2x512xf32> to vector<2x128xf32>
    %479 = arith.negf %478 : vector<2x128xf32>
    %480 = math.exp %479 : vector<2x128xf32>
    %cst_174 = arith.constant 1.000000e+00 : f32
    %481 = vector.broadcast %cst_174 : f32 to vector<2x128xf32>
    %482 = arith.addf %481, %480 : vector<2x128xf32>
    %483 = arith.divf %481, %482 : vector<2x128xf32>
    %484 = vector.extract_strided_slice %477 {offsets = [0, 128], sizes = [2, 128], strides = [1, 1]} : vector<2x512xf32> to vector<2x128xf32>
    %485 = arith.negf %484 : vector<2x128xf32>
    %486 = math.exp %485 : vector<2x128xf32>
    %cst_175 = arith.constant 1.000000e+00 : f32
    %487 = vector.broadcast %cst_175 : f32 to vector<2x128xf32>
    %488 = arith.addf %487, %486 : vector<2x128xf32>
    %489 = arith.divf %487, %488 : vector<2x128xf32>
    %490 = vector.extract_strided_slice %477 {offsets = [0, 256], sizes = [2, 128], strides = [1, 1]} : vector<2x512xf32> to vector<2x128xf32>
    %491 = math.tanh %490 : vector<2x128xf32>
    %492 = vector.extract_strided_slice %477 {offsets = [0, 384], sizes = [2, 128], strides = [1, 1]} : vector<2x512xf32> to vector<2x128xf32>
    %493 = arith.negf %492 : vector<2x128xf32>
    %494 = math.exp %493 : vector<2x128xf32>
    %cst_176 = arith.constant 1.000000e+00 : f32
    %495 = vector.broadcast %cst_176 : f32 to vector<2x128xf32>
    %496 = arith.addf %495, %494 : vector<2x128xf32>
    %497 = arith.divf %495, %496 : vector<2x128xf32>
    %498 = arith.mulf %489, %470 : vector<2x128xf32>
    %499 = arith.mulf %483, %491 : vector<2x128xf32>
    %500 = arith.addf %498, %499 : vector<2x128xf32>
    %501 = math.tanh %500 : vector<2x128xf32>
    %502 = arith.mulf %497, %501 : vector<2x128xf32>
    %c14_177 = arith.constant 14 : index
    %c0_178 = arith.constant 0 : index
    %503 = vector.load %arg7[%c14_177, %c0_178] : memref<16x128xf32, #tpu.memory_space<vmem>>, vector<2x128xf32>
    tpu.vector_store %arg7[%c14_177, %c0_178], %502 {strides = array<i32>} : memref<16x128xf32, #tpu.memory_space<vmem>>, vector<2x128xf32>,
    %c1 = arith.constant 1 : index
    %c0_179 = arith.constant 0 : index
    %c0_180 = arith.constant 0 : index
    %504 = vector.load %arg8[%c1, %c0_179, %c0_180] : memref<2x2x128xf32, #tpu.memory_space<vmem>>, vector<1x2x128xf32>
    %505 = vector.shape_cast %504 : vector<1x2x128xf32> to vector<2x128xf32>
    %506 = vector.shape_cast %502 : vector<2x128xf32> to vector<1x2x128xf32>
    tpu.vector_store %arg8[%c1, %c0_179, %c0_180], %506 {strides = array<i32>} : memref<2x2x128xf32, #tpu.memory_space<vmem>>, vector<1x2x128xf32>,
    %c1_181 = arith.constant 1 : index
    %c0_182 = arith.constant 0 : index
    %c0_183 = arith.constant 0 : index
    %507 = vector.load %arg9[%c1_181, %c0_182, %c0_183] : memref<2x2x128xf32, #tpu.memory_space<vmem>>, vector<1x2x128xf32>
    %508 = vector.shape_cast %507 : vector<1x2x128xf32> to vector<2x128xf32>
    %509 = vector.shape_cast %500 : vector<2x128xf32> to vector<1x2x128xf32>
    tpu.vector_store %arg9[%c1_181, %c0_182, %c0_183], %509 {strides = array<i32>} : memref<2x2x128xf32, #tpu.memory_space<vmem>>, vector<1x2x128xf32>,
    return
  }
}

</mosaic_0001>

<llo_original>
// kernel: encoder_forward.1
$region0: #{encoder_forward.1}
  #allocation0 [shape = 'u32[]', space=smem, size = 0x4, offset = 0x4, fixed_abs, tag = 'smem constant byte address 0x4 - core index']
  #allocation1 [shape = 'u32[144,128]{1,0:T(1,128)}', space=vmem, size = 0x12000, scoped, tag = 'internal scratch']
  #allocation2 [shape = 'f32[16,512]{1,0:T(8,128)}', space=vmem, size = 0x8000, scoped, tag = 'scratch operand']
  #allocation3 [shape = 'f32[16,128]{1,0:T(8,128)}', space=vmem, size = 0x2000, scoped, tag = 'scratch operand']
  %s0 = inlined_call_operand.vmem [shape: f32[16,100], index: 0, kind: input, shape index: {}]
  %s1 = inlined_call_operand.hbm [shape: f32[100,512], index: 1, kind: input, shape index: {}]
  %s2 = inlined_call_operand.hbm [shape: f32[128,512], index: 2, kind: input, shape index: {}]
  %s3 = inlined_call_operand.vmem [shape: f32[1,512], index: 3, kind: input, shape index: {}]
  %s4 = inlined_call_operand.hbm [shape: f32[128,512], index: 4, kind: input, shape index: {}]
  %s5 = inlined_call_operand.hbm [shape: f32[128,512], index: 5, kind: input, shape index: {}]
  %s6 = inlined_call_operand.vmem [shape: f32[1,512], index: 6, kind: input, shape index: {}]
  %s7 = inlined_call_operand.vmem [shape: f32[16,128], index: 7, kind: output, shape index: {0}]
  %s8 = inlined_call_operand.hbm [shape: f32[2,2,128], index: 8, kind: output, shape index: {1}]
  %s9 = inlined_call_operand.hbm [shape: f32[2,2,128], index: 9, kind: output, shape index: {2}]
  %10 = xla_tuple %s7, %s8, %s9
  %s11 = sld [smem:[#allocation0]]
  $region70: #{encoder_forward.1} parent=0
    _
  %s13 = ssub.s32 1, %s11
  %s14 = scalar_select 0, %s13, %s11
  $region1: #{encoder_forward.1} parent=0
    #allocation4 [shape = 'u8[212992]{0}', space=vmem, size = 0x34000, scoped, tag = 'input window, operand 1, single buffered']
    #allocation5 [shape = 's32[1]{0}', space=sflag, size = 0x4, scoped, tag = 'scoped memory for encoder_forward.1']
    #allocation6 [shape = 's32[1]{0}', space=sflag, size = 0x4, scoped, tag = 'scoped memory for encoder_forward.1']
    #allocation7 [shape = 'u8[262144]{0}', space=vmem, size = 0x40000, scoped, tag = 'input window, operand 2, single buffered']
    #allocation8 [shape = 's32[1]{0}', space=sflag, size = 0x4, scoped, tag = 'scoped memory for encoder_forward.1']
    #allocation9 [shape = 'u8[262144]{0}', space=vmem, size = 0x40000, scoped, tag = 'input window, operand 4, single buffered']
    #allocation10 [shape = 'u8[262144]{0}', space=vmem, size = 0x40000, scoped, tag = 'input window, operand 5, single buffered']
    #allocation11 [shape = 's32[1]{0}', space=sflag, size = 0x4, scoped, tag = 'scoped memory for encoder_forward.1']
    #allocation12 [shape = 'u8[2048]{0}', space=vmem, size = 0x800, scoped, tag = 'output window, operand 1, single buffered']
    #allocation13 [shape = 'u8[2048]{0}', space=vmem, size = 0x800, scoped, tag = 'output window, operand 2, single buffered']
    #allocation14 [shape = 's32[1]{0}', space=sflag, size = 0x4, scoped, tag = 'scoped memory for encoder_forward.1']
    %15 = vsyncpa [#allocation5], 0
    %16 = vsyncpa [#allocation8], 0
    %17 = vsyncpa [#allocation11], 0
    %18 = vsyncpa [#allocation6], 0
    %19 = vsyncpa [#allocation14], 0
    // Predicated region
    $region2: #{encoder_forward.1} parent=1 // pred_check
      _
    $region3: #{encoder_forward.1} parent=1 // pred_check_branch
      %21 = sbr.rel (0) target = $region5
    $region4: #{encoder_forward.1} parent=1 // pred_region
      _
    $region5: #{encoder_forward.1} parent=1 // pred_fallthru
      _
    // Predicated region
    $region6: #{encoder_forward.1} parent=1 // pred_check
      _
    $region7: #{encoder_forward.1} parent=1 // pred_check_branch
      %23 = sbr.rel (0) target = $region9
    $region8: #{encoder_forward.1} parent=1 // pred_region
      %s25 = ssub.s32 6656, 6656
      %26 = vsyncadd [#allocation5], %s25
      %s27 = sshll.u32 [#allocation4], 4
      %s28 = int_to_ptr.vmem [resolvable:$true] %s27
      %33 = dma.hbm_to_vmem [thread:$0]  %s1, 6656, %s28, [#allocation5], 512, 512, 32
    $region9: #{encoder_forward.1} parent=1 // pred_fallthru
      _
    // Predicated region
    $region10: #{encoder_forward.1} parent=1 // pred_check
      _
    $region11: #{encoder_forward.1} parent=1 // pred_check_branch
      %35 = sbr.rel (0) target = $region13
    $region12: #{encoder_forward.1} parent=1 // pred_region
      %s37 = ssub.s32 8192, 8192
      %38 = vsyncadd [#allocation8], %s37
      %s39 = sshll.u32 [#allocation7], 4
      %s40 = int_to_ptr.vmem [resolvable:$true] %s39
      %45 = dma.hbm_to_vmem [thread:$0]  %s2, 8192, %s40, [#allocation8], 512, 512, 32
    $region13: #{encoder_forward.1} parent=1 // pred_fallthru
      _
    // Predicated region
    $region14: #{encoder_forward.1} parent=1 // pred_check
      _
    $region15: #{encoder_forward.1} parent=1 // pred_check_branch
      %47 = sbr.rel (0) target = $region17
    $region16: #{encoder_forward.1} parent=1 // pred_region
      _
    $region17: #{encoder_forward.1} parent=1 // pred_fallthru
      _
    // Predicated region
    $region18: #{encoder_forward.1} parent=1 // pred_check
      _
    $region19: #{encoder_forward.1} parent=1 // pred_check_branch
      %49 = sbr.rel (0) target = $region21
    $region20: #{encoder_forward.1} parent=1 // pred_region
      %s51 = ssub.s32 8192, 8192
      %52 = vsyncadd [#allocation8], %s51
      %s53 = sshll.u32 [#allocation9], 4
      %s54 = int_to_ptr.vmem [resolvable:$true] %s53
      %59 = dma.hbm_to_vmem [thread:$0]  %s4, 8192, %s54, [#allocation8], 512, 512, 32
    $region21: #{encoder_forward.1} parent=1 // pred_fallthru
      _
    // Predicated region
    $region22: #{encoder_forward.1} parent=1 // pred_check
      _
    $region23: #{encoder_forward.1} parent=1 // pred_check_branch
      %61 = sbr.rel (0) target = $region25
    $region24: #{encoder_forward.1} parent=1 // pred_region
      %s63 = ssub.s32 8192, 8192
      %64 = vsyncadd [#allocation11], %s63
      %s65 = sshll.u32 [#allocation10], 4
      %s66 = int_to_ptr.vmem [resolvable:$true] %s65
      %71 = dma.hbm_to_vmem [thread:$0]  %s5, 8192, %s66, [#allocation11], 512, 512, 32
    $region25: #{encoder_forward.1} parent=1 // pred_fallthru
      _
    // Predicated region
    $region26: #{encoder_forward.1} parent=1 // pred_check
      _
    $region27: #{encoder_forward.1} parent=1 // pred_check_branch
      %73 = sbr.rel (0) target = $region29
    $region28: #{encoder_forward.1} parent=1 // pred_region
      _
    $region29: #{encoder_forward.1} parent=1 // pred_fallthru
      _
    // Predicated region
    $region30: #{encoder_forward.1} parent=1 // pred_check
      _
    $region31: #{encoder_forward.1} parent=1 // pred_check_branch
      %75 = sbr.rel (0) target = $region33
    $region32: #{encoder_forward.1} parent=1 // pred_region
      %76 = dma.done [#allocation5], 6656
    $region33: #{encoder_forward.1} parent=1 // pred_fallthru
      _
    // Predicated region
    $region34: #{encoder_forward.1} parent=1 // pred_check
      _
    $region35: #{encoder_forward.1} parent=1 // pred_check_branch
      %78 = sbr.rel (0) target = $region37
    $region36: #{encoder_forward.1} parent=1 // pred_region
      %79 = dma.done [#allocation8], 8192
    $region37: #{encoder_forward.1} parent=1 // pred_fallthru
      _
    // Predicated region
    $region38: #{encoder_forward.1} parent=1 // pred_check
      _
    $region39: #{encoder_forward.1} parent=1 // pred_check_branch
      %81 = sbr.rel (0) target = $region41
    $region40: #{encoder_forward.1} parent=1 // pred_region
      %82 = dma.done [#allocation8], 8192
    $region41: #{encoder_forward.1} parent=1 // pred_fallthru
      _
    // Predicated region
    $region42: #{encoder_forward.1} parent=1 // pred_check
      _
    $region43: #{encoder_forward.1} parent=1 // pred_check_branch
      %84 = sbr.rel (0) target = $region45
    $region44: #{encoder_forward.1} parent=1 // pred_region
      %85 = dma.done [#allocation11], 8192
    $region45: #{encoder_forward.1} parent=1 // pred_fallthru
      _
    %v86 = vld [vmem:[%s0] sm:$0xff]
    %v87 = vld [vmem:[%s0 + $0x8] sm:$0xff]
    %v88 = vld [vmem:[#allocation4] sm:$0xff]
    %v89 = vld [vmem:[#allocation4 + $0x8] sm:$0xff]
    %v90 = vld [vmem:[#allocation4 + $0x10] sm:$0xff]
    %v91 = vld [vmem:[#allocation4 + $0x18] sm:$0xff]
    %v92 = vld [vmem:[#allocation4 + $0x20] sm:$0xff]
    %v93 = vld [vmem:[#allocation4 + $0x28] sm:$0xff]
    %v94 = vld [vmem:[#allocation4 + $0x30] sm:$0xff]
    %v95 = vld [vmem:[#allocation4 + $0x38] sm:$0xff]
    %v96 = vld [vmem:[#allocation4 + $0x40] sm:$0xff]
    %v97 = vld [vmem:[#allocation4 + $0x48] sm:$0xff]
    %v98 = vld [vmem:[#allocation4 + $0x50] sm:$0xff]
    %v99 = vld [vmem:[#allocation4 + $0x58] sm:$0xff]
    %v100 = vld [vmem:[#allocation4 + $0x60] sm:$0xff]
    %v101 = vld [vmem:[#allocation4 + $0x68] sm:$0xff]
    %v102 = vld [vmem:[#allocation4 + $0x70] sm:$0xff]
    %v103 = vld [vmem:[#allocation4 + $0x78] sm:$0xff]
    %v104 = vld [vmem:[#allocation4 + $0x80] sm:$0xff]
    %v105 = vld [vmem:[#allocation4 + $0x88] sm:$0xff]
    %v106 = vld [vmem:[#allocation4 + $0x90] sm:$0xff]
    %v107 = vld [vmem:[#allocation4 + $0x98] sm:$0xff]
    %v108 = vld [vmem:[#allocation4 + $0xa0] sm:$0xff]
    %v109 = vld [vmem:[#allocation4 + $0xa8] sm:$0xff]
    %v110 = vld [vmem:[#allocation4 + $0xb0] sm:$0xff]
    %v111 = vld [vmem:[#allocation4 + $0xb8] sm:$0xff]
    %v112 = vld [vmem:[#allocation4 + $0xc0] sm:$0xff]
    %v113 = vld [vmem:[#allocation4 + $0xc8] sm:$0xff]
    %v114 = vld [vmem:[#allocation4 + $0xd0] sm:$0xff]
    %v115 = vld [vmem:[#allocation4 + $0xd8] sm:$0xff]
    %v116 = vld [vmem:[#allocation4 + $0xe0] sm:$0xff]
    %v117 = vld [vmem:[#allocation4 + $0xe8] sm:$0xff]
    %v118 = vld [vmem:[#allocation4 + $0xf0] sm:$0xff]
    %v119 = vld [vmem:[#allocation4 + $0xf8] sm:$0xff]
    %v120 = vld [vmem:[#allocation4 + $0x100] sm:$0xff]
    %v121 = vld [vmem:[#allocation4 + $0x108] sm:$0xff]
    %v122 = vld [vmem:[#allocation4 + $0x110] sm:$0xff]
    %v123 = vld [vmem:[#allocation4 + $0x118] sm:$0xff]
    %v124 = vld [vmem:[#allocation4 + $0x120] sm:$0xff]
    %v125 = vld [vmem:[#allocation4 + $0x128] sm:$0xff]
    %v126 = vld [vmem:[#allocation4 + $0x130] sm:$0xff]
    %v127 = vld [vmem:[#allocation4 + $0x138] sm:$0xff]
    %v128 = vld [vmem:[#allocation4 + $0x140] sm:$0xff]
    %v129 = vld [vmem:[#allocation4 + $0x148] sm:$0xff]
    %v130 = vld [vmem:[#allocation4 + $0x150] sm:$0xff]
    %v131 = vld [vmem:[#allocation4 + $0x158] sm:$0xff]
    %v132 = vld [vmem:[#allocation4 + $0x160] sm:$0xff]
    %v133 = vld [vmem:[#allocation4 + $0x168] sm:$0xff]
    %v134 = vld [vmem:[#allocation4 + $0x170] sm:$0xff]
    %v135 = vld [vmem:[#allocation4 + $0x178] sm:$0xff]
    %v136 = vld [vmem:[#allocation4 + $0x180] sm:$0xf]
    %v137 = vld [vmem:[#allocation4 + $0x188] sm:$0xf]
    %v138 = vld [vmem:[#allocation4 + $0x190] sm:$0xf]
    %v139 = vld [vmem:[#allocation4 + $0x198] sm:$0xf]
    %v140 = vld [vmem:[%s3] sm:$0xf]
    %v142 = vlaneseq
    %v143 = vshrl.u32 %v142, 7
    %v144 = vsub.s32 0, %v143
    %v145 = vrot.slane %v140, %v144
    %v146 = vlaneseq
    %v147 = vshrl.u32 %v146, 7
    %v148 = vsub.s32 1, %v147
    %v149 = vrot.slane %v140, %v148
    %v150 = vlaneseq
    %v151 = vshrl.u32 %v150, 7
    %v152 = vsub.s32 2, %v151
    %v153 = vrot.slane %v140, %v152
    %v154 = vlaneseq
    %v155 = vshrl.u32 %v154, 7
    %v156 = vsub.s32 3, %v155
    %v157 = vrot.slane %v140, %v156
    %vm162 = vcmask 818176
    %v164 = vsel %vm162, %v86, 0
    %v167 = vsel %vm162, %v87, 0
    %vm169 = vcmask 1043456
    %v171 = vsel %vm169, %v136, 0
    %v174 = vsel %vm169, %v137, 0
    %v177 = vsel %vm169, %v138, 0
    %v180 = vsel %vm169, %v139, 0
    %182 = vmatprep.subr.mxu0 %v89
    %183 = vmatpush1.msra.mxu0 %v88
    %184 = vmatprep.subr.mxu0 %v93
    %185 = vmatpush1.msra.mxu0 %v92
    %186 = vmatprep.subr.mxu0 %v97
    %187 = vmatpush1.msra.mxu0 %v96
    %188 = vmatprep.subr.mxu0 %v101
    %189 = vmatpush1.msra.mxu0 %v100
    %190 = vmatprep.subr.mxu0 %v105
    %191 = vmatpush1.msra.mxu0 %v104
    %192 = vmatprep.subr.mxu0 %v109
    %193 = vmatpush1.msra.mxu0 %v108
    %194 = vmatprep.subr.mxu0 %v113
    %195 = vmatpush1.msra.mxu0 %v112
    %196 = vmatprep.subr.mxu0 %v117
    %197 = vmatpush1.msra.mxu0 %v116
    %198 = vmatprep.subr.mxu0 %v121
    %199 = vmatpush1.msra.mxu0 %v120
    %200 = vmatprep.subr.mxu0 %v125
    %201 = vmatpush1.msra.mxu0 %v124
    %202 = vmatprep.subr.mxu0 %v129
    %203 = vmatpush1.msra.mxu0 %v128
    %204 = vmatprep.subr.mxu0 %v133
    %205 = vmatpush1.msra.mxu0 %v132
    %206 = vmatprep.subr.mxu0 %v174
    %207 = vmatpush1.msra.mxu0 %v171
    %208 = vmatprep.subr.mxu0 0.0
    %209 = vmatpush1.msra.mxu0 0.0
    %210 = vmatprep.subr.mxu0 0.0
    %211 = vmatpush1.msra.mxu0 0.0
    %212 = vmatprep.subr.mxu0 0.0
    %213 = vmatpush1.msra.mxu0 0.0
    %214 = vmatprep.subr.mxu0 0.0
    %215 = vmatpush1.msra.mxu0 0.0
    %216 = vmatprep.subr.mxu0 0.0
    %217 = vmatpush1.msra.mxu0 0.0
    %218 = vmatprep.subr.mxu0 0.0
    %219 = vmatpush1.msra.mxu0 0.0
    %220 = vmatprep.subr.mxu0 0.0
    %221 = vmatpush1.msra.mxu0 0.0
    %222 = vmatprep.subr.mxu0 0.0
    %223 = vmatpush1.msra.mxu0 0.0
    %224 = vmatprep.subr.mxu0 0.0
    %225 = vmatpush1.msra.mxu0 0.0
    %226 = vmatprep.subr.mxu0 0.0
    %227 = vmatpush1.msra.mxu0 0.0
    %228 = vmatprep.subr.mxu0 0.0
    %229 = vmatpush1.msra.mxu0 0.0
    %230 = vmatprep.subr.mxu0 0.0
    %231 = vmatpush1.msra.mxu0 0.0
    %232 = vmatprep.subr.mxu0 0.0
    %233 = vmatpush1.msra.mxu0 0.0
    %234 = vmatprep.subr.mxu0 0.0
    %235 = vmatpush1.msra.mxu0 0.0
    %236 = vmatprep.subr.mxu0 0.0
    %237 = vmatpush1.msra.mxu0 0.0
    %238 = vmatprep.subr.mxu0 0.0
    %239 = vmatpush1.msra.mxu0 0.0
    %240 = vmatprep.subr.mxu0 0.0
    %241 = vmatpush1.msra.mxu0 0.0
    %242 = vmatprep.subr.mxu0 0.0
    %243 = vmatpush1.msra.mxu0 0.0
    %244 = vmatprep.subr.mxu0 0.0
    %245 = vmatpush1.msra.mxu0 0.0
    %246 = vmatprep.mubr.f32.mxu0 0.0
    %247 = vmatmul.mubr.f32.gmra.mrb[0].mxu0 %v164
    %v248 = vpop.f32.mrb[0].mxu0
    %v249 = vadd.f32 %v145, %v248
    %v250 = vpop.f32.mrb[0].mxu0
    %v251 = vadd.f32 %v149, %v250
    %252 = vmatprep.mubr.f32.mxu0 0.0
    %253 = vmatmul.mubr.f32.gmra.mrb[0].mxu0 %v167
    %v254 = vpop.f32.mrb[0].mxu0
    %v255 = vadd.f32 %v145, %v254
    %v256 = vpop.f32.mrb[0].mxu0
    %v257 = vadd.f32 %v149, %v256
    %258 = vdwg.mxu0
    %259 = vmatprep.subr.mxu0 %v91
    %260 = vmatpush1.msra.mxu0 %v90
    %261 = vmatprep.subr.mxu0 %v95
    %262 = vmatpush1.msra.mxu0 %v94
    %263 = vmatprep.subr.mxu0 %v99
    %264 = vmatpush1.msra.mxu0 %v98
    %265 = vmatprep.subr.mxu0 %v103
    %266 = vmatpush1.msra.mxu0 %v102
    %267 = vmatprep.subr.mxu0 %v107
    %268 = vmatpush1.msra.mxu0 %v106
    %269 = vmatprep.subr.mxu0 %v111
    %270 = vmatpush1.msra.mxu0 %v110
    %271 = vmatprep.subr.mxu0 %v115
    %272 = vmatpush1.msra.mxu0 %v114
    %273 = vmatprep.subr.mxu0 %v119
    %274 = vmatpush1.msra.mxu0 %v118
    %275 = vmatprep.subr.mxu0 %v123
    %276 = vmatpush1.msra.mxu0 %v122
    %277 = vmatprep.subr.mxu0 %v127
    %278 = vmatpush1.msra.mxu0 %v126
    %279 = vmatprep.subr.mxu0 %v131
    %280 = vmatpush1.msra.mxu0 %v130
    %281 = vmatprep.subr.mxu0 %v135
    %282 = vmatpush1.msra.mxu0 %v134
    %283 = vmatprep.subr.mxu0 %v180
    %284 = vmatpush1.msra.mxu0 %v177
    %285 = vmatprep.subr.mxu0 0.0
    %286 = vmatpush1.msra.mxu0 0.0
    %287 = vmatprep.subr.mxu0 0.0
    %288 = vmatpush1.msra.mxu0 0.0
    %289 = vmatprep.subr.mxu0 0.0
    %290 = vmatpush1.msra.mxu0 0.0
    %291 = vmatprep.subr.mxu0 0.0
    %292 = vmatpush1.msra.mxu0 0.0
    %293 = vmatprep.subr.mxu0 0.0
    %294 = vmatpush1.msra.mxu0 0.0
    %295 = vmatprep.subr.mxu0 0.0
    %296 = vmatpush1.msra.mxu0 0.0
    %297 = vmatprep.subr.mxu0 0.0
    %298 = vmatpush1.msra.mxu0 0.0
    %299 = vmatprep.subr.mxu0 0.0
    %300 = vmatpush1.msra.mxu0 0.0
    %301 = vmatprep.subr.mxu0 0.0
    %302 = vmatpush1.msra.mxu0 0.0
    %303 = vmatprep.subr.mxu0 0.0
    %304 = vmatpush1.msra.mxu0 0.0
    %305 = vmatprep.subr.mxu0 0.0
    %306 = vmatpush1.msra.mxu0 0.0
    %307 = vmatprep.subr.mxu0 0.0
    %308 = vmatpush1.msra.mxu0 0.0
    %309 = vmatprep.subr.mxu0 0.0
    %310 = vmatpush1.msra.mxu0 0.0
    %311 = vmatprep.subr.mxu0 0.0
    %312 = vmatpush1.msra.mxu0 0.0
    %313 = vmatprep.subr.mxu0 0.0
    %314 = vmatpush1.msra.mxu0 0.0
    %315 = vmatprep.subr.mxu0 0.0
    %316 = vmatpush1.msra.mxu0 0.0
    %317 = vmatprep.subr.mxu0 0.0
    %318 = vmatpush1.msra.mxu0 0.0
    %319 = vmatprep.subr.mxu0 0.0
    %320 = vmatpush1.msra.mxu0 0.0
    %321 = vmatprep.subr.mxu0 0.0
    %322 = vmatpush1.msra.mxu0 0.0
    %323 = vmatprep.mubr.f32.mxu0 0.0
    %324 = vmatmul.mubr.f32.gmra.mrb[0].mxu0 %v164
    %v325 = vpop.f32.mrb[0].mxu0
    %v326 = vadd.f32 %v153, %v325
    %v327 = vpop.f32.mrb[0].mxu0
    %v328 = vadd.f32 %v157, %v327
    %329 = vmatprep.mubr.f32.mxu0 0.0
    %330 = vmatmul.mubr.f32.gmra.mrb[0].mxu0 %v167
    %v331 = vpop.f32.mrb[0].mxu0
    %v332 = vadd.f32 %v153, %v331
    %v333 = vpop.f32.mrb[0].mxu0
    %v334 = vadd.f32 %v157, %v333
    %335 = vdwg.mxu0
    %336 = vst [vmem:[#allocation2] sm:$0xff] %v249
    %337 = vst [vmem:[#allocation2 + $0x8] sm:$0xff] %v251
    %338 = vst [vmem:[#allocation2 + $0x10] sm:$0xff] %v326
    %339 = vst [vmem:[#allocation2 + $0x18] sm:$0xff] %v328
    %340 = vst [vmem:[#allocation2 + $0x20] sm:$0xff] %v255
    %341 = vst [vmem:[#allocation2 + $0x28] sm:$0xff] %v257
    %342 = vst [vmem:[#allocation2 + $0x30] sm:$0xff] %v332
    %343 = vst [vmem:[#allocation2 + $0x38] sm:$0xff] %v334
    %v344 = vld [vmem:[#allocation2] sm:$0x3]
    %v345 = vld [vmem:[#allocation2 + $0x8] sm:$0x3]
    %v346 = vld [vmem:[#allocation2 + $0x10] sm:$0x3]
    %v347 = vld [vmem:[#allocation2 + $0x18] sm:$0x3]
    %v348 = vld [vmem:[#allocation7] sm:$0xff]
    %v349 = vld [vmem:[#allocation7 + $0x8] sm:$0xff]
    %v350 = vld [vmem:[#allocation7 + $0x10] sm:$0xff]
    %v351 = vld [vmem:[#allocation7 + $0x18] sm:$0xff]
    %v352 = vld [vmem:[#allocation7 + $0x20] sm:$0xff]
    %v353 = vld [vmem:[#allocation7 + $0x28] sm:$0xff]
    %v354 = vld [vmem:[#allocation7 + $0x30] sm:$0xff]
    %v355 = vld [vmem:[#allocation7 + $0x38] sm:$0xff]
    %v356 = vld [vmem:[#allocation7 + $0x40] sm:$0xff]
    %v357 = vld [vmem:[#allocation7 + $0x48] sm:$0xff]
    %v358 = vld [vmem:[#allocation7 + $0x50] sm:$0xff]
    %v359 = vld [vmem:[#allocation7 + $0x58] sm:$0xff]
    %v360 = vld [vmem:[#allocation7 + $0x60] sm:$0xff]
    %v361 = vld [vmem:[#allocation7 + $0x68] sm:$0xff]
    %v362 = vld [vmem:[#allocation7 + $0x70] sm:$0xff]
    %v363 = vld [vmem:[#allocation7 + $0x78] sm:$0xff]
    %v364 = vld [vmem:[#allocation7 + $0x80] sm:$0xff]
    %v365 = vld [vmem:[#allocation7 + $0x88] sm:$0xff]
    %v366 = vld [vmem:[#allocation7 + $0x90] sm:$0xff]
    %v367 = vld [vmem:[#allocation7 + $0x98] sm:$0xff]
    %v368 = vld [vmem:[#allocation7 + $0xa0] sm:$0xff]
    %v369 = vld [vmem:[#allocation7 + $0xa8] sm:$0xff]
    %v370 = vld [vmem:[#allocation7 + $0xb0] sm:$0xff]
    %v371 = vld [vmem:[#allocation7 + $0xb8] sm:$0xff]
    %v372 = vld [vmem:[#allocation7 + $0xc0] sm:$0xff]
    %v373 = vld [vmem:[#allocation7 + $0xc8] sm:$0xff]
    %v374 = vld [vmem:[#allocation7 + $0xd0] sm:$0xff]
    %v375 = vld [vmem:[#allocation7 + $0xd8] sm:$0xff]
    %v376 = vld [vmem:[#allocation7 + $0xe0] sm:$0xff]
    %v377 = vld [vmem:[#allocation7 + $0xe8] sm:$0xff]
    %v378 = vld [vmem:[#allocation7 + $0xf0] sm:$0xff]
    %v379 = vld [vmem:[#allocation7 + $0xf8] sm:$0xff]
    %v380 = vld [vmem:[#allocation7 + $0x100] sm:$0xff]
    %v381 = vld [vmem:[#allocation7 + $0x108] sm:$0xff]
    %v382 = vld [vmem:[#allocation7 + $0x110] sm:$0xff]
    %v383 = vld [vmem:[#allocation7 + $0x118] sm:$0xff]
    %v384 = vld [vmem:[#allocation7 + $0x120] sm:$0xff]
    %v385 = vld [vmem:[#allocation7 + $0x128] sm:$0xff]
    %v386 = vld [vmem:[#allocation7 + $0x130] sm:$0xff]
    %v387 = vld [vmem:[#allocation7 + $0x138] sm:$0xff]
    %v388 = vld [vmem:[#allocation7 + $0x140] sm:$0xff]
    %v389 = vld [vmem:[#allocation7 + $0x148] sm:$0xff]
    %v390 = vld [vmem:[#allocation7 + $0x150] sm:$0xff]
    %v391 = vld [vmem:[#allocation7 + $0x158] sm:$0xff]
    %v392 = vld [vmem:[#allocation7 + $0x160] sm:$0xff]
    %v393 = vld [vmem:[#allocation7 + $0x168] sm:$0xff]
    %v394 = vld [vmem:[#allocation7 + $0x170] sm:$0xff]
    %v395 = vld [vmem:[#allocation7 + $0x178] sm:$0xff]
    %v396 = vld [vmem:[#allocation7 + $0x180] sm:$0xff]
    %v397 = vld [vmem:[#allocation7 + $0x188] sm:$0xff]
    %v398 = vld [vmem:[#allocation7 + $0x190] sm:$0xff]
    %v399 = vld [vmem:[#allocation7 + $0x198] sm:$0xff]
    %v400 = vld [vmem:[#allocation7 + $0x1a0] sm:$0xff]
    %v401 = vld [vmem:[#allocation7 + $0x1a8] sm:$0xff]
    %v402 = vld [vmem:[#allocation7 + $0x1b0] sm:$0xff]
    %v403 = vld [vmem:[#allocation7 + $0x1b8] sm:$0xff]
    %v404 = vld [vmem:[#allocation7 + $0x1c0] sm:$0xff]
    %v405 = vld [vmem:[#allocation7 + $0x1c8] sm:$0xff]
    %v406 = vld [vmem:[#allocation7 + $0x1d0] sm:$0xff]
    %v407 = vld [vmem:[#allocation7 + $0x1d8] sm:$0xff]
    %v408 = vld [vmem:[#allocation7 + $0x1e0] sm:$0xff]
    %v409 = vld [vmem:[#allocation7 + $0x1e8] sm:$0xff]
    %v410 = vld [vmem:[#allocation7 + $0x1f0] sm:$0xff]
    %v411 = vld [vmem:[#allocation7 + $0x1f8] sm:$0xff]
    %412 = vmatprep.subr.mxu0 %v349
    %413 = vmatpush1.msra.mxu0 %v348
    %414 = vmatprep.subr.mxu0 %v353
    %415 = vmatpush1.msra.mxu0 %v352
    %416 = vmatprep.subr.mxu0 %v357
    %417 = vmatpush1.msra.mxu0 %v356
    %418 = vmatprep.subr.mxu0 %v361
    %419 = vmatpush1.msra.mxu0 %v360
    %420 = vmatprep.subr.mxu0 %v365
    %421 = vmatpush1.msra.mxu0 %v364
    %422 = vmatprep.subr.mxu0 %v369
    %423 = vmatpush1.msra.mxu0 %v368
    %424 = vmatprep.subr.mxu0 %v373
    %425 = vmatpush1.msra.mxu0 %v372
    %426 = vmatprep.subr.mxu0 %v377
    %427 = vmatpush1.msra.mxu0 %v376
    %428 = vmatprep.subr.mxu0 %v381
    %429 = vmatpush1.msra.mxu0 %v380
    %430 = vmatprep.subr.mxu0 %v385
    %431 = vmatpush1.msra.mxu0 %v384
    %432 = vmatprep.subr.mxu0 %v389
    %433 = vmatpush1.msra.mxu0 %v388
    %434 = vmatprep.subr.mxu0 %v393
    %435 = vmatpush1.msra.mxu0 %v392
    %436 = vmatprep.subr.mxu0 %v397
    %437 = vmatpush1.msra.mxu0 %v396
    %438 = vmatprep.subr.mxu0 %v401
    %439 = vmatpush1.msra.mxu0 %v400
    %440 = vmatprep.subr.mxu0 %v405
    %441 = vmatpush1.msra.mxu0 %v404
    %442 = vmatprep.subr.mxu0 %v409
    %443 = vmatpush1.msra.mxu0 %v408
    %444 = vmatprep.subr.mxu0 0.0
    %445 = vmatpush1.msra.mxu0 0.0
    %446 = vmatprep.subr.mxu0 0.0
    %447 = vmatpush1.msra.mxu0 0.0
    %448 = vmatprep.subr.mxu0 0.0
    %449 = vmatpush1.msra.mxu0 0.0
    %450 = vmatprep.subr.mxu0 0.0
    %451 = vmatpush1.msra.mxu0 0.0
    %452 = vmatprep.subr.mxu0 0.0
    %453 = vmatpush1.msra.mxu0 0.0
    %454 = vmatprep.subr.mxu0 0.0
    %455 = vmatpush1.msra.mxu0 0.0
    %456 = vmatprep.subr.mxu0 0.0
    %457 = vmatpush1.msra.mxu0 0.0
    %458 = vmatprep.subr.mxu0 0.0
    %459 = vmatpush1.msra.mxu0 0.0
    %460 = vmatprep.subr.mxu0 0.0
    %461 = vmatpush1.msra.mxu0 0.0
    %462 = vmatprep.subr.mxu0 0.0
    %463 = vmatpush1.msra.mxu0 0.0
    %464 = vmatprep.subr.mxu0 0.0
    %465 = vmatpush1.msra.mxu0 0.0
    %466 = vmatprep.subr.mxu0 0.0
    %467 = vmatpush1.msra.mxu0 0.0
    %468 = vmatprep.subr.mxu0 0.0
    %469 = vmatpush1.msra.mxu0 0.0
    %470 = vmatprep.subr.mxu0 0.0
    %471 = vmatpush1.msra.mxu0 0.0
    %472 = vmatprep.subr.mxu0 0.0
    %473 = vmatpush1.msra.mxu0 0.0
    %474 = vmatprep.subr.mxu0 0.0
    %475 = vmatpush1.msra.mxu0 0.0
    %476 = vmatprep.mubr.f32.mxu0 0.0
    %477 = vmatmul.mubr.f32.gmra.mrb[0].mxu0 0.0
    %v478 = vpop.f32.mrb[0].mxu0
    %v479 = vadd.f32 0.0, %v478
    %v480 = vpop.f32.mrb[0].mxu0
    %v481 = vadd.f32 0.0, %v480
    %482 = vdwg.mxu0
    %483 = vmatprep.subr.mxu0 %v351
    %484 = vmatpush1.msra.mxu0 %v350
    %485 = vmatprep.subr.mxu0 %v355
    %486 = vmatpush1.msra.mxu0 %v354
    %487 = vmatprep.subr.mxu0 %v359
    %488 = vmatpush1.msra.mxu0 %v358
    %489 = vmatprep.subr.mxu0 %v363
    %490 = vmatpush1.msra.mxu0 %v362
    %491 = vmatprep.subr.mxu0 %v367
    %492 = vmatpush1.msra.mxu0 %v366
    %493 = vmatprep.subr.mxu0 %v371
    %494 = vmatpush1.msra.mxu0 %v370
    %495 = vmatprep.subr.mxu0 %v375
    %496 = vmatpush1.msra.mxu0 %v374
    %497 = vmatprep.subr.mxu0 %v379
    %498 = vmatpush1.msra.mxu0 %v378
    %499 = vmatprep.subr.mxu0 %v383
    %500 = vmatpush1.msra.mxu0 %v382
    %501 = vmatprep.subr.mxu0 %v387
    %502 = vmatpush1.msra.mxu0 %v386
    %503 = vmatprep.subr.mxu0 %v391
    %504 = vmatpush1.msra.mxu0 %v390
    %505 = vmatprep.subr.mxu0 %v395
    %506 = vmatpush1.msra.mxu0 %v394
    %507 = vmatprep.subr.mxu0 %v399
    %508 = vmatpush1.msra.mxu0 %v398
    %509 = vmatprep.subr.mxu0 %v403
    %510 = vmatpush1.msra.mxu0 %v402
    %511 = vmatprep.subr.mxu0 %v407
    %512 = vmatpush1.msra.mxu0 %v406
    %513 = vmatprep.subr.mxu0 %v411
    %514 = vmatpush1.msra.mxu0 %v410
    %515 = vmatprep.subr.mxu0 0.0
    %516 = vmatpush1.msra.mxu0 0.0
    %517 = vmatprep.subr.mxu0 0.0
    %518 = vmatpush1.msra.mxu0 0.0
    %519 = vmatprep.subr.mxu0 0.0
    %520 = vmatpush1.msra.mxu0 0.0
    %521 = vmatprep.subr.mxu0 0.0
    %522 = vmatpush1.msra.mxu0 0.0
    %523 = vmatprep.subr.mxu0 0.0
    %524 = vmatpush1.msra.mxu0 0.0
    %525 = vmatprep.subr.mxu0 0.0
    %526 = vmatpush1.msra.mxu0 0.0
    %527 = vmatprep.subr.mxu0 0.0
    %528 = vmatpush1.msra.mxu0 0.0
    %529 = vmatprep.subr.mxu0 0.0
    %530 = vmatpush1.msra.mxu0 0.0
    %531 = vmatprep.subr.mxu0 0.0
    %532 = vmatpush1.msra.mxu0 0.0
    %533 = vmatprep.subr.mxu0 0.0
    %534 = vmatpush1.msra.mxu0 0.0
    %535 = vmatprep.subr.mxu0 0.0
    %536 = vmatpush1.msra.mxu0 0.0
    %537 = vmatprep.subr.mxu0 0.0
    %538 = vmatpush1.msra.mxu0 0.0
    %539 = vmatprep.subr.mxu0 0.0
    %540 = vmatpush1.msra.mxu0 0.0
    %541 = vmatprep.subr.mxu0 0.0
    %542 = vmatpush1.msra.mxu0 0.0
    %543 = vmatprep.subr.mxu0 0.0
    %544 = vmatpush1.msra.mxu0 0.0
    %545 = vmatprep.subr.mxu0 0.0
    %546 = vmatpush1.msra.mxu0 0.0
    %547 = vmatprep.mubr.f32.mxu0 0.0
    %548 = vmatmul.mubr.f32.gmra.mrb[0].mxu0 0.0
    %v549 = vpop.f32.mrb[0].mxu0
    %v550 = vadd.f32 0.0, %v549
    %v551 = vpop.f32.mrb[0].mxu0
    %v552 = vadd.f32 0.0, %v551
    %553 = vdwg.mxu0
    %v554 = vadd.f32 %v344, %v479
    %v555 = vadd.f32 %v345, %v481
    %v556 = vadd.f32 %v346, %v550
    %v557 = vadd.f32 %v347, %v552
    %v558 = vxor.u32 %v554, 2147483648
    %v559 = vmul.f32 %v558, 1.442695
    %v560 = vpow.pop %v559
    %v561 = vadd.f32 %v560, 1.0
    %v562 = vrcp.pop %v561
    %v563 = vmul.f32 1.0, %v562
    %v564 = vxor.u32 %v555, 2147483648
    %v565 = vmul.f32 %v564, 1.442695
    %v566 = vpow.pop %v565
    %v567 = vadd.f32 %v566, 1.0
    %v568 = vrcp.pop %v567
    %v569 = vmul.f32 1.0, %v568
    %v570 = vtanh.pop %v556
    %v571 = vxor.u32 %v557, 2147483648
    %v572 = vmul.f32 %v571, 1.442695
    %v573 = vpow.pop %v572
    %v574 = vadd.f32 %v573, 1.0
    %v575 = vrcp.pop %v574
    %v576 = vmul.f32 1.0, %v575
    %v577 = vmul.f32 %v569, 0.0
    %v578 = vmul.f32 %v563, %v570
    %v579 = vadd.f32 %v577, %v578
    %v580 = vtanh.pop %v579
    %v581 = vmul.f32 %v576, %v580
    %582 = vst [vmem:[#allocation3] sm:$0x3] %v581
    %v583 = vld [vmem:[#allocation2] sm:$0xc]
    %v584 = vld [vmem:[#allocation2 + $0x8] sm:$0xc]
    %v585 = vld [vmem:[#allocation2 + $0x10] sm:$0xc]
    %v586 = vld [vmem:[#allocation2 + $0x18] sm:$0xc]
    %v587 = vld [vmem:[#allocation7] sm:$0xff]
    %v588 = vld [vmem:[#allocation7 + $0x8] sm:$0xff]
    %v589 = vld [vmem:[#allocation7 + $0x10] sm:$0xff]
    %v590 = vld [vmem:[#allocation7 + $0x18] sm:$0xff]
    %v591 = vld [vmem:[#allocation7 + $0x20] sm:$0xff]
    %v592 = vld [vmem:[#allocation7 + $0x28] sm:$0xff]
    %v593 = vld [vmem:[#allocation7 + $0x30] sm:$0xff]
    %v594 = vld [vmem:[#allocation7 + $0x38] sm:$0xff]
    %v595 = vld [vmem:[#allocation7 + $0x40] sm:$0xff]
    %v596 = vld [vmem:[#allocation7 + $0x48] sm:$0xff]
    %v597 = vld [vmem:[#allocation7 + $0x50] sm:$0xff]
    %v598 = vld [vmem:[#allocation7 + $0x58] sm:$0xff]
    %v599 = vld [vmem:[#allocation7 + $0x60] sm:$0xff]
    %v600 = vld [vmem:[#allocation7 + $0x68] sm:$0xff]
    %v601 = vld [vmem:[#allocation7 + $0x70] sm:$0xff]
    %v602 = vld [vmem:[#allocation7 + $0x78] sm:$0xff]
    %v603 = vld [vmem:[#allocation7 + $0x80] sm:$0xff]
    %v604 = vld [vmem:[#allocation7 + $0x88] sm:$0xff]
    %v605 = vld [vmem:[#allocation7 + $0x90] sm:$0xff]
    %v606 = vld [vmem:[#allocation7 + $0x98] sm:$0xff]
    %v607 = vld [vmem:[#allocation7 + $0xa0] sm:$0xff]
    %v608 = vld [vmem:[#allocation7 + $0xa8] sm:$0xff]
    %v609 = vld [vmem:[#allocation7 + $0xb0] sm:$0xff]
    %v610 = vld [vmem:[#allocation7 + $0xb8] sm:$0xff]
    %v611 = vld [vmem:[#allocation7 + $0xc0] sm:$0xff]
    %v612 = vld [vmem:[#allocation7 + $0xc8] sm:$0xff]
    %v613 = vld [vmem:[#allocation7 + $0xd0] sm:$0xff]
    %v614 = vld [vmem:[#allocation7 + $0xd8] sm:$0xff]
    %v615 = vld [vmem:[#allocation7 + $0xe0] sm:$0xff]
    %v616 = vld [vmem:[#allocation7 + $0xe8] sm:$0xff]
    %v617 = vld [vmem:[#allocation7 + $0xf0] sm:$0xff]
    %v618 = vld [vmem:[#allocation7 + $0xf8] sm:$0xff]
    %v619 = vld [vmem:[#allocation7 + $0x100] sm:$0xff]
    %v620 = vld [vmem:[#allocation7 + $0x108] sm:$0xff]
    %v621 = vld [vmem:[#allocation7 + $0x110] sm:$0xff]
    %v622 = vld [vmem:[#allocation7 + $0x118] sm:$0xff]
    %v623 = vld [vmem:[#allocation7 + $0x120] sm:$0xff]
    %v624 = vld [vmem:[#allocation7 + $0x128] sm:$0xff]
    %v625 = vld [vmem:[#allocation7 + $0x130] sm:$0xff]
    %v626 = vld [vmem:[#allocation7 + $0x138] sm:$0xff]
    %v627 = vld [vmem:[#allocation7 + $0x140] sm:$0xff]
    %v628 = vld [vmem:[#allocation7 + $0x148] sm:$0xff]
    %v629 = vld [vmem:[#allocation7 + $0x150] sm:$0xff]
    %v630 = vld [vmem:[#allocation7 + $0x158] sm:$0xff]
    %v631 = vld [vmem:[#allocation7 + $0x160] sm:$0xff]
    %v632 = vld [vmem:[#allocation7 + $0x168] sm:$0xff]
    %v633 = vld [vmem:[#allocation7 + $0x170] sm:$0xff]
    %v634 = vld [vmem:[#allocation7 + $0x178] sm:$0xff]
    %v635 = vld [vmem:[#allocation7 + $0x180] sm:$0xff]
    %v636 = vld [vmem:[#allocation7 + $0x188] sm:$0xff]
    %v637 = vld [vmem:[#allocation7 + $0x190] sm:$0xff]
    %v638 = vld [vmem:[#allocation7 + $0x198] sm:$0xff]
    %v639 = vld [vmem:[#allocation7 + $0x1a0] sm:$0xff]
    %v640 = vld [vmem:[#allocation7 + $0x1a8] sm:$0xff]
    %v641 = vld [vmem:[#allocation7 + $0x1b0] sm:$0xff]
    %v642 = vld [vmem:[#allocation7 + $0x1b8] sm:$0xff]
    %v643 = vld [vmem:[#allocation7 + $0x1c0] sm:$0xff]
    %v644 = vld [vmem:[#allocation7 + $0x1c8] sm:$0xff]
    %v645 = vld [vmem:[#allocation7 + $0x1d0] sm:$0xff]
    %v646 = vld [vmem:[#allocation7 + $0x1d8] sm:$0xff]
    %v647 = vld [vmem:[#allocation7 + $0x1e0] sm:$0xff]
    %v648 = vld [vmem:[#allocation7 + $0x1e8] sm:$0xff]
    %v649 = vld [vmem:[#allocation7 + $0x1f0] sm:$0xff]
    %v650 = vld [vmem:[#allocation7 + $0x1f8] sm:$0xff]
    %651 = vmatprep.subr.mxu0 %v588
    %652 = vmatpush1.msra.mxu0 %v587
    %653 = vmatprep.subr.mxu0 %v592
    %654 = vmatpush1.msra.mxu0 %v591
    %655 = vmatprep.subr.mxu0 %v596
    %656 = vmatpush1.msra.mxu0 %v595
    %657 = vmatprep.subr.mxu0 %v600
    %658 = vmatpush1.msra.mxu0 %v599
    %659 = vmatprep.subr.mxu0 %v604
    %660 = vmatpush1.msra.mxu0 %v603
    %661 = vmatprep.subr.mxu0 %v608
    %662 = vmatpush1.msra.mxu0 %v607
    %663 = vmatprep.subr.mxu0 %v612
    %664 = vmatpush1.msra.mxu0 %v611
    %665 = vmatprep.subr.mxu0 %v616
    %666 = vmatpush1.msra.mxu0 %v615
    %667 = vmatprep.subr.mxu0 %v620
    %668 = vmatpush1.msra.mxu0 %v619
    %669 = vmatprep.subr.mxu0 %v624
    %670 = vmatpush1.msra.mxu0 %v623
    %671 = vmatprep.subr.mxu0 %v628
    %672 = vmatpush1.msra.mxu0 %v627
    %673 = vmatprep.subr.mxu0 %v632
    %674 = vmatpush1.msra.mxu0 %v631
    %675 = vmatprep.subr.mxu0 %v636
    %676 = vmatpush1.msra.mxu0 %v635
    %677 = vmatprep.subr.mxu0 %v640
    %678 = vmatpush1.msra.mxu0 %v639
    %679 = vmatprep.subr.mxu0 %v644
    %680 = vmatpush1.msra.mxu0 %v643
    %681 = vmatprep.subr.mxu0 %v648
    %682 = vmatpush1.msra.mxu0 %v647
    %683 = vmatprep.subr.mxu0 0.0
    %684 = vmatpush1.msra.mxu0 0.0
    %685 = vmatprep.subr.mxu0 0.0
    %686 = vmatpush1.msra.mxu0 0.0
    %687 = vmatprep.subr.mxu0 0.0
    %688 = vmatpush1.msra.mxu0 0.0
    %689 = vmatprep.subr.mxu0 0.0
    %690 = vmatpush1.msra.mxu0 0.0
    %691 = vmatprep.subr.mxu0 0.0
    %692 = vmatpush1.msra.mxu0 0.0
    %693 = vmatprep.subr.mxu0 0.0
    %694 = vmatpush1.msra.mxu0 0.0
    %695 = vmatprep.subr.mxu0 0.0
    %696 = vmatpush1.msra.mxu0 0.0
    %697 = vmatprep.subr.mxu0 0.0
    %698 = vmatpush1.msra.mxu0 0.0
    %699 = vmatprep.subr.mxu0 0.0
    %700 = vmatpush1.msra.mxu0 0.0
    %701 = vmatprep.subr.mxu0 0.0
    %702 = vmatpush1.msra.mxu0 0.0
    %703 = vmatprep.subr.mxu0 0.0
    %704 = vmatpush1.msra.mxu0 0.0
    %705 = vmatprep.subr.mxu0 0.0
    %706 = vmatpush1.msra.mxu0 0.0
    %707 = vmatprep.subr.mxu0 0.0
    %708 = vmatpush1.msra.mxu0 0.0
    %709 = vmatprep.subr.mxu0 0.0
    %710 = vmatpush1.msra.mxu0 0.0
    %711 = vmatprep.subr.mxu0 0.0
    %712 = vmatpush1.msra.mxu0 0.0
    %713 = vmatprep.subr.mxu0 0.0
    %714 = vmatpush1.msra.mxu0 0.0
    %715 = vmatprep.mubr.f32.mxu0 0.0
    %716 = vmatmul.mubr.f32.gmra.mrb[0].mxu0 %v581
    %v717 = vpop.f32.mrb[0].mxu0
    %v718 = vadd.f32 0.0, %v717
    %v719 = vpop.f32.mrb[0].mxu0
    %v720 = vadd.f32 0.0, %v719
    %721 = vdwg.mxu0
    %722 = vmatprep.subr.mxu0 %v590
    %723 = vmatpush1.msra.mxu0 %v589
    %724 = vmatprep.subr.mxu0 %v594
    %725 = vmatpush1.msra.mxu0 %v593
    %726 = vmatprep.subr.mxu0 %v598
    %727 = vmatpush1.msra.mxu0 %v597
    %728 = vmatprep.subr.mxu0 %v602
    %729 = vmatpush1.msra.mxu0 %v601
    %730 = vmatprep.subr.mxu0 %v606
    %731 = vmatpush1.msra.mxu0 %v605
    %732 = vmatprep.subr.mxu0 %v610
    %733 = vmatpush1.msra.mxu0 %v609
    %734 = vmatprep.subr.mxu0 %v614
    %735 = vmatpush1.msra.mxu0 %v613
    %736 = vmatprep.subr.mxu0 %v618
    %737 = vmatpush1.msra.mxu0 %v617
    %738 = vmatprep.subr.mxu0 %v622
    %739 = vmatpush1.msra.mxu0 %v621
    %740 = vmatprep.subr.mxu0 %v626
    %741 = vmatpush1.msra.mxu0 %v625
    %742 = vmatprep.subr.mxu0 %v630
    %743 = vmatpush1.msra.mxu0 %v629
    %744 = vmatprep.subr.mxu0 %v634
    %745 = vmatpush1.msra.mxu0 %v633
    %746 = vmatprep.subr.mxu0 %v638
    %747 = vmatpush1.msra.mxu0 %v637
    %748 = vmatprep.subr.mxu0 %v642
    %749 = vmatpush1.msra.mxu0 %v641
    %750 = vmatprep.subr.mxu0 %v646
    %751 = vmatpush1.msra.mxu0 %v645
    %752 = vmatprep.subr.mxu0 %v650
    %753 = vmatpush1.msra.mxu0 %v649
    %754 = vmatprep.subr.mxu0 0.0
    %755 = vmatpush1.msra.mxu0 0.0
    %756 = vmatprep.subr.mxu0 0.0
    %757 = vmatpush1.msra.mxu0 0.0
    %758 = vmatprep.subr.mxu0 0.0
    %759 = vmatpush1.msra.mxu0 0.0
    %760 = vmatprep.subr.mxu0 0.0
    %761 = vmatpush1.msra.mxu0 0.0
    %762 = vmatprep.subr.mxu0 0.0
    %763 = vmatpush1.msra.mxu0 0.0
    %764 = vmatprep.subr.mxu0 0.0
    %765 = vmatpush1.msra.mxu0 0.0
    %766 = vmatprep.subr.mxu0 0.0
    %767 = vmatpush1.msra.mxu0 0.0
    %768 = vmatprep.subr.mxu0 0.0
    %769 = vmatpush1.msra.mxu0 0.0
    %770 = vmatprep.subr.mxu0 0.0
    %771 = vmatpush1.msra.mxu0 0.0
    %772 = vmatprep.subr.mxu0 0.0
    %773 = vmatpush1.msra.mxu0 0.0
    %774 = vmatprep.subr.mxu0 0.0
    %775 = vmatpush1.msra.mxu0 0.0
    %776 = vmatprep.subr.mxu0 0.0
    %777 = vmatpush1.msra.mxu0 0.0
    %778 = vmatprep.subr.mxu0 0.0
    %779 = vmatpush1.msra.mxu0 0.0
    %780 = vmatprep.subr.mxu0 0.0
    %781 = vmatpush1.msra.mxu0 0.0
    %782 = vmatprep.subr.mxu0 0.0
    %783 = vmatpush1.msra.mxu0 0.0
    %784 = vmatprep.subr.mxu0 0.0
    %785 = vmatpush1.msra.mxu0 0.0
    %786 = vmatprep.mubr.f32.mxu0 0.0
    %787 = vmatmul.mubr.f32.gmra.mrb[0].mxu0 %v581
    %v788 = vpop.f32.mrb[0].mxu0
    %v789 = vadd.f32 0.0, %v788
    %v790 = vpop.f32.mrb[0].mxu0
    %v791 = vadd.f32 0.0, %v790
    %792 = vdwg.mxu0
    %v797 = vrot.slane %v718, 6
    %v798 = vrot.slane %v720, 6
    %v799 = vrot.slane %v789, 6
    %v800 = vrot.slane %v791, 6
    %v805 = vadd.f32 %v583, %v797
    %v806 = vadd.f32 %v584, %v798
    %v807 = vadd.f32 %v585, %v799
    %v808 = vadd.f32 %v586, %v800
    %v809 = vxor.u32 %v805, 2147483648
    %v810 = vmul.f32 %v809, 1.442695
    %v811 = vpow.pop %v810
    %v812 = vadd.f32 %v811, 1.0
    %v813 = vrcp.pop %v812
    %v814 = vmul.f32 1.0, %v813
    %v815 = vxor.u32 %v806, 2147483648
    %v816 = vmul.f32 %v815, 1.442695
    %v817 = vpow.pop %v816
    %v818 = vadd.f32 %v817, 1.0
    %v819 = vrcp.pop %v818
    %v820 = vmul.f32 1.0, %v819
    %v821 = vtanh.pop %v807
    %v822 = vxor.u32 %v808, 2147483648
    %v823 = vmul.f32 %v822, 1.442695
    %v824 = vpow.pop %v823
    %v825 = vadd.f32 %v824, 1.0
    %v826 = vrcp.pop %v825
    %v827 = vmul.f32 1.0, %v826
    %v829 = vrot.slane %v579, 6
    %v831 = vmul.f32 %v820, %v829
    %v832 = vmul.f32 %v814, %v821
    %v833 = vadd.f32 %v831, %v832
    %v834 = vtanh.pop %v833
    %v835 = vmul.f32 %v827, %v834
    %836 = vst [vmem:[#allocation3] sm:$0xc] %v835
    %v837 = vld [vmem:[#allocation2] sm:$0x30]
    %v838 = vld [vmem:[#allocation2 + $0x8] sm:$0x30]
    %v839 = vld [vmem:[#allocation2 + $0x10] sm:$0x30]
    %v840 = vld [vmem:[#allocation2 + $0x18] sm:$0x30]
    %v841 = vld [vmem:[#allocation7] sm:$0xff]
    %v842 = vld [vmem:[#allocation7 + $0x8] sm:$0xff]
    %v843 = vld [vmem:[#allocation7 + $0x10] sm:$0xff]
    %v844 = vld [vmem:[#allocation7 + $0x18] sm:$0xff]
    %v845 = vld [vmem:[#allocation7 + $0x20] sm:$0xff]
    %v846 = vld [vmem:[#allocation7 + $0x28] sm:$0xff]
    %v847 = vld [vmem:[#allocation7 + $0x30] sm:$0xff]
    %v848 = vld [vmem:[#allocation7 + $0x38] sm:$0xff]
    %v849 = vld [vmem:[#allocation7 + $0x40] sm:$0xff]
    %v850 = vld [vmem:[#allocation7 + $0x48] sm:$0xff]
    %v851 = vld [vmem:[#allocation7 + $0x50] sm:$0xff]
    %v852 = vld [vmem:[#allocation7 + $0x58] sm:$0xff]
    %v853 = vld [vmem:[#allocation7 + $0x60] sm:$0xff]
    %v854 = vld [vmem:[#allocation7 + $0x68] sm:$0xff]
    %v855 = vld [vmem:[#allocation7 + $0x70] sm:$0xff]
    %v856 = vld [vmem:[#allocation7 + $0x78] sm:$0xff]
    %v857 = vld [vmem:[#allocation7 + $0x80] sm:$0xff]
    %v858 = vld [vmem:[#allocation7 + $0x88] sm:$0xff]
    %v859 = vld [vmem:[#allocation7 + $0x90] sm:$0xff]
    %v860 = vld [vmem:[#allocation7 + $0x98] sm:$0xff]
    %v861 = vld [vmem:[#allocation7 + $0xa0] sm:$0xff]
    %v862 = vld [vmem:[#allocation7 + $0xa8] sm:$0xff]
    %v863 = vld [vmem:[#allocation7 + $0xb0] sm:$0xff]
    %v864 = vld [vmem:[#allocation7 + $0xb8] sm:$0xff]
    %v865 = vld [vmem:[#allocation7 + $0xc0] sm:$0xff]
    %v866 = vld [vmem:[#allocation7 + $0xc8] sm:$0xff]
    %v867 = vld [vmem:[#allocation7 + $0xd0] sm:$0xff]
    %v868 = vld [vmem:[#allocation7 + $0xd8] sm:$0xff]
    %v869 = vld [vmem:[#allocation7 + $0xe0] sm:$0xff]
    %v870 = vld [vmem:[#allocation7 + $0xe8] sm:$0xff]
    %v871 = vld [vmem:[#allocation7 + $0xf0] sm:$0xff]
    %v872 = vld [vmem:[#allocation7 + $0xf8] sm:$0xff]
    %v873 = vld [vmem:[#allocation7 + $0x100] sm:$0xff]
    %v874 = vld [vmem:[#allocation7 + $0x108] sm:$0xff]
    %v875 = vld [vmem:[#allocation7 + $0x110] sm:$0xff]
    %v876 = vld [vmem:[#allocation7 + $0x118] sm:$0xff]
    %v877 = vld [vmem:[#allocation7 + $0x120] sm:$0xff]
    %v878 = vld [vmem:[#allocation7 + $0x128] sm:$0xff]
    %v879 = vld [vmem:[#allocation7 + $0x130] sm:$0xff]
    %v880 = vld [vmem:[#allocation7 + $0x138] sm:$0xff]
    %v881 = vld [vmem:[#allocation7 + $0x140] sm:$0xff]
    %v882 = vld [vmem:[#allocation7 + $0x148] sm:$0xff]
    %v883 = vld [vmem:[#allocation7 + $0x150] sm:$0xff]
    %v884 = vld [vmem:[#allocation7 + $0x158] sm:$0xff]
    %v885 = vld [vmem:[#allocation7 + $0x160] sm:$0xff]
    %v886 = vld [vmem:[#allocation7 + $0x168] sm:$0xff]
    %v887 = vld [vmem:[#allocation7 + $0x170] sm:$0xff]
    %v888 = vld [vmem:[#allocation7 + $0x178] sm:$0xff]
    %v889 = vld [vmem:[#allocation7 + $0x180] sm:$0xff]
    %v890 = vld [vmem:[#allocation7 + $0x188] sm:$0xff]
    %v891 = vld [vmem:[#allocation7 + $0x190] sm:$0xff]
    %v892 = vld [vmem:[#allocation7 + $0x198] sm:$0xff]
    %v893 = vld [vmem:[#allocation7 + $0x1a0] sm:$0xff]
    %v894 = vld [vmem:[#allocation7 + $0x1a8] sm:$0xff]
    %v895 = vld [vmem:[#allocation7 + $0x1b0] sm:$0xff]
    %v896 = vld [vmem:[#allocation7 + $0x1b8] sm:$0xff]
    %v897 = vld [vmem:[#allocation7 + $0x1c0] sm:$0xff]
    %v898 = vld [vmem:[#allocation7 + $0x1c8] sm:$0xff]
    %v899 = vld [vmem:[#allocation7 + $0x1d0] sm:$0xff]
    %v900 = vld [vmem:[#allocation7 + $0x1d8] sm:$0xff]
    %v901 = vld [vmem:[#allocation7 + $0x1e0] sm:$0xff]
    %v902 = vld [vmem:[#allocation7 + $0x1e8] sm:$0xff]
    %v903 = vld [vmem:[#allocation7 + $0x1f0] sm:$0xff]
    %v904 = vld [vmem:[#allocation7 + $0x1f8] sm:$0xff]
    %v906 = vrot.slane %v835, 2
    %908 = vmatprep.subr.mxu0 %v842
    %909 = vmatpush1.msra.mxu0 %v841
    %910 = vmatprep.subr.mxu0 %v846
    %911 = vmatpush1.msra.mxu0 %v845
    %912 = vmatprep.subr.mxu0 %v850
    %913 = vmatpush1.msra.mxu0 %v849
    %914 = vmatprep.subr.mxu0 %v854
    %915 = vmatpush1.msra.mxu0 %v853
    %916 = vmatprep.subr.mxu0 %v858
    %917 = vmatpush1.msra.mxu0 %v857
    %918 = vmatprep.subr.mxu0 %v862
    %919 = vmatpush1.msra.mxu0 %v861
    %920 = vmatprep.subr.mxu0 %v866
    %921 = vmatpush1.msra.mxu0 %v865
    %922 = vmatprep.subr.mxu0 %v870
    %923 = vmatpush1.msra.mxu0 %v869
    %924 = vmatprep.subr.mxu0 %v874
    %925 = vmatpush1.msra.mxu0 %v873
    %926 = vmatprep.subr.mxu0 %v878
    %927 = vmatpush1.msra.mxu0 %v877
    %928 = vmatprep.subr.mxu0 %v882
    %929 = vmatpush1.msra.mxu0 %v881
    %930 = vmatprep.subr.mxu0 %v886
    %931 = vmatpush1.msra.mxu0 %v885
    %932 = vmatprep.subr.mxu0 %v890
    %933 = vmatpush1.msra.mxu0 %v889
    %934 = vmatprep.subr.mxu0 %v894
    %935 = vmatpush1.msra.mxu0 %v893
    %936 = vmatprep.subr.mxu0 %v898
    %937 = vmatpush1.msra.mxu0 %v897
    %938 = vmatprep.subr.mxu0 %v902
    %939 = vmatpush1.msra.mxu0 %v901
    %940 = vmatprep.subr.mxu0 0.0
    %941 = vmatpush1.msra.mxu0 0.0
    %942 = vmatprep.subr.mxu0 0.0
    %943 = vmatpush1.msra.mxu0 0.0
    %944 = vmatprep.subr.mxu0 0.0
    %945 = vmatpush1.msra.mxu0 0.0
    %946 = vmatprep.subr.mxu0 0.0
    %947 = vmatpush1.msra.mxu0 0.0
    %948 = vmatprep.subr.mxu0 0.0
    %949 = vmatpush1.msra.mxu0 0.0
    %950 = vmatprep.subr.mxu0 0.0
    %951 = vmatpush1.msra.mxu0 0.0
    %952 = vmatprep.subr.mxu0 0.0
    %953 = vmatpush1.msra.mxu0 0.0
    %954 = vmatprep.subr.mxu0 0.0
    %955 = vmatpush1.msra.mxu0 0.0
    %956 = vmatprep.subr.mxu0 0.0
    %957 = vmatpush1.msra.mxu0 0.0
    %958 = vmatprep.subr.mxu0 0.0
    %959 = vmatpush1.msra.mxu0 0.0
    %960 = vmatprep.subr.mxu0 0.0
    %961 = vmatpush1.msra.mxu0 0.0
    %962 = vmatprep.subr.mxu0 0.0
    %963 = vmatpush1.msra.mxu0 0.0
    %964 = vmatprep.subr.mxu0 0.0
    %965 = vmatpush1.msra.mxu0 0.0
    %966 = vmatprep.subr.mxu0 0.0
    %967 = vmatpush1.msra.mxu0 0.0
    %968 = vmatprep.subr.mxu0 0.0
    %969 = vmatpush1.msra.mxu0 0.0
    %970 = vmatprep.subr.mxu0 0.0
    %971 = vmatpush1.msra.mxu0 0.0
    %972 = vmatprep.mubr.f32.mxu0 0.0
    %973 = vmatmul.mubr.f32.gmra.mrb[0].mxu0 %v906
    %v974 = vpop.f32.mrb[0].mxu0
    %v975 = vadd.f32 0.0, %v974
    %v976 = vpop.f32.mrb[0].mxu0
    %v977 = vadd.f32 0.0, %v976
    %978 = vdwg.mxu0
    %979 = vmatprep.subr.mxu0 %v844
    %980 = vmatpush1.msra.mxu0 %v843
    %981 = vmatprep.subr.mxu0 %v848
    %982 = vmatpush1.msra.mxu0 %v847
    %983 = vmatprep.subr.mxu0 %v852
    %984 = vmatpush1.msra.mxu0 %v851
    %985 = vmatprep.subr.mxu0 %v856
    %986 = vmatpush1.msra.mxu0 %v855
    %987 = vmatprep.subr.mxu0 %v860
    %988 = vmatpush1.msra.mxu0 %v859
    %989 = vmatprep.subr.mxu0 %v864
    %990 = vmatpush1.msra.mxu0 %v863
    %991 = vmatprep.subr.mxu0 %v868
    %992 = vmatpush1.msra.mxu0 %v867
    %993 = vmatprep.subr.mxu0 %v872
    %994 = vmatpush1.msra.mxu0 %v871
    %995 = vmatprep.subr.mxu0 %v876
    %996 = vmatpush1.msra.mxu0 %v875
    %997 = vmatprep.subr.mxu0 %v880
    %998 = vmatpush1.msra.mxu0 %v879
    %999 = vmatprep.subr.mxu0 %v884
    %1000 = vmatpush1.msra.mxu0 %v883
    %1001 = vmatprep.subr.mxu0 %v888
    %1002 = vmatpush1.msra.mxu0 %v887
    %1003 = vmatprep.subr.mxu0 %v892
    %1004 = vmatpush1.msra.mxu0 %v891
    %1005 = vmatprep.subr.mxu0 %v896
    %1006 = vmatpush1.msra.mxu0 %v895
    %1007 = vmatprep.subr.mxu0 %v900
    %1008 = vmatpush1.msra.mxu0 %v899
    %1009 = vmatprep.subr.mxu0 %v904
    %1010 = vmatpush1.msra.mxu0 %v903
    %1011 = vmatprep.subr.mxu0 0.0
    %1012 = vmatpush1.msra.mxu0 0.0
    %1013 = vmatprep.subr.mxu0 0.0
    %1014 = vmatpush1.msra.mxu0 0.0
    %1015 = vmatprep.subr.mxu0 0.0
    %1016 = vmatpush1.msra.mxu0 0.0
    %1017 = vmatprep.subr.mxu0 0.0
    %1018 = vmatpush1.msra.mxu0 0.0
    %1019 = vmatprep.subr.mxu0 0.0
    %1020 = vmatpush1.msra.mxu0 0.0
    %1021 = vmatprep.subr.mxu0 0.0
    %1022 = vmatpush1.msra.mxu0 0.0
    %1023 = vmatprep.subr.mxu0 0.0
    %1024 = vmatpush1.msra.mxu0 0.0
    %1025 = vmatprep.subr.mxu0 0.0
    %1026 = vmatpush1.msra.mxu0 0.0
    %1027 = vmatprep.subr.mxu0 0.0
    %1028 = vmatpush1.msra.mxu0 0.0
    %1029 = vmatprep.subr.mxu0 0.0
    %1030 = vmatpush1.msra.mxu0 0.0
    %1031 = vmatprep.subr.mxu0 0.0
    %1032 = vmatpush1.msra.mxu0 0.0
    %1033 = vmatprep.subr.mxu0 0.0
    %1034 = vmatpush1.msra.mxu0 0.0
    %1035 = vmatprep.subr.mxu0 0.0
    %1036 = vmatpush1.msra.mxu0 0.0
    %1037 = vmatprep.subr.mxu0 0.0
    %1038 = vmatpush1.msra.mxu0 0.0
    %1039 = vmatprep.subr.mxu0 0.0
    %1040 = vmatpush1.msra.mxu0 0.0
    %1041 = vmatprep.subr.mxu0 0.0
    %1042 = vmatpush1.msra.mxu0 0.0
    %1043 = vmatprep.mubr.f32.mxu0 0.0
    %1044 = vmatmul.mubr.f32.gmra.mrb[0].mxu0 %v906
    %v1045 = vpop.f32.mrb[0].mxu0
    %v1046 = vadd.f32 0.0, %v1045
    %v1047 = vpop.f32.mrb[0].mxu0
    %v1048 = vadd.f32 0.0, %v1047
    %1049 = vdwg.mxu0
    %v1054 = vrot.slane %v975, 4
    %v1055 = vrot.slane %v977, 4
    %v1056 = vrot.slane %v1046, 4
    %v1057 = vrot.slane %v1048, 4
    %v1062 = vadd.f32 %v837, %v1054
    %v1063 = vadd.f32 %v838, %v1055
    %v1064 = vadd.f32 %v839, %v1056
    %v1065 = vadd.f32 %v840, %v1057
    %v1066 = vxor.u32 %v1062, 2147483648
    %v1067 = vmul.f32 %v1066, 1.442695
    %v1068 = vpow.pop %v1067
    %v1069 = vadd.f32 %v1068, 1.0
    %v1070 = vrcp.pop %v1069
    %v1071 = vmul.f32 1.0, %v1070
    %v1072 = vxor.u32 %v1063, 2147483648
    %v1073 = vmul.f32 %v1072, 1.442695
    %v1074 = vpow.pop %v1073
    %v1075 = vadd.f32 %v1074, 1.0
    %v1076 = vrcp.pop %v1075
    %v1077 = vmul.f32 1.0, %v1076
    %v1078 = vtanh.pop %v1064
    %v1079 = vxor.u32 %v1065, 2147483648
    %v1080 = vmul.f32 %v1079, 1.442695
    %v1081 = vpow.pop %v1080
    %v1082 = vadd.f32 %v1081, 1.0
    %v1083 = vrcp.pop %v1082
    %v1084 = vmul.f32 1.0, %v1083
    %v1086 = vrot.slane %v833, 6
    %v1088 = vmul.f32 %v1077, %v1086
    %v1089 = vmul.f32 %v1071, %v1078
    %v1090 = vadd.f32 %v1088, %v1089
    %v1091 = vtanh.pop %v1090
    %v1092 = vmul.f32 %v1084, %v1091
    %1093 = vst [vmem:[#allocation3] sm:$0x30] %v1092
    %v1094 = vld [vmem:[#allocation2] sm:$0xc0]
    %v1095 = vld [vmem:[#allocation2 + $0x8] sm:$0xc0]
    %v1096 = vld [vmem:[#allocation2 + $0x10] sm:$0xc0]
    %v1097 = vld [vmem:[#allocation2 + $0x18] sm:$0xc0]
    %v1098 = vld [vmem:[#allocation7] sm:$0xff]
    %v1099 = vld [vmem:[#allocation7 + $0x8] sm:$0xff]
    %v1100 = vld [vmem:[#allocation7 + $0x10] sm:$0xff]
    %v1101 = vld [vmem:[#allocation7 + $0x18] sm:$0xff]
    %v1102 = vld [vmem:[#allocation7 + $0x20] sm:$0xff]
    %v1103 = vld [vmem:[#allocation7 + $0x28] sm:$0xff]
    %v1104 = vld [vmem:[#allocation7 + $0x30] sm:$0xff]
    %v1105 = vld [vmem:[#allocation7 + $0x38] sm:$0xff]
    %v1106 = vld [vmem:[#allocation7 + $0x40] sm:$0xff]
    %v1107 = vld [vmem:[#allocation7 + $0x48] sm:$0xff]
    %v1108 = vld [vmem:[#allocation7 + $0x50] sm:$0xff]
    %v1109 = vld [vmem:[#allocation7 + $0x58] sm:$0xff]
    %v1110 = vld [vmem:[#allocation7 + $0x60] sm:$0xff]
    %v1111 = vld [vmem:[#allocation7 + $0x68] sm:$0xff]
    %v1112 = vld [vmem:[#allocation7 + $0x70] sm:$0xff]
    %v1113 = vld [vmem:[#allocation7 + $0x78] sm:$0xff]
    %v1114 = vld [vmem:[#allocation7 + $0x80] sm:$0xff]
    %v1115 = vld [vmem:[#allocation7 + $0x88] sm:$0xff]
    %v1116 = vld [vmem:[#allocation7 + $0x90] sm:$0xff]
    %v1117 = vld [vmem:[#allocation7 + $0x98] sm:$0xff]
    %v1118 = vld [vmem:[#allocation7 + $0xa0] sm:$0xff]
    %v1119 = vld [vmem:[#allocation7 + $0xa8] sm:$0xff]
    %v1120 = vld [vmem:[#allocation7 + $0xb0] sm:$0xff]
    %v1121 = vld [vmem:[#allocation7 + $0xb8] sm:$0xff]
    %v1122 = vld [vmem:[#allocation7 + $0xc0] sm:$0xff]
    %v1123 = vld [vmem:[#allocation7 + $0xc8] sm:$0xff]
    %v1124 = vld [vmem:[#allocation7 + $0xd0] sm:$0xff]
    %v1125 = vld [vmem:[#allocation7 + $0xd8] sm:$0xff]
    %v1126 = vld [vmem:[#allocation7 + $0xe0] sm:$0xff]
    %v1127 = vld [vmem:[#allocation7 + $0xe8] sm:$0xff]
    %v1128 = vld [vmem:[#allocation7 + $0xf0] sm:$0xff]
    %v1129 = vld [vmem:[#allocation7 + $0xf8] sm:$0xff]
    %v1130 = vld [vmem:[#allocation7 + $0x100] sm:$0xff]
    %v1131 = vld [vmem:[#allocation7 + $0x108] sm:$0xff]
    %v1132 = vld [vmem:[#allocation7 + $0x110] sm:$0xff]
    %v1133 = vld [vmem:[#allocation7 + $0x118] sm:$0xff]
    %v1134 = vld [vmem:[#allocation7 + $0x120] sm:$0xff]
    %v1135 = vld [vmem:[#allocation7 + $0x128] sm:$0xff]
    %v1136 = vld [vmem:[#allocation7 + $0x130] sm:$0xff]
    %v1137 = vld [vmem:[#allocation7 + $0x138] sm:$0xff]
    %v1138 = vld [vmem:[#allocation7 + $0x140] sm:$0xff]
    %v1139 = vld [vmem:[#allocation7 + $0x148] sm:$0xff]
    %v1140 = vld [vmem:[#allocation7 + $0x150] sm:$0xff]
    %v1141 = vld [vmem:[#allocation7 + $0x158] sm:$0xff]
    %v1142 = vld [vmem:[#allocation7 + $0x160] sm:$0xff]
    %v1143 = vld [vmem:[#allocation7 + $0x168] sm:$0xff]
    %v1144 = vld [vmem:[#allocation7 + $0x170] sm:$0xff]
    %v1145 = vld [vmem:[#allocation7 + $0x178] sm:$0xff]
    %v1146 = vld [vmem:[#allocation7 + $0x180] sm:$0xff]
    %v1147 = vld [vmem:[#allocation7 + $0x188] sm:$0xff]
    %v1148 = vld [vmem:[#allocation7 + $0x190] sm:$0xff]
    %v1149 = vld [vmem:[#allocation7 + $0x198] sm:$0xff]
    %v1150 = vld [vmem:[#allocation7 + $0x1a0] sm:$0xff]
    %v1151 = vld [vmem:[#allocation7 + $0x1a8] sm:$0xff]
    %v1152 = vld [vmem:[#allocation7 + $0x1b0] sm:$0xff]
    %v1153 = vld [vmem:[#allocation7 + $0x1b8] sm:$0xff]
    %v1154 = vld [vmem:[#allocation7 + $0x1c0] sm:$0xff]
    %v1155 = vld [vmem:[#allocation7 + $0x1c8] sm:$0xff]
    %v1156 = vld [vmem:[#allocation7 + $0x1d0] sm:$0xff]
    %v1157 = vld [vmem:[#allocation7 + $0x1d8] sm:$0xff]
    %v1158 = vld [vmem:[#allocation7 + $0x1e0] sm:$0xff]
    %v1159 = vld [vmem:[#allocation7 + $0x1e8] sm:$0xff]
    %v1160 = vld [vmem:[#allocation7 + $0x1f0] sm:$0xff]
    %v1161 = vld [vmem:[#allocation7 + $0x1f8] sm:$0xff]
    %v1163 = vrot.slane %v1092, 4
    %1165 = vmatprep.subr.mxu0 %v1099
    %1166 = vmatpush1.msra.mxu0 %v1098
    %1167 = vmatprep.subr.mxu0 %v1103
    %1168 = vmatpush1.msra.mxu0 %v1102
    %1169 = vmatprep.subr.mxu0 %v1107
    %1170 = vmatpush1.msra.mxu0 %v1106
    %1171 = vmatprep.subr.mxu0 %v1111
    %1172 = vmatpush1.msra.mxu0 %v1110
    %1173 = vmatprep.subr.mxu0 %v1115
    %1174 = vmatpush1.msra.mxu0 %v1114
    %1175 = vmatprep.subr.mxu0 %v1119
    %1176 = vmatpush1.msra.mxu0 %v1118
    %1177 = vmatprep.subr.mxu0 %v1123
    %1178 = vmatpush1.msra.mxu0 %v1122
    %1179 = vmatprep.subr.mxu0 %v1127
    %1180 = vmatpush1.msra.mxu0 %v1126
    %1181 = vmatprep.subr.mxu0 %v1131
    %1182 = vmatpush1.msra.mxu0 %v1130
    %1183 = vmatprep.subr.mxu0 %v1135
    %1184 = vmatpush1.msra.mxu0 %v1134
    %1185 = vmatprep.subr.mxu0 %v1139
    %1186 = vmatpush1.msra.mxu0 %v1138
    %1187 = vmatprep.subr.mxu0 %v1143
    %1188 = vmatpush1.msra.mxu0 %v1142
    %1189 = vmatprep.subr.mxu0 %v1147
    %1190 = vmatpush1.msra.mxu0 %v1146
    %1191 = vmatprep.subr.mxu0 %v1151
    %1192 = vmatpush1.msra.mxu0 %v1150
    %1193 = vmatprep.subr.mxu0 %v1155
    %1194 = vmatpush1.msra.mxu0 %v1154
    %1195 = vmatprep.subr.mxu0 %v1159
    %1196 = vmatpush1.msra.mxu0 %v1158
    %1197 = vmatprep.subr.mxu0 0.0
    %1198 = vmatpush1.msra.mxu0 0.0
    %1199 = vmatprep.subr.mxu0 0.0
    %1200 = vmatpush1.msra.mxu0 0.0
    %1201 = vmatprep.subr.mxu0 0.0
    %1202 = vmatpush1.msra.mxu0 0.0
    %1203 = vmatprep.subr.mxu0 0.0
    %1204 = vmatpush1.msra.mxu0 0.0
    %1205 = vmatprep.subr.mxu0 0.0
    %1206 = vmatpush1.msra.mxu0 0.0
    %1207 = vmatprep.subr.mxu0 0.0
    %1208 = vmatpush1.msra.mxu0 0.0
    %1209 = vmatprep.subr.mxu0 0.0
    %1210 = vmatpush1.msra.mxu0 0.0
    %1211 = vmatprep.subr.mxu0 0.0
    %1212 = vmatpush1.msra.mxu0 0.0
    %1213 = vmatprep.subr.mxu0 0.0
    %1214 = vmatpush1.msra.mxu0 0.0
    %1215 = vmatprep.subr.mxu0 0.0
    %1216 = vmatpush1.msra.mxu0 0.0
    %1217 = vmatprep.subr.mxu0 0.0
    %1218 = vmatpush1.msra.mxu0 0.0
    %1219 = vmatprep.subr.mxu0 0.0
    %1220 = vmatpush1.msra.mxu0 0.0
    %1221 = vmatprep.subr.mxu0 0.0
    %1222 = vmatpush1.msra.mxu0 0.0
    %1223 = vmatprep.subr.mxu0 0.0
    %1224 = vmatpush1.msra.mxu0 0.0
    %1225 = vmatprep.subr.mxu0 0.0
    %1226 = vmatpush1.msra.mxu0 0.0
    %1227 = vmatprep.subr.mxu0 0.0
    %1228 = vmatpush1.msra.mxu0 0.0
    %1229 = vmatprep.mubr.f32.mxu0 0.0
    %1230 = vmatmul.mubr.f32.gmra.mrb[0].mxu0 %v1163
    %v1231 = vpop.f32.mrb[0].mxu0
    %v1232 = vadd.f32 0.0, %v1231
    %v1233 = vpop.f32.mrb[0].mxu0
    %v1234 = vadd.f32 0.0, %v1233
    %1235 = vdwg.mxu0
    %1236 = vmatprep.subr.mxu0 %v1101
    %1237 = vmatpush1.msra.mxu0 %v1100
    %1238 = vmatprep.subr.mxu0 %v1105
    %1239 = vmatpush1.msra.mxu0 %v1104
    %1240 = vmatprep.subr.mxu0 %v1109
    %1241 = vmatpush1.msra.mxu0 %v1108
    %1242 = vmatprep.subr.mxu0 %v1113
    %1243 = vmatpush1.msra.mxu0 %v1112
    %1244 = vmatprep.subr.mxu0 %v1117
    %1245 = vmatpush1.msra.mxu0 %v1116
    %1246 = vmatprep.subr.mxu0 %v1121
    %1247 = vmatpush1.msra.mxu0 %v1120
    %1248 = vmatprep.subr.mxu0 %v1125
    %1249 = vmatpush1.msra.mxu0 %v1124
    %1250 = vmatprep.subr.mxu0 %v1129
    %1251 = vmatpush1.msra.mxu0 %v1128
    %1252 = vmatprep.subr.mxu0 %v1133
    %1253 = vmatpush1.msra.mxu0 %v1132
    %1254 = vmatprep.subr.mxu0 %v1137
    %1255 = vmatpush1.msra.mxu0 %v1136
    %1256 = vmatprep.subr.mxu0 %v1141
    %1257 = vmatpush1.msra.mxu0 %v1140
    %1258 = vmatprep.subr.mxu0 %v1145
    %1259 = vmatpush1.msra.mxu0 %v1144
    %1260 = vmatprep.subr.mxu0 %v1149
    %1261 = vmatpush1.msra.mxu0 %v1148
    %1262 = vmatprep.subr.mxu0 %v1153
    %1263 = vmatpush1.msra.mxu0 %v1152
    %1264 = vmatprep.subr.mxu0 %v1157
    %1265 = vmatpush1.msra.mxu0 %v1156
    %1266 = vmatprep.subr.mxu0 %v1161
    %1267 = vmatpush1.msra.mxu0 %v1160
    %1268 = vmatprep.subr.mxu0 0.0
    %1269 = vmatpush1.msra.mxu0 0.0
    %1270 = vmatprep.subr.mxu0 0.0
    %1271 = vmatpush1.msra.mxu0 0.0
    %1272 = vmatprep.subr.mxu0 0.0
    %1273 = vmatpush1.msra.mxu0 0.0
    %1274 = vmatprep.subr.mxu0 0.0
    %1275 = vmatpush1.msra.mxu0 0.0
    %1276 = vmatprep.subr.mxu0 0.0
    %1277 = vmatpush1.msra.mxu0 0.0
    %1278 = vmatprep.subr.mxu0 0.0
    %1279 = vmatpush1.msra.mxu0 0.0
    %1280 = vmatprep.subr.mxu0 0.0
    %1281 = vmatpush1.msra.mxu0 0.0
    %1282 = vmatprep.subr.mxu0 0.0
    %1283 = vmatpush1.msra.mxu0 0.0
    %1284 = vmatprep.subr.mxu0 0.0
    %1285 = vmatpush1.msra.mxu0 0.0
    %1286 = vmatprep.subr.mxu0 0.0
    %1287 = vmatpush1.msra.mxu0 0.0
    %1288 = vmatprep.subr.mxu0 0.0
    %1289 = vmatpush1.msra.mxu0 0.0
    %1290 = vmatprep.subr.mxu0 0.0
    %1291 = vmatpush1.msra.mxu0 0.0
    %1292 = vmatprep.subr.mxu0 0.0
    %1293 = vmatpush1.msra.mxu0 0.0
    %1294 = vmatprep.subr.mxu0 0.0
    %1295 = vmatpush1.msra.mxu0 0.0
    %1296 = vmatprep.subr.mxu0 0.0
    %1297 = vmatpush1.msra.mxu0 0.0
    %1298 = vmatprep.subr.mxu0 0.0
    %1299 = vmatpush1.msra.mxu0 0.0
    %1300 = vmatprep.mubr.f32.mxu0 0.0
    %1301 = vmatmul.mubr.f32.gmra.mrb[0].mxu0 %v1163
    %v1302 = vpop.f32.mrb[0].mxu0
    %v1303 = vadd.f32 0.0, %v1302
    %v1304 = vpop.f32.mrb[0].mxu0
    %v1305 = vadd.f32 0.0, %v1304
    %1306 = vdwg.mxu0
    %v1311 = vrot.slane %v1232, 2
    %v1312 = vrot.slane %v1234, 2
    %v1313 = vrot.slane %v1303, 2
    %v1314 = vrot.slane %v1305, 2
    %v1319 = vadd.f32 %v1094, %v1311
    %v1320 = vadd.f32 %v1095, %v1312
    %v1321 = vadd.f32 %v1096, %v1313
    %v1322 = vadd.f32 %v1097, %v1314
    %v1323 = vxor.u32 %v1319, 2147483648
    %v1324 = vmul.f32 %v1323, 1.442695
    %v1325 = vpow.pop %v1324
    %v1326 = vadd.f32 %v1325, 1.0
    %v1327 = vrcp.pop %v1326
    %v1328 = vmul.f32 1.0, %v1327
    %v1329 = vxor.u32 %v1320, 2147483648
    %v1330 = vmul.f32 %v1329, 1.442695
    %v1331 = vpow.pop %v1330
    %v1332 = vadd.f32 %v1331, 1.0
    %v1333 = vrcp.pop %v1332
    %v1334 = vmul.f32 1.0, %v1333
    %v1335 = vtanh.pop %v1321
    %v1336 = vxor.u32 %v1322, 2147483648
    %v1337 = vmul.f32 %v1336, 1.442695
    %v1338 = vpow.pop %v1337
    %v1339 = vadd.f32 %v1338, 1.0
    %v1340 = vrcp.pop %v1339
    %v1341 = vmul.f32 1.0, %v1340
    %v1343 = vrot.slane %v1090, 6
    %v1345 = vmul.f32 %v1334, %v1343
    %v1346 = vmul.f32 %v1328, %v1335
    %v1347 = vadd.f32 %v1345, %v1346
    %v1348 = vtanh.pop %v1347
    %v1349 = vmul.f32 %v1341, %v1348
    %1350 = vst [vmem:[#allocation3] sm:$0xc0] %v1349
    %v1351 = vld [vmem:[#allocation2 + $0x20] sm:$0x3]
    %v1352 = vld [vmem:[#allocation2 + $0x28] sm:$0x3]
    %v1353 = vld [vmem:[#allocation2 + $0x30] sm:$0x3]
    %v1354 = vld [vmem:[#allocation2 + $0x38] sm:$0x3]
    %v1355 = vld [vmem:[#allocation7] sm:$0xff]
    %v1356 = vld [vmem:[#allocation7 + $0x8] sm:$0xff]
    %v1357 = vld [vmem:[#allocation7 + $0x10] sm:$0xff]
    %v1358 = vld [vmem:[#allocation7 + $0x18] sm:$0xff]
    %v1359 = vld [vmem:[#allocation7 + $0x20] sm:$0xff]
    %v1360 = vld [vmem:[#allocation7 + $0x28] sm:$0xff]
    %v1361 = vld [vmem:[#allocation7 + $0x30] sm:$0xff]
    %v1362 = vld [vmem:[#allocation7 + $0x38] sm:$0xff]
    %v1363 = vld [vmem:[#allocation7 + $0x40] sm:$0xff]
    %v1364 = vld [vmem:[#allocation7 + $0x48] sm:$0xff]
    %v1365 = vld [vmem:[#allocation7 + $0x50] sm:$0xff]
    %v1366 = vld [vmem:[#allocation7 + $0x58] sm:$0xff]
    %v1367 = vld [vmem:[#allocation7 + $0x60] sm:$0xff]
    %v1368 = vld [vmem:[#allocation7 + $0x68] sm:$0xff]
    %v1369 = vld [vmem:[#allocation7 + $0x70] sm:$0xff]
    %v1370 = vld [vmem:[#allocation7 + $0x78] sm:$0xff]
    %v1371 = vld [vmem:[#allocation7 + $0x80] sm:$0xff]
    %v1372 = vld [vmem:[#allocation7 + $0x88] sm:$0xff]
    %v1373 = vld [vmem:[#allocation7 + $0x90] sm:$0xff]
    %v1374 = vld [vmem:[#allocation7 + $0x98] sm:$0xff]
    %v1375 = vld [vmem:[#allocation7 + $0xa0] sm:$0xff]
    %v1376 = vld [vmem:[#allocation7 + $0xa8] sm:$0xff]
    %v1377 = vld [vmem:[#allocation7 + $0xb0] sm:$0xff]
    %v1378 = vld [vmem:[#allocation7 + $0xb8] sm:$0xff]
    %v1379 = vld [vmem:[#allocation7 + $0xc0] sm:$0xff]
    %v1380 = vld [vmem:[#allocation7 + $0xc8] sm:$0xff]
    %v1381 = vld [vmem:[#allocation7 + $0xd0] sm:$0xff]
    %v1382 = vld [vmem:[#allocation7 + $0xd8] sm:$0xff]
    %v1383 = vld [vmem:[#allocation7 + $0xe0] sm:$0xff]
    %v1384 = vld [vmem:[#allocation7 + $0xe8] sm:$0xff]
    %v1385 = vld [vmem:[#allocation7 + $0xf0] sm:$0xff]
    %v1386 = vld [vmem:[#allocation7 + $0xf8] sm:$0xff]
    %v1387 = vld [vmem:[#allocation7 + $0x100] sm:$0xff]
    %v1388 = vld [vmem:[#allocation7 + $0x108] sm:$0xff]
    %v1389 = vld [vmem:[#allocation7 + $0x110] sm:$0xff]
    %v1390 = vld [vmem:[#allocation7 + $0x118] sm:$0xff]
    %v1391 = vld [vmem:[#allocation7 + $0x120] sm:$0xff]
    %v1392 = vld [vmem:[#allocation7 + $0x128] sm:$0xff]
    %v1393 = vld [vmem:[#allocation7 + $0x130] sm:$0xff]
    %v1394 = vld [vmem:[#allocation7 + $0x138] sm:$0xff]
    %v1395 = vld [vmem:[#allocation7 + $0x140] sm:$0xff]
    %v1396 = vld [vmem:[#allocation7 + $0x148] sm:$0xff]
    %v1397 = vld [vmem:[#allocation7 + $0x150] sm:$0xff]
    %v1398 = vld [vmem:[#allocation7 + $0x158] sm:$0xff]
    %v1399 = vld [vmem:[#allocation7 + $0x160] sm:$0xff]
    %v1400 = vld [vmem:[#allocation7 + $0x168] sm:$0xff]
    %v1401 = vld [vmem:[#allocation7 + $0x170] sm:$0xff]
    %v1402 = vld [vmem:[#allocation7 + $0x178] sm:$0xff]
    %v1403 = vld [vmem:[#allocation7 + $0x180] sm:$0xff]
    %v1404 = vld [vmem:[#allocation7 + $0x188] sm:$0xff]
    %v1405 = vld [vmem:[#allocation7 + $0x190] sm:$0xff]
    %v1406 = vld [vmem:[#allocation7 + $0x198] sm:$0xff]
    %v1407 = vld [vmem:[#allocation7 + $0x1a0] sm:$0xff]
    %v1408 = vld [vmem:[#allocation7 + $0x1a8] sm:$0xff]
    %v1409 = vld [vmem:[#allocation7 + $0x1b0] sm:$0xff]
    %v1410 = vld [vmem:[#allocation7 + $0x1b8] sm:$0xff]
    %v1411 = vld [vmem:[#allocation7 + $0x1c0] sm:$0xff]
    %v1412 = vld [vmem:[#allocation7 + $0x1c8] sm:$0xff]
    %v1413 = vld [vmem:[#allocation7 + $0x1d0] sm:$0xff]
    %v1414 = vld [vmem:[#allocation7 + $0x1d8] sm:$0xff]
    %v1415 = vld [vmem:[#allocation7 + $0x1e0] sm:$0xff]
    %v1416 = vld [vmem:[#allocation7 + $0x1e8] sm:$0xff]
    %v1417 = vld [vmem:[#allocation7 + $0x1f0] sm:$0xff]
    %v1418 = vld [vmem:[#allocation7 + $0x1f8] sm:$0xff]
    %v1420 = vrot.slane %v1349, 6
    %1422 = vmatprep.subr.mxu0 %v1356
    %1423 = vmatpush1.msra.mxu0 %v1355
    %1424 = vmatprep.subr.mxu0 %v1360
    %1425 = vmatpush1.msra.mxu0 %v1359
    %1426 = vmatprep.subr.mxu0 %v1364
    %1427 = vmatpush1.msra.mxu0 %v1363
    %1428 = vmatprep.subr.mxu0 %v1368
    %1429 = vmatpush1.msra.mxu0 %v1367
    %1430 = vmatprep.subr.mxu0 %v1372
    %1431 = vmatpush1.msra.mxu0 %v1371
    %1432 = vmatprep.subr.mxu0 %v1376
    %1433 = vmatpush1.msra.mxu0 %v1375
    %1434 = vmatprep.subr.mxu0 %v1380
    %1435 = vmatpush1.msra.mxu0 %v1379
    %1436 = vmatprep.subr.mxu0 %v1384
    %1437 = vmatpush1.msra.mxu0 %v1383
    %1438 = vmatprep.subr.mxu0 %v1388
    %1439 = vmatpush1.msra.mxu0 %v1387
    %1440 = vmatprep.subr.mxu0 %v1392
    %1441 = vmatpush1.msra.mxu0 %v1391
    %1442 = vmatprep.subr.mxu0 %v1396
    %1443 = vmatpush1.msra.mxu0 %v1395
    %1444 = vmatprep.subr.mxu0 %v1400
    %1445 = vmatpush1.msra.mxu0 %v1399
    %1446 = vmatprep.subr.mxu0 %v1404
    %1447 = vmatpush1.msra.mxu0 %v1403
    %1448 = vmatprep.subr.mxu0 %v1408
    %1449 = vmatpush1.msra.mxu0 %v1407
    %1450 = vmatprep.subr.mxu0 %v1412
    %1451 = vmatpush1.msra.mxu0 %v1411
    %1452 = vmatprep.subr.mxu0 %v1416
    %1453 = vmatpush1.msra.mxu0 %v1415
    %1454 = vmatprep.subr.mxu0 0.0
    %1455 = vmatpush1.msra.mxu0 0.0
    %1456 = vmatprep.subr.mxu0 0.0
    %1457 = vmatpush1.msra.mxu0 0.0
    %1458 = vmatprep.subr.mxu0 0.0
    %1459 = vmatpush1.msra.mxu0 0.0
    %1460 = vmatprep.subr.mxu0 0.0
    %1461 = vmatpush1.msra.mxu0 0.0
    %1462 = vmatprep.subr.mxu0 0.0
    %1463 = vmatpush1.msra.mxu0 0.0
    %1464 = vmatprep.subr.mxu0 0.0
    %1465 = vmatpush1.msra.mxu0 0.0
    %1466 = vmatprep.subr.mxu0 0.0
    %1467 = vmatpush1.msra.mxu0 0.0
    %1468 = vmatprep.subr.mxu0 0.0
    %1469 = vmatpush1.msra.mxu0 0.0
    %1470 = vmatprep.subr.mxu0 0.0
    %1471 = vmatpush1.msra.mxu0 0.0
    %1472 = vmatprep.subr.mxu0 0.0
    %1473 = vmatpush1.msra.mxu0 0.0
    %1474 = vmatprep.subr.mxu0 0.0
    %1475 = vmatpush1.msra.mxu0 0.0
    %1476 = vmatprep.subr.mxu0 0.0
    %1477 = vmatpush1.msra.mxu0 0.0
    %1478 = vmatprep.subr.mxu0 0.0
    %1479 = vmatpush1.msra.mxu0 0.0
    %1480 = vmatprep.subr.mxu0 0.0
    %1481 = vmatpush1.msra.mxu0 0.0
    %1482 = vmatprep.subr.mxu0 0.0
    %1483 = vmatpush1.msra.mxu0 0.0
    %1484 = vmatprep.subr.mxu0 0.0
    %1485 = vmatpush1.msra.mxu0 0.0
    %1486 = vmatprep.mubr.f32.mxu0 0.0
    %1487 = vmatmul.mubr.f32.gmra.mrb[0].mxu0 %v1420
    %v1488 = vpop.f32.mrb[0].mxu0
    %v1489 = vadd.f32 0.0, %v1488
    %v1490 = vpop.f32.mrb[0].mxu0
    %v1491 = vadd.f32 0.0, %v1490
    %1492 = vdwg.mxu0
    %1493 = vmatprep.subr.mxu0 %v1358
    %1494 = vmatpush1.msra.mxu0 %v1357
    %1495 = vmatprep.subr.mxu0 %v1362
    %1496 = vmatpush1.msra.mxu0 %v1361
    %1497 = vmatprep.subr.mxu0 %v1366
    %1498 = vmatpush1.msra.mxu0 %v1365
    %1499 = vmatprep.subr.mxu0 %v1370
    %1500 = vmatpush1.msra.mxu0 %v1369
    %1501 = vmatprep.subr.mxu0 %v1374
    %1502 = vmatpush1.msra.mxu0 %v1373
    %1503 = vmatprep.subr.mxu0 %v1378
    %1504 = vmatpush1.msra.mxu0 %v1377
    %1505 = vmatprep.subr.mxu0 %v1382
    %1506 = vmatpush1.msra.mxu0 %v1381
    %1507 = vmatprep.subr.mxu0 %v1386
    %1508 = vmatpush1.msra.mxu0 %v1385
    %1509 = vmatprep.subr.mxu0 %v1390
    %1510 = vmatpush1.msra.mxu0 %v1389
    %1511 = vmatprep.subr.mxu0 %v1394
    %1512 = vmatpush1.msra.mxu0 %v1393
    %1513 = vmatprep.subr.mxu0 %v1398
    %1514 = vmatpush1.msra.mxu0 %v1397
    %1515 = vmatprep.subr.mxu0 %v1402
    %1516 = vmatpush1.msra.mxu0 %v1401
    %1517 = vmatprep.subr.mxu0 %v1406
    %1518 = vmatpush1.msra.mxu0 %v1405
    %1519 = vmatprep.subr.mxu0 %v1410
    %1520 = vmatpush1.msra.mxu0 %v1409
    %1521 = vmatprep.subr.mxu0 %v1414
    %1522 = vmatpush1.msra.mxu0 %v1413
    %1523 = vmatprep.subr.mxu0 %v1418
    %1524 = vmatpush1.msra.mxu0 %v1417
    %1525 = vmatprep.subr.mxu0 0.0
    %1526 = vmatpush1.msra.mxu0 0.0
    %1527 = vmatprep.subr.mxu0 0.0
    %1528 = vmatpush1.msra.mxu0 0.0
    %1529 = vmatprep.subr.mxu0 0.0
    %1530 = vmatpush1.msra.mxu0 0.0
    %1531 = vmatprep.subr.mxu0 0.0
    %1532 = vmatpush1.msra.mxu0 0.0
    %1533 = vmatprep.subr.mxu0 0.0
    %1534 = vmatpush1.msra.mxu0 0.0
    %1535 = vmatprep.subr.mxu0 0.0
    %1536 = vmatpush1.msra.mxu0 0.0
    %1537 = vmatprep.subr.mxu0 0.0
    %1538 = vmatpush1.msra.mxu0 0.0
    %1539 = vmatprep.subr.mxu0 0.0
    %1540 = vmatpush1.msra.mxu0 0.0
    %1541 = vmatprep.subr.mxu0 0.0
    %1542 = vmatpush1.msra.mxu0 0.0
    %1543 = vmatprep.subr.mxu0 0.0
    %1544 = vmatpush1.msra.mxu0 0.0
    %1545 = vmatprep.subr.mxu0 0.0
    %1546 = vmatpush1.msra.mxu0 0.0
    %1547 = vmatprep.subr.mxu0 0.0
    %1548 = vmatpush1.msra.mxu0 0.0
    %1549 = vmatprep.subr.mxu0 0.0
    %1550 = vmatpush1.msra.mxu0 0.0
    %1551 = vmatprep.subr.mxu0 0.0
    %1552 = vmatpush1.msra.mxu0 0.0
    %1553 = vmatprep.subr.mxu0 0.0
    %1554 = vmatpush1.msra.mxu0 0.0
    %1555 = vmatprep.subr.mxu0 0.0
    %1556 = vmatpush1.msra.mxu0 0.0
    %1557 = vmatprep.mubr.f32.mxu0 0.0
    %1558 = vmatmul.mubr.f32.gmra.mrb[0].mxu0 %v1420
    %v1559 = vpop.f32.mrb[0].mxu0
    %v1560 = vadd.f32 0.0, %v1559
    %v1561 = vpop.f32.mrb[0].mxu0
    %v1562 = vadd.f32 0.0, %v1561
    %1563 = vdwg.mxu0
    %v1564 = vadd.f32 %v1351, %v1489
    %v1565 = vadd.f32 %v1352, %v1491
    %v1566 = vadd.f32 %v1353, %v1560
    %v1567 = vadd.f32 %v1354, %v1562
    %v1568 = vxor.u32 %v1564, 2147483648
    %v1569 = vmul.f32 %v1568, 1.442695
    %v1570 = vpow.pop %v1569
    %v1571 = vadd.f32 %v1570, 1.0
    %v1572 = vrcp.pop %v1571
    %v1573 = vmul.f32 1.0, %v1572
    %v1574 = vxor.u32 %v1565, 2147483648
    %v1575 = vmul.f32 %v1574, 1.442695
    %v1576 = vpow.pop %v1575
    %v1577 = vadd.f32 %v1576, 1.0
    %v1578 = vrcp.pop %v1577
    %v1579 = vmul.f32 1.0, %v1578
    %v1580 = vtanh.pop %v1566
    %v1581 = vxor.u32 %v1567, 2147483648
    %v1582 = vmul.f32 %v1581, 1.442695
    %v1583 = vpow.pop %v1582
    %v1584 = vadd.f32 %v1583, 1.0
    %v1585 = vrcp.pop %v1584
    %v1586 = vmul.f32 1.0, %v1585
    %v1588 = vrot.slane %v1347, 6
    %v1590 = vmul.f32 %v1579, %v1588
    %v1591 = vmul.f32 %v1573, %v1580
    %v1592 = vadd.f32 %v1590, %v1591
    %v1593 = vtanh.pop %v1592
    %v1594 = vmul.f32 %v1586, %v1593
    %1595 = vst [vmem:[#allocation3 + $0x8] sm:$0x3] %v1594
    %v1596 = vld [vmem:[#allocation2 + $0x20] sm:$0xc]
    %v1597 = vld [vmem:[#allocation2 + $0x28] sm:$0xc]
    %v1598 = vld [vmem:[#allocation2 + $0x30] sm:$0xc]
    %v1599 = vld [vmem:[#allocation2 + $0x38] sm:$0xc]
    %v1600 = vld [vmem:[#allocation7] sm:$0xff]
    %v1601 = vld [vmem:[#allocation7 + $0x8] sm:$0xff]
    %v1602 = vld [vmem:[#allocation7 + $0x10] sm:$0xff]
    %v1603 = vld [vmem:[#allocation7 + $0x18] sm:$0xff]
    %v1604 = vld [vmem:[#allocation7 + $0x20] sm:$0xff]
    %v1605 = vld [vmem:[#allocation7 + $0x28] sm:$0xff]
    %v1606 = vld [vmem:[#allocation7 + $0x30] sm:$0xff]
    %v1607 = vld [vmem:[#allocation7 + $0x38] sm:$0xff]
    %v1608 = vld [vmem:[#allocation7 + $0x40] sm:$0xff]
    %v1609 = vld [vmem:[#allocation7 + $0x48] sm:$0xff]
    %v1610 = vld [vmem:[#allocation7 + $0x50] sm:$0xff]
    %v1611 = vld [vmem:[#allocation7 + $0x58] sm:$0xff]
    %v1612 = vld [vmem:[#allocation7 + $0x60] sm:$0xff]
    %v1613 = vld [vmem:[#allocation7 + $0x68] sm:$0xff]
    %v1614 = vld [vmem:[#allocation7 + $0x70] sm:$0xff]
    %v1615 = vld [vmem:[#allocation7 + $0x78] sm:$0xff]
    %v1616 = vld [vmem:[#allocation7 + $0x80] sm:$0xff]
    %v1617 = vld [vmem:[#allocation7 + $0x88] sm:$0xff]
    %v1618 = vld [vmem:[#allocation7 + $0x90] sm:$0xff]
    %v1619 = vld [vmem:[#allocation7 + $0x98] sm:$0xff]
    %v1620 = vld [vmem:[#allocation7 + $0xa0] sm:$0xff]
    %v1621 = vld [vmem:[#allocation7 + $0xa8] sm:$0xff]
    %v1622 = vld [vmem:[#allocation7 + $0xb0] sm:$0xff]
    %v1623 = vld [vmem:[#allocation7 + $0xb8] sm:$0xff]
    %v1624 = vld [vmem:[#allocation7 + $0xc0] sm:$0xff]
    %v1625 = vld [vmem:[#allocation7 + $0xc8] sm:$0xff]
    %v1626 = vld [vmem:[#allocation7 + $0xd0] sm:$0xff]
    %v1627 = vld [vmem:[#allocation7 + $0xd8] sm:$0xff]
    %v1628 = vld [vmem:[#allocation7 + $0xe0] sm:$0xff]
    %v1629 = vld [vmem:[#allocation7 + $0xe8] sm:$0xff]
    %v1630 = vld [vmem:[#allocation7 + $0xf0] sm:$0xff]
    %v1631 = vld [vmem:[#allocation7 + $0xf8] sm:$0xff]
    %v1632 = vld [vmem:[#allocation7 + $0x100] sm:$0xff]
    %v1633 = vld [vmem:[#allocation7 + $0x108] sm:$0xff]
    %v1634 = vld [vmem:[#allocation7 + $0x110] sm:$0xff]
    %v1635 = vld [vmem:[#allocation7 + $0x118] sm:$0xff]
    %v1636 = vld [vmem:[#allocation7 + $0x120] sm:$0xff]
    %v1637 = vld [vmem:[#allocation7 + $0x128] sm:$0xff]
    %v1638 = vld [vmem:[#allocation7 + $0x130] sm:$0xff]
    %v1639 = vld [vmem:[#allocation7 + $0x138] sm:$0xff]
    %v1640 = vld [vmem:[#allocation7 + $0x140] sm:$0xff]
    %v1641 = vld [vmem:[#allocation7 + $0x148] sm:$0xff]
    %v1642 = vld [vmem:[#allocation7 + $0x150] sm:$0xff]
    %v1643 = vld [vmem:[#allocation7 + $0x158] sm:$0xff]
    %v1644 = vld [vmem:[#allocation7 + $0x160] sm:$0xff]
    %v1645 = vld [vmem:[#allocation7 + $0x168] sm:$0xff]
    %v1646 = vld [vmem:[#allocation7 + $0x170] sm:$0xff]
    %v1647 = vld [vmem:[#allocation7 + $0x178] sm:$0xff]
    %v1648 = vld [vmem:[#allocation7 + $0x180] sm:$0xff]
    %v1649 = vld [vmem:[#allocation7 + $0x188] sm:$0xff]
    %v1650 = vld [vmem:[#allocation7 + $0x190] sm:$0xff]
    %v1651 = vld [vmem:[#allocation7 + $0x198] sm:$0xff]
    %v1652 = vld [vmem:[#allocation7 + $0x1a0] sm:$0xff]
    %v1653 = vld [vmem:[#allocation7 + $0x1a8] sm:$0xff]
    %v1654 = vld [vmem:[#allocation7 + $0x1b0] sm:$0xff]
    %v1655 = vld [vmem:[#allocation7 + $0x1b8] sm:$0xff]
    %v1656 = vld [vmem:[#allocation7 + $0x1c0] sm:$0xff]
    %v1657 = vld [vmem:[#allocation7 + $0x1c8] sm:$0xff]
    %v1658 = vld [vmem:[#allocation7 + $0x1d0] sm:$0xff]
    %v1659 = vld [vmem:[#allocation7 + $0x1d8] sm:$0xff]
    %v1660 = vld [vmem:[#allocation7 + $0x1e0] sm:$0xff]
    %v1661 = vld [vmem:[#allocation7 + $0x1e8] sm:$0xff]
    %v1662 = vld [vmem:[#allocation7 + $0x1f0] sm:$0xff]
    %v1663 = vld [vmem:[#allocation7 + $0x1f8] sm:$0xff]
    %1664 = vmatprep.subr.mxu0 %v1601
    %1665 = vmatpush1.msra.mxu0 %v1600
    %1666 = vmatprep.subr.mxu0 %v1605
    %1667 = vmatpush1.msra.mxu0 %v1604
    %1668 = vmatprep.subr.mxu0 %v1609
    %1669 = vmatpush1.msra.mxu0 %v1608
    %1670 = vmatprep.subr.mxu0 %v1613
    %1671 = vmatpush1.msra.mxu0 %v1612
    %1672 = vmatprep.subr.mxu0 %v1617
    %1673 = vmatpush1.msra.mxu0 %v1616
    %1674 = vmatprep.subr.mxu0 %v1621
    %1675 = vmatpush1.msra.mxu0 %v1620
    %1676 = vmatprep.subr.mxu0 %v1625
    %1677 = vmatpush1.msra.mxu0 %v1624
    %1678 = vmatprep.subr.mxu0 %v1629
    %1679 = vmatpush1.msra.mxu0 %v1628
    %1680 = vmatprep.subr.mxu0 %v1633
    %1681 = vmatpush1.msra.mxu0 %v1632
    %1682 = vmatprep.subr.mxu0 %v1637
    %1683 = vmatpush1.msra.mxu0 %v1636
    %1684 = vmatprep.subr.mxu0 %v1641
    %1685 = vmatpush1.msra.mxu0 %v1640
    %1686 = vmatprep.subr.mxu0 %v1645
    %1687 = vmatpush1.msra.mxu0 %v1644
    %1688 = vmatprep.subr.mxu0 %v1649
    %1689 = vmatpush1.msra.mxu0 %v1648
    %1690 = vmatprep.subr.mxu0 %v1653
    %1691 = vmatpush1.msra.mxu0 %v1652
    %1692 = vmatprep.subr.mxu0 %v1657
    %1693 = vmatpush1.msra.mxu0 %v1656
    %1694 = vmatprep.subr.mxu0 %v1661
    %1695 = vmatpush1.msra.mxu0 %v1660
    %1696 = vmatprep.subr.mxu0 0.0
    %1697 = vmatpush1.msra.mxu0 0.0
    %1698 = vmatprep.subr.mxu0 0.0
    %1699 = vmatpush1.msra.mxu0 0.0
    %1700 = vmatprep.subr.mxu0 0.0
    %1701 = vmatpush1.msra.mxu0 0.0
    %1702 = vmatprep.subr.mxu0 0.0
    %1703 = vmatpush1.msra.mxu0 0.0
    %1704 = vmatprep.subr.mxu0 0.0
    %1705 = vmatpush1.msra.mxu0 0.0
    %1706 = vmatprep.subr.mxu0 0.0
    %1707 = vmatpush1.msra.mxu0 0.0
    %1708 = vmatprep.subr.mxu0 0.0
    %1709 = vmatpush1.msra.mxu0 0.0
    %1710 = vmatprep.subr.mxu0 0.0
    %1711 = vmatpush1.msra.mxu0 0.0
    %1712 = vmatprep.subr.mxu0 0.0
    %1713 = vmatpush1.msra.mxu0 0.0
    %1714 = vmatprep.subr.mxu0 0.0
    %1715 = vmatpush1.msra.mxu0 0.0
    %1716 = vmatprep.subr.mxu0 0.0
    %1717 = vmatpush1.msra.mxu0 0.0
    %1718 = vmatprep.subr.mxu0 0.0
    %1719 = vmatpush1.msra.mxu0 0.0
    %1720 = vmatprep.subr.mxu0 0.0
    %1721 = vmatpush1.msra.mxu0 0.0
    %1722 = vmatprep.subr.mxu0 0.0
    %1723 = vmatpush1.msra.mxu0 0.0
    %1724 = vmatprep.subr.mxu0 0.0
    %1725 = vmatpush1.msra.mxu0 0.0
    %1726 = vmatprep.subr.mxu0 0.0
    %1727 = vmatpush1.msra.mxu0 0.0
    %1728 = vmatprep.mubr.f32.mxu0 0.0
    %1729 = vmatmul.mubr.f32.gmra.mrb[0].mxu0 %v1594
    %v1730 = vpop.f32.mrb[0].mxu0
    %v1731 = vadd.f32 0.0, %v1730
    %v1732 = vpop.f32.mrb[0].mxu0
    %v1733 = vadd.f32 0.0, %v1732
    %1734 = vdwg.mxu0
    %1735 = vmatprep.subr.mxu0 %v1603
    %1736 = vmatpush1.msra.mxu0 %v1602
    %1737 = vmatprep.subr.mxu0 %v1607
    %1738 = vmatpush1.msra.mxu0 %v1606
    %1739 = vmatprep.subr.mxu0 %v1611
    %1740 = vmatpush1.msra.mxu0 %v1610
    %1741 = vmatprep.subr.mxu0 %v1615
    %1742 = vmatpush1.msra.mxu0 %v1614
    %1743 = vmatprep.subr.mxu0 %v1619
    %1744 = vmatpush1.msra.mxu0 %v1618
    %1745 = vmatprep.subr.mxu0 %v1623
    %1746 = vmatpush1.msra.mxu0 %v1622
    %1747 = vmatprep.subr.mxu0 %v1627
    %1748 = vmatpush1.msra.mxu0 %v1626
    %1749 = vmatprep.subr.mxu0 %v1631
    %1750 = vmatpush1.msra.mxu0 %v1630
    %1751 = vmatprep.subr.mxu0 %v1635
    %1752 = vmatpush1.msra.mxu0 %v1634
    %1753 = vmatprep.subr.mxu0 %v1639
    %1754 = vmatpush1.msra.mxu0 %v1638
    %1755 = vmatprep.subr.mxu0 %v1643
    %1756 = vmatpush1.msra.mxu0 %v1642
    %1757 = vmatprep.subr.mxu0 %v1647
    %1758 = vmatpush1.msra.mxu0 %v1646
    %1759 = vmatprep.subr.mxu0 %v1651
    %1760 = vmatpush1.msra.mxu0 %v1650
    %1761 = vmatprep.subr.mxu0 %v1655
    %1762 = vmatpush1.msra.mxu0 %v1654
    %1763 = vmatprep.subr.mxu0 %v1659
    %1764 = vmatpush1.msra.mxu0 %v1658
    %1765 = vmatprep.subr.mxu0 %v1663
    %1766 = vmatpush1.msra.mxu0 %v1662
    %1767 = vmatprep.subr.mxu0 0.0
    %1768 = vmatpush1.msra.mxu0 0.0
    %1769 = vmatprep.subr.mxu0 0.0
    %1770 = vmatpush1.msra.mxu0 0.0
    %1771 = vmatprep.subr.mxu0 0.0
    %1772 = vmatpush1.msra.mxu0 0.0
    %1773 = vmatprep.subr.mxu0 0.0
    %1774 = vmatpush1.msra.mxu0 0.0
    %1775 = vmatprep.subr.mxu0 0.0
    %1776 = vmatpush1.msra.mxu0 0.0
    %1777 = vmatprep.subr.mxu0 0.0
    %1778 = vmatpush1.msra.mxu0 0.0
    %1779 = vmatprep.subr.mxu0 0.0
    %1780 = vmatpush1.msra.mxu0 0.0
    %1781 = vmatprep.subr.mxu0 0.0
    %1782 = vmatpush1.msra.mxu0 0.0
    %1783 = vmatprep.subr.mxu0 0.0
    %1784 = vmatpush1.msra.mxu0 0.0
    %1785 = vmatprep.subr.mxu0 0.0
    %1786 = vmatpush1.msra.mxu0 0.0
    %1787 = vmatprep.subr.mxu0 0.0
    %1788 = vmatpush1.msra.mxu0 0.0
    %1789 = vmatprep.subr.mxu0 0.0
    %1790 = vmatpush1.msra.mxu0 0.0
    %1791 = vmatprep.subr.mxu0 0.0
    %1792 = vmatpush1.msra.mxu0 0.0
    %1793 = vmatprep.subr.mxu0 0.0
    %1794 = vmatpush1.msra.mxu0 0.0
    %1795 = vmatprep.subr.mxu0 0.0
    %1796 = vmatpush1.msra.mxu0 0.0
    %1797 = vmatprep.subr.mxu0 0.0
    %1798 = vmatpush1.msra.mxu0 0.0
    %1799 = vmatprep.mubr.f32.mxu0 0.0
    %1800 = vmatmul.mubr.f32.gmra.mrb[0].mxu0 %v1594
    %v1801 = vpop.f32.mrb[0].mxu0
    %v1802 = vadd.f32 0.0, %v1801
    %v1803 = vpop.f32.mrb[0].mxu0
    %v1804 = vadd.f32 0.0, %v1803
    %1805 = vdwg.mxu0
    %v1810 = vrot.slane %v1731, 6
    %v1811 = vrot.slane %v1733, 6
    %v1812 = vrot.slane %v1802, 6
    %v1813 = vrot.slane %v1804, 6
    %v1818 = vadd.f32 %v1596, %v1810
    %v1819 = vadd.f32 %v1597, %v1811
    %v1820 = vadd.f32 %v1598, %v1812
    %v1821 = vadd.f32 %v1599, %v1813
    %v1822 = vxor.u32 %v1818, 2147483648
    %v1823 = vmul.f32 %v1822, 1.442695
    %v1824 = vpow.pop %v1823
    %v1825 = vadd.f32 %v1824, 1.0
    %v1826 = vrcp.pop %v1825
    %v1827 = vmul.f32 1.0, %v1826
    %v1828 = vxor.u32 %v1819, 2147483648
    %v1829 = vmul.f32 %v1828, 1.442695
    %v1830 = vpow.pop %v1829
    %v1831 = vadd.f32 %v1830, 1.0
    %v1832 = vrcp.pop %v1831
    %v1833 = vmul.f32 1.0, %v1832
    %v1834 = vtanh.pop %v1820
    %v1835 = vxor.u32 %v1821, 2147483648
    %v1836 = vmul.f32 %v1835, 1.442695
    %v1837 = vpow.pop %v1836
    %v1838 = vadd.f32 %v1837, 1.0
    %v1839 = vrcp.pop %v1838
    %v1840 = vmul.f32 1.0, %v1839
    %v1842 = vrot.slane %v1592, 6
    %v1844 = vmul.f32 %v1833, %v1842
    %v1845 = vmul.f32 %v1827, %v1834
    %v1846 = vadd.f32 %v1844, %v1845
    %v1847 = vtanh.pop %v1846
    %v1848 = vmul.f32 %v1840, %v1847
    %1849 = vst [vmem:[#allocation3 + $0x8] sm:$0xc] %v1848
    %v1850 = vld [vmem:[#allocation2 + $0x20] sm:$0x30]
    %v1851 = vld [vmem:[#allocation2 + $0x28] sm:$0x30]
    %v1852 = vld [vmem:[#allocation2 + $0x30] sm:$0x30]
    %v1853 = vld [vmem:[#allocation2 + $0x38] sm:$0x30]
    %v1854 = vld [vmem:[#allocation7] sm:$0xff]
    %v1855 = vld [vmem:[#allocation7 + $0x8] sm:$0xff]
    %v1856 = vld [vmem:[#allocation7 + $0x10] sm:$0xff]
    %v1857 = vld [vmem:[#allocation7 + $0x18] sm:$0xff]
    %v1858 = vld [vmem:[#allocation7 + $0x20] sm:$0xff]
    %v1859 = vld [vmem:[#allocation7 + $0x28] sm:$0xff]
    %v1860 = vld [vmem:[#allocation7 + $0x30] sm:$0xff]
    %v1861 = vld [vmem:[#allocation7 + $0x38] sm:$0xff]
    %v1862 = vld [vmem:[#allocation7 + $0x40] sm:$0xff]
    %v1863 = vld [vmem:[#allocation7 + $0x48] sm:$0xff]
    %v1864 = vld [vmem:[#allocation7 + $0x50] sm:$0xff]
    %v1865 = vld [vmem:[#allocation7 + $0x58] sm:$0xff]
    %v1866 = vld [vmem:[#allocation7 + $0x60] sm:$0xff]
    %v1867 = vld [vmem:[#allocation7 + $0x68] sm:$0xff]
    %v1868 = vld [vmem:[#allocation7 + $0x70] sm:$0xff]
    %v1869 = vld [vmem:[#allocation7 + $0x78] sm:$0xff]
    %v1870 = vld [vmem:[#allocation7 + $0x80] sm:$0xff]
    %v1871 = vld [vmem:[#allocation7 + $0x88] sm:$0xff]
    %v1872 = vld [vmem:[#allocation7 + $0x90] sm:$0xff]
    %v1873 = vld [vmem:[#allocation7 + $0x98] sm:$0xff]
    %v1874 = vld [vmem:[#allocation7 + $0xa0] sm:$0xff]
    %v1875 = vld [vmem:[#allocation7 + $0xa8] sm:$0xff]
    %v1876 = vld [vmem:[#allocation7 + $0xb0] sm:$0xff]
    %v1877 = vld [vmem:[#allocation7 + $0xb8] sm:$0xff]
    %v1878 = vld [vmem:[#allocation7 + $0xc0] sm:$0xff]
    %v1879 = vld [vmem:[#allocation7 + $0xc8] sm:$0xff]
    %v1880 = vld [vmem:[#allocation7 + $0xd0] sm:$0xff]
    %v1881 = vld [vmem:[#allocation7 + $0xd8] sm:$0xff]
    %v1882 = vld [vmem:[#allocation7 + $0xe0] sm:$0xff]
    %v1883 = vld [vmem:[#allocation7 + $0xe8] sm:$0xff]
    %v1884 = vld [vmem:[#allocation7 + $0xf0] sm:$0xff]
    %v1885 = vld [vmem:[#allocation7 + $0xf8] sm:$0xff]
    %v1886 = vld [vmem:[#allocation7 + $0x100] sm:$0xff]
    %v1887 = vld [vmem:[#allocation7 + $0x108] sm:$0xff]
    %v1888 = vld [vmem:[#allocation7 + $0x110] sm:$0xff]
    %v1889 = vld [vmem:[#allocation7 + $0x118] sm:$0xff]
    %v1890 = vld [vmem:[#allocation7 + $0x120] sm:$0xff]
    %v1891 = vld [vmem:[#allocation7 + $0x128] sm:$0xff]
    %v1892 = vld [vmem:[#allocation7 + $0x130] sm:$0xff]
    %v1893 = vld [vmem:[#allocation7 + $0x138] sm:$0xff]
    %v1894 = vld [vmem:[#allocation7 + $0x140] sm:$0xff]
    %v1895 = vld [vmem:[#allocation7 + $0x148] sm:$0xff]
    %v1896 = vld [vmem:[#allocation7 + $0x150] sm:$0xff]
    %v1897 = vld [vmem:[#allocation7 + $0x158] sm:$0xff]
    %v1898 = vld [vmem:[#allocation7 + $0x160] sm:$0xff]
    %v1899 = vld [vmem:[#allocation7 + $0x168] sm:$0xff]
    %v1900 = vld [vmem:[#allocation7 + $0x170] sm:$0xff]
    %v1901 = vld [vmem:[#allocation7 + $0x178] sm:$0xff]
    %v1902 = vld [vmem:[#allocation7 + $0x180] sm:$0xff]
    %v1903 = vld [vmem:[#allocation7 + $0x188] sm:$0xff]
    %v1904 = vld [vmem:[#allocation7 + $0x190] sm:$0xff]
    %v1905 = vld [vmem:[#allocation7 + $0x198] sm:$0xff]
    %v1906 = vld [vmem:[#allocation7 + $0x1a0] sm:$0xff]
    %v1907 = vld [vmem:[#allocation7 + $0x1a8] sm:$0xff]
    %v1908 = vld [vmem:[#allocation7 + $0x1b0] sm:$0xff]
    %v1909 = vld [vmem:[#allocation7 + $0x1b8] sm:$0xff]
    %v1910 = vld [vmem:[#allocation7 + $0x1c0] sm:$0xff]
    %v1911 = vld [vmem:[#allocation7 + $0x1c8] sm:$0xff]
    %v1912 = vld [vmem:[#allocation7 + $0x1d0] sm:$0xff]
    %v1913 = vld [vmem:[#allocation7 + $0x1d8] sm:$0xff]
    %v1914 = vld [vmem:[#allocation7 + $0x1e0] sm:$0xff]
    %v1915 = vld [vmem:[#allocation7 + $0x1e8] sm:$0xff]
    %v1916 = vld [vmem:[#allocation7 + $0x1f0] sm:$0xff]
    %v1917 = vld [vmem:[#allocation7 + $0x1f8] sm:$0xff]
    %v1919 = vrot.slane %v1848, 2
    %1921 = vmatprep.subr.mxu0 %v1855
    %1922 = vmatpush1.msra.mxu0 %v1854
    %1923 = vmatprep.subr.mxu0 %v1859
    %1924 = vmatpush1.msra.mxu0 %v1858
    %1925 = vmatprep.subr.mxu0 %v1863
    %1926 = vmatpush1.msra.mxu0 %v1862
    %1927 = vmatprep.subr.mxu0 %v1867
    %1928 = vmatpush1.msra.mxu0 %v1866
    %1929 = vmatprep.subr.mxu0 %v1871
    %1930 = vmatpush1.msra.mxu0 %v1870
    %1931 = vmatprep.subr.mxu0 %v1875
    %1932 = vmatpush1.msra.mxu0 %v1874
    %1933 = vmatprep.subr.mxu0 %v1879
    %1934 = vmatpush1.msra.mxu0 %v1878
    %1935 = vmatprep.subr.mxu0 %v1883
    %1936 = vmatpush1.msra.mxu0 %v1882
    %1937 = vmatprep.subr.mxu0 %v1887
    %1938 = vmatpush1.msra.mxu0 %v1886
    %1939 = vmatprep.subr.mxu0 %v1891
    %1940 = vmatpush1.msra.mxu0 %v1890
    %1941 = vmatprep.subr.mxu0 %v1895
    %1942 = vmatpush1.msra.mxu0 %v1894
    %1943 = vmatprep.subr.mxu0 %v1899
    %1944 = vmatpush1.msra.mxu0 %v1898
    %1945 = vmatprep.subr.mxu0 %v1903
    %1946 = vmatpush1.msra.mxu0 %v1902
    %1947 = vmatprep.subr.mxu0 %v1907
    %1948 = vmatpush1.msra.mxu0 %v1906
    %1949 = vmatprep.subr.mxu0 %v1911
    %1950 = vmatpush1.msra.mxu0 %v1910
    %1951 = vmatprep.subr.mxu0 %v1915
    %1952 = vmatpush1.msra.mxu0 %v1914
    %1953 = vmatprep.subr.mxu0 0.0
    %1954 = vmatpush1.msra.mxu0 0.0
    %1955 = vmatprep.subr.mxu0 0.0
    %1956 = vmatpush1.msra.mxu0 0.0
    %1957 = vmatprep.subr.mxu0 0.0
    %1958 = vmatpush1.msra.mxu0 0.0
    %1959 = vmatprep.subr.mxu0 0.0
    %1960 = vmatpush1.msra.mxu0 0.0
    %1961 = vmatprep.subr.mxu0 0.0
    %1962 = vmatpush1.msra.mxu0 0.0
    %1963 = vmatprep.subr.mxu0 0.0
    %1964 = vmatpush1.msra.mxu0 0.0
    %1965 = vmatprep.subr.mxu0 0.0
    %1966 = vmatpush1.msra.mxu0 0.0
    %1967 = vmatprep.subr.mxu0 0.0
    %1968 = vmatpush1.msra.mxu0 0.0
    %1969 = vmatprep.subr.mxu0 0.0
    %1970 = vmatpush1.msra.mxu0 0.0
    %1971 = vmatprep.subr.mxu0 0.0
    %1972 = vmatpush1.msra.mxu0 0.0
    %1973 = vmatprep.subr.mxu0 0.0
    %1974 = vmatpush1.msra.mxu0 0.0
    %1975 = vmatprep.subr.mxu0 0.0
    %1976 = vmatpush1.msra.mxu0 0.0
    %1977 = vmatprep.subr.mxu0 0.0
    %1978 = vmatpush1.msra.mxu0 0.0
    %1979 = vmatprep.subr.mxu0 0.0
    %1980 = vmatpush1.msra.mxu0 0.0
    %1981 = vmatprep.subr.mxu0 0.0
    %1982 = vmatpush1.msra.mxu0 0.0
    %1983 = vmatprep.subr.mxu0 0.0
    %1984 = vmatpush1.msra.mxu0 0.0
    %1985 = vmatprep.mubr.f32.mxu0 0.0
    %1986 = vmatmul.mubr.f32.gmra.mrb[0].mxu0 %v1919
    %v1987 = vpop.f32.mrb[0].mxu0
    %v1988 = vadd.f32 0.0, %v1987
    %v1989 = vpop.f32.mrb[0].mxu0
    %v1990 = vadd.f32 0.0, %v1989
    %1991 = vdwg.mxu0
    %1992 = vmatprep.subr.mxu0 %v1857
    %1993 = vmatpush1.msra.mxu0 %v1856
    %1994 = vmatprep.subr.mxu0 %v1861
    %1995 = vmatpush1.msra.mxu0 %v1860
    %1996 = vmatprep.subr.mxu0 %v1865
    %1997 = vmatpush1.msra.mxu0 %v1864
    %1998 = vmatprep.subr.mxu0 %v1869
    %1999 = vmatpush1.msra.mxu0 %v1868
    %2000 = vmatprep.subr.mxu0 %v1873
    %2001 = vmatpush1.msra.mxu0 %v1872
    %2002 = vmatprep.subr.mxu0 %v1877
    %2003 = vmatpush1.msra.mxu0 %v1876
    %2004 = vmatprep.subr.mxu0 %v1881
    %2005 = vmatpush1.msra.mxu0 %v1880
    %2006 = vmatprep.subr.mxu0 %v1885
    %2007 = vmatpush1.msra.mxu0 %v1884
    %2008 = vmatprep.subr.mxu0 %v1889
    %2009 = vmatpush1.msra.mxu0 %v1888
    %2010 = vmatprep.subr.mxu0 %v1893
    %2011 = vmatpush1.msra.mxu0 %v1892
    %2012 = vmatprep.subr.mxu0 %v1897
    %2013 = vmatpush1.msra.mxu0 %v1896
    %2014 = vmatprep.subr.mxu0 %v1901
    %2015 = vmatpush1.msra.mxu0 %v1900
    %2016 = vmatprep.subr.mxu0 %v1905
    %2017 = vmatpush1.msra.mxu0 %v1904
    %2018 = vmatprep.subr.mxu0 %v1909
    %2019 = vmatpush1.msra.mxu0 %v1908
    %2020 = vmatprep.subr.mxu0 %v1913
    %2021 = vmatpush1.msra.mxu0 %v1912
    %2022 = vmatprep.subr.mxu0 %v1917
    %2023 = vmatpush1.msra.mxu0 %v1916
    %2024 = vmatprep.subr.mxu0 0.0
    %2025 = vmatpush1.msra.mxu0 0.0
    %2026 = vmatprep.subr.mxu0 0.0
    %2027 = vmatpush1.msra.mxu0 0.0
    %2028 = vmatprep.subr.mxu0 0.0
    %2029 = vmatpush1.msra.mxu0 0.0
    %2030 = vmatprep.subr.mxu0 0.0
    %2031 = vmatpush1.msra.mxu0 0.0
    %2032 = vmatprep.subr.mxu0 0.0
    %2033 = vmatpush1.msra.mxu0 0.0
    %2034 = vmatprep.subr.mxu0 0.0
    %2035 = vmatpush1.msra.mxu0 0.0
    %2036 = vmatprep.subr.mxu0 0.0
    %2037 = vmatpush1.msra.mxu0 0.0
    %2038 = vmatprep.subr.mxu0 0.0
    %2039 = vmatpush1.msra.mxu0 0.0
    %2040 = vmatprep.subr.mxu0 0.0
    %2041 = vmatpush1.msra.mxu0 0.0
    %2042 = vmatprep.subr.mxu0 0.0
    %2043 = vmatpush1.msra.mxu0 0.0
    %2044 = vmatprep.subr.mxu0 0.0
    %2045 = vmatpush1.msra.mxu0 0.0
    %2046 = vmatprep.subr.mxu0 0.0
    %2047 = vmatpush1.msra.mxu0 0.0
    %2048 = vmatprep.subr.mxu0 0.0
    %2049 = vmatpush1.msra.mxu0 0.0
    %2050 = vmatprep.subr.mxu0 0.0
    %2051 = vmatpush1.msra.mxu0 0.0
    %2052 = vmatprep.subr.mxu0 0.0
    %2053 = vmatpush1.msra.mxu0 0.0
    %2054 = vmatprep.subr.mxu0 0.0
    %2055 = vmatpush1.msra.mxu0 0.0
    %2056 = vmatprep.mubr.f32.mxu0 0.0
    %2057 = vmatmul.mubr.f32.gmra.mrb[0].mxu0 %v1919
    %v2058 = vpop.f32.mrb[0].mxu0
    %v2059 = vadd.f32 0.0, %v2058
    %v2060 = vpop.f32.mrb[0].mxu0
    %v2061 = vadd.f32 0.0, %v2060
    %2062 = vdwg.mxu0
    %v2067 = vrot.slane %v1988, 4
    %v2068 = vrot.slane %v1990, 4
    %v2069 = vrot.slane %v2059, 4
    %v2070 = vrot.slane %v2061, 4
    %v2075 = vadd.f32 %v1850, %v2067
    %v2076 = vadd.f32 %v1851, %v2068
    %v2077 = vadd.f32 %v1852, %v2069
    %v2078 = vadd.f32 %v1853, %v2070
    %v2079 = vxor.u32 %v2075, 2147483648
    %v2080 = vmul.f32 %v2079, 1.442695
    %v2081 = vpow.pop %v2080
    %v2082 = vadd.f32 %v2081, 1.0
    %v2083 = vrcp.pop %v2082
    %v2084 = vmul.f32 1.0, %v2083
    %v2085 = vxor.u32 %v2076, 2147483648
    %v2086 = vmul.f32 %v2085, 1.442695
    %v2087 = vpow.pop %v2086
    %v2088 = vadd.f32 %v2087, 1.0
    %v2089 = vrcp.pop %v2088
    %v2090 = vmul.f32 1.0, %v2089
    %v2091 = vtanh.pop %v2077
    %v2092 = vxor.u32 %v2078, 2147483648
    %v2093 = vmul.f32 %v2092, 1.442695
    %v2094 = vpow.pop %v2093
    %v2095 = vadd.f32 %v2094, 1.0
    %v2096 = vrcp.pop %v2095
    %v2097 = vmul.f32 1.0, %v2096
    %v2099 = vrot.slane %v1846, 6
    %v2101 = vmul.f32 %v2090, %v2099
    %v2102 = vmul.f32 %v2084, %v2091
    %v2103 = vadd.f32 %v2101, %v2102
    %v2104 = vtanh.pop %v2103
    %v2105 = vmul.f32 %v2097, %v2104
    %2106 = vst [vmem:[#allocation3 + $0x8] sm:$0x30] %v2105
    %v2107 = vld [vmem:[#allocation2 + $0x20] sm:$0xc0]
    %v2108 = vld [vmem:[#allocation2 + $0x28] sm:$0xc0]
    %v2109 = vld [vmem:[#allocation2 + $0x30] sm:$0xc0]
    %v2110 = vld [vmem:[#allocation2 + $0x38] sm:$0xc0]
    %v2111 = vld [vmem:[#allocation7] sm:$0xff]
    %v2112 = vld [vmem:[#allocation7 + $0x8] sm:$0xff]
    %v2113 = vld [vmem:[#allocation7 + $0x10] sm:$0xff]
    %v2114 = vld [vmem:[#allocation7 + $0x18] sm:$0xff]
    %v2115 = vld [vmem:[#allocation7 + $0x20] sm:$0xff]
    %v2116 = vld [vmem:[#allocation7 + $0x28] sm:$0xff]
    %v2117 = vld [vmem:[#allocation7 + $0x30] sm:$0xff]
    %v2118 = vld [vmem:[#allocation7 + $0x38] sm:$0xff]
    %v2119 = vld [vmem:[#allocation7 + $0x40] sm:$0xff]
    %v2120 = vld [vmem:[#allocation7 + $0x48] sm:$0xff]
    %v2121 = vld [vmem:[#allocation7 + $0x50] sm:$0xff]
    %v2122 = vld [vmem:[#allocation7 + $0x58] sm:$0xff]
    %v2123 = vld [vmem:[#allocation7 + $0x60] sm:$0xff]
    %v2124 = vld [vmem:[#allocation7 + $0x68] sm:$0xff]
    %v2125 = vld [vmem:[#allocation7 + $0x70] sm:$0xff]
    %v2126 = vld [vmem:[#allocation7 + $0x78] sm:$0xff]
    %v2127 = vld [vmem:[#allocation7 + $0x80] sm:$0xff]
    %v2128 = vld [vmem:[#allocation7 + $0x88] sm:$0xff]
    %v2129 = vld [vmem:[#allocation7 + $0x90] sm:$0xff]
    %v2130 = vld [vmem:[#allocation7 + $0x98] sm:$0xff]
    %v2131 = vld [vmem:[#allocation7 + $0xa0] sm:$0xff]
    %v2132 = vld [vmem:[#allocation7 + $0xa8] sm:$0xff]
    %v2133 = vld [vmem:[#allocation7 + $0xb0] sm:$0xff]
    %v2134 = vld [vmem:[#allocation7 + $0xb8] sm:$0xff]
    %v2135 = vld [vmem:[#allocation7 + $0xc0] sm:$0xff]
    %v2136 = vld [vmem:[#allocation7 + $0xc8] sm:$0xff]
    %v2137 = vld [vmem:[#allocation7 + $0xd0] sm:$0xff]
    %v2138 = vld [vmem:[#allocation7 + $0xd8] sm:$0xff]
    %v2139 = vld [vmem:[#allocation7 + $0xe0] sm:$0xff]
    %v2140 = vld [vmem:[#allocation7 + $0xe8] sm:$0xff]
    %v2141 = vld [vmem:[#allocation7 + $0xf0] sm:$0xff]
    %v2142 = vld [vmem:[#allocation7 + $0xf8] sm:$0xff]
    %v2143 = vld [vmem:[#allocation7 + $0x100] sm:$0xff]
    %v2144 = vld [vmem:[#allocation7 + $0x108] sm:$0xff]
    %v2145 = vld [vmem:[#allocation7 + $0x110] sm:$0xff]
    %v2146 = vld [vmem:[#allocation7 + $0x118] sm:$0xff]
    %v2147 = vld [vmem:[#allocation7 + $0x120] sm:$0xff]
    %v2148 = vld [vmem:[#allocation7 + $0x128] sm:$0xff]
    %v2149 = vld [vmem:[#allocation7 + $0x130] sm:$0xff]
    %v2150 = vld [vmem:[#allocation7 + $0x138] sm:$0xff]
    %v2151 = vld [vmem:[#allocation7 + $0x140] sm:$0xff]
    %v2152 = vld [vmem:[#allocation7 + $0x148] sm:$0xff]
    %v2153 = vld [vmem:[#allocation7 + $0x150] sm:$0xff]
    %v2154 = vld [vmem:[#allocation7 + $0x158] sm:$0xff]
    %v2155 = vld [vmem:[#allocation7 + $0x160] sm:$0xff]
    %v2156 = vld [vmem:[#allocation7 + $0x168] sm:$0xff]
    %v2157 = vld [vmem:[#allocation7 + $0x170] sm:$0xff]
    %v2158 = vld [vmem:[#allocation7 + $0x178] sm:$0xff]
    %v2159 = vld [vmem:[#allocation7 + $0x180] sm:$0xff]
    %v2160 = vld [vmem:[#allocation7 + $0x188] sm:$0xff]
    %v2161 = vld [vmem:[#allocation7 + $0x190] sm:$0xff]
    %v2162 = vld [vmem:[#allocation7 + $0x198] sm:$0xff]
    %v2163 = vld [vmem:[#allocation7 + $0x1a0] sm:$0xff]
    %v2164 = vld [vmem:[#allocation7 + $0x1a8] sm:$0xff]
    %v2165 = vld [vmem:[#allocation7 + $0x1b0] sm:$0xff]
    %v2166 = vld [vmem:[#allocation7 + $0x1b8] sm:$0xff]
    %v2167 = vld [vmem:[#allocation7 + $0x1c0] sm:$0xff]
    %v2168 = vld [vmem:[#allocation7 + $0x1c8] sm:$0xff]
    %v2169 = vld [vmem:[#allocation7 + $0x1d0] sm:$0xff]
    %v2170 = vld [vmem:[#allocation7 + $0x1d8] sm:$0xff]
    %v2171 = vld [vmem:[#allocation7 + $0x1e0] sm:$0xff]
    %v2172 = vld [vmem:[#allocation7 + $0x1e8] sm:$0xff]
    %v2173 = vld [vmem:[#allocation7 + $0x1f0] sm:$0xff]
    %v2174 = vld [vmem:[#allocation7 + $0x1f8] sm:$0xff]
    %v2176 = vrot.slane %v2105, 4
    %2178 = vmatprep.subr.mxu0 %v2112
    %2179 = vmatpush1.msra.mxu0 %v2111
    %2180 = vmatprep.subr.mxu0 %v2116
    %2181 = vmatpush1.msra.mxu0 %v2115
    %2182 = vmatprep.subr.mxu0 %v2120
    %2183 = vmatpush1.msra.mxu0 %v2119
    %2184 = vmatprep.subr.mxu0 %v2124
    %2185 = vmatpush1.msra.mxu0 %v2123
    %2186 = vmatprep.subr.mxu0 %v2128
    %2187 = vmatpush1.msra.mxu0 %v2127
    %2188 = vmatprep.subr.mxu0 %v2132
    %2189 = vmatpush1.msra.mxu0 %v2131
    %2190 = vmatprep.subr.mxu0 %v2136
    %2191 = vmatpush1.msra.mxu0 %v2135
    %2192 = vmatprep.subr.mxu0 %v2140
    %2193 = vmatpush1.msra.mxu0 %v2139
    %2194 = vmatprep.subr.mxu0 %v2144
    %2195 = vmatpush1.msra.mxu0 %v2143
    %2196 = vmatprep.subr.mxu0 %v2148
    %2197 = vmatpush1.msra.mxu0 %v2147
    %2198 = vmatprep.subr.mxu0 %v2152
    %2199 = vmatpush1.msra.mxu0 %v2151
    %2200 = vmatprep.subr.mxu0 %v2156
    %2201 = vmatpush1.msra.mxu0 %v2155
    %2202 = vmatprep.subr.mxu0 %v2160
    %2203 = vmatpush1.msra.mxu0 %v2159
    %2204 = vmatprep.subr.mxu0 %v2164
    %2205 = vmatpush1.msra.mxu0 %v2163
    %2206 = vmatprep.subr.mxu0 %v2168
    %2207 = vmatpush1.msra.mxu0 %v2167
    %2208 = vmatprep.subr.mxu0 %v2172
    %2209 = vmatpush1.msra.mxu0 %v2171
    %2210 = vmatprep.subr.mxu0 0.0
    %2211 = vmatpush1.msra.mxu0 0.0
    %2212 = vmatprep.subr.mxu0 0.0
    %2213 = vmatpush1.msra.mxu0 0.0
    %2214 = vmatprep.subr.mxu0 0.0
    %2215 = vmatpush1.msra.mxu0 0.0
    %2216 = vmatprep.subr.mxu0 0.0
    %2217 = vmatpush1.msra.mxu0 0.0
    %2218 = vmatprep.subr.mxu0 0.0
    %2219 = vmatpush1.msra.mxu0 0.0
    %2220 = vmatprep.subr.mxu0 0.0
    %2221 = vmatpush1.msra.mxu0 0.0
    %2222 = vmatprep.subr.mxu0 0.0
    %2223 = vmatpush1.msra.mxu0 0.0
    %2224 = vmatprep.subr.mxu0 0.0
    %2225 = vmatpush1.msra.mxu0 0.0
    %2226 = vmatprep.subr.mxu0 0.0
    %2227 = vmatpush1.msra.mxu0 0.0
    %2228 = vmatprep.subr.mxu0 0.0
    %2229 = vmatpush1.msra.mxu0 0.0
    %2230 = vmatprep.subr.mxu0 0.0
    %2231 = vmatpush1.msra.mxu0 0.0
    %2232 = vmatprep.subr.mxu0 0.0
    %2233 = vmatpush1.msra.mxu0 0.0
    %2234 = vmatprep.subr.mxu0 0.0
    %2235 = vmatpush1.msra.mxu0 0.0
    %2236 = vmatprep.subr.mxu0 0.0
    %2237 = vmatpush1.msra.mxu0 0.0
    %2238 = vmatprep.subr.mxu0 0.0
    %2239 = vmatpush1.msra.mxu0 0.0
    %2240 = vmatprep.subr.mxu0 0.0
    %2241 = vmatpush1.msra.mxu0 0.0
    %2242 = vmatprep.mubr.f32.mxu0 0.0
    %2243 = vmatmul.mubr.f32.gmra.mrb[0].mxu0 %v2176
    %v2244 = vpop.f32.mrb[0].mxu0
    %v2245 = vadd.f32 0.0, %v2244
    %v2246 = vpop.f32.mrb[0].mxu0
    %v2247 = vadd.f32 0.0, %v2246
    %2248 = vdwg.mxu0
    %2249 = vmatprep.subr.mxu0 %v2114
    %2250 = vmatpush1.msra.mxu0 %v2113
    %2251 = vmatprep.subr.mxu0 %v2118
    %2252 = vmatpush1.msra.mxu0 %v2117
    %2253 = vmatprep.subr.mxu0 %v2122
    %2254 = vmatpush1.msra.mxu0 %v2121
    %2255 = vmatprep.subr.mxu0 %v2126
    %2256 = vmatpush1.msra.mxu0 %v2125
    %2257 = vmatprep.subr.mxu0 %v2130
    %2258 = vmatpush1.msra.mxu0 %v2129
    %2259 = vmatprep.subr.mxu0 %v2134
    %2260 = vmatpush1.msra.mxu0 %v2133
    %2261 = vmatprep.subr.mxu0 %v2138
    %2262 = vmatpush1.msra.mxu0 %v2137
    %2263 = vmatprep.subr.mxu0 %v2142
    %2264 = vmatpush1.msra.mxu0 %v2141
    %2265 = vmatprep.subr.mxu0 %v2146
    %2266 = vmatpush1.msra.mxu0 %v2145
    %2267 = vmatprep.subr.mxu0 %v2150
    %2268 = vmatpush1.msra.mxu0 %v2149
    %2269 = vmatprep.subr.mxu0 %v2154
    %2270 = vmatpush1.msra.mxu0 %v2153
    %2271 = vmatprep.subr.mxu0 %v2158
    %2272 = vmatpush1.msra.mxu0 %v2157
    %2273 = vmatprep.subr.mxu0 %v2162
    %2274 = vmatpush1.msra.mxu0 %v2161
    %2275 = vmatprep.subr.mxu0 %v2166
    %2276 = vmatpush1.msra.mxu0 %v2165
    %2277 = vmatprep.subr.mxu0 %v2170
    %2278 = vmatpush1.msra.mxu0 %v2169
    %2279 = vmatprep.subr.mxu0 %v2174
    %2280 = vmatpush1.msra.mxu0 %v2173
    %2281 = vmatprep.subr.mxu0 0.0
    %2282 = vmatpush1.msra.mxu0 0.0
    %2283 = vmatprep.subr.mxu0 0.0
    %2284 = vmatpush1.msra.mxu0 0.0
    %2285 = vmatprep.subr.mxu0 0.0
    %2286 = vmatpush1.msra.mxu0 0.0
    %2287 = vmatprep.subr.mxu0 0.0
    %2288 = vmatpush1.msra.mxu0 0.0
    %2289 = vmatprep.subr.mxu0 0.0
    %2290 = vmatpush1.msra.mxu0 0.0
    %2291 = vmatprep.subr.mxu0 0.0
    %2292 = vmatpush1.msra.mxu0 0.0
    %2293 = vmatprep.subr.mxu0 0.0
    %2294 = vmatpush1.msra.mxu0 0.0
    %2295 = vmatprep.subr.mxu0 0.0
    %2296 = vmatpush1.msra.mxu0 0.0
    %2297 = vmatprep.subr.mxu0 0.0
    %2298 = vmatpush1.msra.mxu0 0.0
    %2299 = vmatprep.subr.mxu0 0.0
    %2300 = vmatpush1.msra.mxu0 0.0
    %2301 = vmatprep.subr.mxu0 0.0
    %2302 = vmatpush1.msra.mxu0 0.0
    %2303 = vmatprep.subr.mxu0 0.0
    %2304 = vmatpush1.msra.mxu0 0.0
    %2305 = vmatprep.subr.mxu0 0.0
    %2306 = vmatpush1.msra.mxu0 0.0
    %2307 = vmatprep.subr.mxu0 0.0
    %2308 = vmatpush1.msra.mxu0 0.0
    %2309 = vmatprep.subr.mxu0 0.0
    %2310 = vmatpush1.msra.mxu0 0.0
    %2311 = vmatprep.subr.mxu0 0.0
    %2312 = vmatpush1.msra.mxu0 0.0
    %2313 = vmatprep.mubr.f32.mxu0 0.0
    %2314 = vmatmul.mubr.f32.gmra.mrb[0].mxu0 %v2176
    %v2315 = vpop.f32.mrb[0].mxu0
    %v2316 = vadd.f32 0.0, %v2315
    %v2317 = vpop.f32.mrb[0].mxu0
    %v2318 = vadd.f32 0.0, %v2317
    %2319 = vdwg.mxu0
    %v2324 = vrot.slane %v2245, 2
    %v2325 = vrot.slane %v2247, 2
    %v2326 = vrot.slane %v2316, 2
    %v2327 = vrot.slane %v2318, 2
    %v2332 = vadd.f32 %v2107, %v2324
    %v2333 = vadd.f32 %v2108, %v2325
    %v2334 = vadd.f32 %v2109, %v2326
    %v2335 = vadd.f32 %v2110, %v2327
    %v2336 = vxor.u32 %v2332, 2147483648
    %v2337 = vmul.f32 %v2336, 1.442695
    %v2338 = vpow.pop %v2337
    %v2339 = vadd.f32 %v2338, 1.0
    %v2340 = vrcp.pop %v2339
    %v2341 = vmul.f32 1.0, %v2340
    %v2342 = vxor.u32 %v2333, 2147483648
    %v2343 = vmul.f32 %v2342, 1.442695
    %v2344 = vpow.pop %v2343
    %v2345 = vadd.f32 %v2344, 1.0
    %v2346 = vrcp.pop %v2345
    %v2347 = vmul.f32 1.0, %v2346
    %v2348 = vtanh.pop %v2334
    %v2349 = vxor.u32 %v2335, 2147483648
    %v2350 = vmul.f32 %v2349, 1.442695
    %v2351 = vpow.pop %v2350
    %v2352 = vadd.f32 %v2351, 1.0
    %v2353 = vrcp.pop %v2352
    %v2354 = vmul.f32 1.0, %v2353
    %v2356 = vrot.slane %v2103, 6
    %v2358 = vmul.f32 %v2347, %v2356
    %v2359 = vmul.f32 %v2341, %v2348
    %v2360 = vadd.f32 %v2358, %v2359
    %v2361 = vtanh.pop %v2360
    %v2362 = vmul.f32 %v2354, %v2361
    %2363 = vst [vmem:[#allocation3 + $0x8] sm:$0xc0] %v2362
    %2364 = vst [vmem:[#allocation12 - $0x6] sm:$0xc0] %v2362
    %2365 = vst [vmem:[#allocation13 - $0x6] sm:$0xc0] %v2360
    %v2366 = vld [vmem:[#allocation3] sm:$0xff]
    %v2367 = vld [vmem:[#allocation3 + $0x8] sm:$0xff]
    %v2368 = vld [vmem:[#allocation9] sm:$0xff]
    %v2369 = vld [vmem:[#allocation9 + $0x8] sm:$0xff]
    %v2370 = vld [vmem:[#allocation9 + $0x10] sm:$0xff]
    %v2371 = vld [vmem:[#allocation9 + $0x18] sm:$0xff]
    %v2372 = vld [vmem:[#allocation9 + $0x20] sm:$0xff]
    %v2373 = vld [vmem:[#allocation9 + $0x28] sm:$0xff]
    %v2374 = vld [vmem:[#allocation9 + $0x30] sm:$0xff]
    %v2375 = vld [vmem:[#allocation9 + $0x38] sm:$0xff]
    %v2376 = vld [vmem:[#allocation9 + $0x40] sm:$0xff]
    %v2377 = vld [vmem:[#allocation9 + $0x48] sm:$0xff]
    %v2378 = vld [vmem:[#allocation9 + $0x50] sm:$0xff]
    %v2379 = vld [vmem:[#allocation9 + $0x58] sm:$0xff]
    %v2380 = vld [vmem:[#allocation9 + $0x60] sm:$0xff]
    %v2381 = vld [vmem:[#allocation9 + $0x68] sm:$0xff]
    %v2382 = vld [vmem:[#allocation9 + $0x70] sm:$0xff]
    %v2383 = vld [vmem:[#allocation9 + $0x78] sm:$0xff]
    %v2384 = vld [vmem:[#allocation9 + $0x80] sm:$0xff]
    %v2385 = vld [vmem:[#allocation9 + $0x88] sm:$0xff]
    %v2386 = vld [vmem:[#allocation9 + $0x90] sm:$0xff]
    %v2387 = vld [vmem:[#allocation9 + $0x98] sm:$0xff]
    %v2388 = vld [vmem:[#allocation9 + $0xa0] sm:$0xff]
    %v2389 = vld [vmem:[#allocation9 + $0xa8] sm:$0xff]
    %v2390 = vld [vmem:[#allocation9 + $0xb0] sm:$0xff]
    %v2391 = vld [vmem:[#allocation9 + $0xb8] sm:$0xff]
    %v2392 = vld [vmem:[#allocation9 + $0xc0] sm:$0xff]
    %v2393 = vld [vmem:[#allocation9 + $0xc8] sm:$0xff]
    %v2394 = vld [vmem:[#allocation9 + $0xd0] sm:$0xff]
    %v2395 = vld [vmem:[#allocation9 + $0xd8] sm:$0xff]
    %v2396 = vld [vmem:[#allocation9 + $0xe0] sm:$0xff]
    %v2397 = vld [vmem:[#allocation9 + $0xe8] sm:$0xff]
    %v2398 = vld [vmem:[#allocation9 + $0xf0] sm:$0xff]
    %v2399 = vld [vmem:[#allocation9 + $0xf8] sm:$0xff]
    %v2400 = vld [vmem:[#allocation9 + $0x100] sm:$0xff]
    %v2401 = vld [vmem:[#allocation9 + $0x108] sm:$0xff]
    %v2402 = vld [vmem:[#allocation9 + $0x110] sm:$0xff]
    %v2403 = vld [vmem:[#allocation9 + $0x118] sm:$0xff]
    %v2404 = vld [vmem:[#allocation9 + $0x120] sm:$0xff]
    %v2405 = vld [vmem:[#allocation9 + $0x128] sm:$0xff]
    %v2406 = vld [vmem:[#allocation9 + $0x130] sm:$0xff]
    %v2407 = vld [vmem:[#allocation9 + $0x138] sm:$0xff]
    %v2408 = vld [vmem:[#allocation9 + $0x140] sm:$0xff]
    %v2409 = vld [vmem:[#allocation9 + $0x148] sm:$0xff]
    %v2410 = vld [vmem:[#allocation9 + $0x150] sm:$0xff]
    %v2411 = vld [vmem:[#allocation9 + $0x158] sm:$0xff]
    %v2412 = vld [vmem:[#allocation9 + $0x160] sm:$0xff]
    %v2413 = vld [vmem:[#allocation9 + $0x168] sm:$0xff]
    %v2414 = vld [vmem:[#allocation9 + $0x170] sm:$0xff]
    %v2415 = vld [vmem:[#allocation9 + $0x178] sm:$0xff]
    %v2416 = vld [vmem:[#allocation9 + $0x180] sm:$0xff]
    %v2417 = vld [vmem:[#allocation9 + $0x188] sm:$0xff]
    %v2418 = vld [vmem:[#allocation9 + $0x190] sm:$0xff]
    %v2419 = vld [vmem:[#allocation9 + $0x198] sm:$0xff]
    %v2420 = vld [vmem:[#allocation9 + $0x1a0] sm:$0xff]
    %v2421 = vld [vmem:[#allocation9 + $0x1a8] sm:$0xff]
    %v2422 = vld [vmem:[#allocation9 + $0x1b0] sm:$0xff]
    %v2423 = vld [vmem:[#allocation9 + $0x1b8] sm:$0xff]
    %v2424 = vld [vmem:[#allocation9 + $0x1c0] sm:$0xff]
    %v2425 = vld [vmem:[#allocation9 + $0x1c8] sm:$0xff]
    %v2426 = vld [vmem:[#allocation9 + $0x1d0] sm:$0xff]
    %v2427 = vld [vmem:[#allocation9 + $0x1d8] sm:$0xff]
    %v2428 = vld [vmem:[#allocation9 + $0x1e0] sm:$0xff]
    %v2429 = vld [vmem:[#allocation9 + $0x1e8] sm:$0xff]
    %v2430 = vld [vmem:[#allocation9 + $0x1f0] sm:$0xff]
    %v2431 = vld [vmem:[#allocation9 + $0x1f8] sm:$0xff]
    %v2432 = vld [vmem:[%s6] sm:$0xf]
    %v2434 = vlaneseq
    %v2435 = vshrl.u32 %v2434, 7
    %v2436 = vsub.s32 0, %v2435
    %v2437 = vrot.slane %v2432, %v2436
    %v2438 = vlaneseq
    %v2439 = vshrl.u32 %v2438, 7
    %v2440 = vsub.s32 1, %v2439
    %v2441 = vrot.slane %v2432, %v2440
    %v2442 = vlaneseq
    %v2443 = vshrl.u32 %v2442, 7
    %v2444 = vsub.s32 2, %v2443
    %v2445 = vrot.slane %v2432, %v2444
    %v2446 = vlaneseq
    %v2447 = vshrl.u32 %v2446, 7
    %v2448 = vsub.s32 3, %v2447
    %v2449 = vrot.slane %v2432, %v2448
    %2454 = vmatprep.subr.mxu0 %v2369
    %2455 = vmatpush1.msra.mxu0 %v2368
    %2456 = vmatprep.subr.mxu0 %v2373
    %2457 = vmatpush1.msra.mxu0 %v2372
    %2458 = vmatprep.subr.mxu0 %v2377
    %2459 = vmatpush1.msra.mxu0 %v2376
    %2460 = vmatprep.subr.mxu0 %v2381
    %2461 = vmatpush1.msra.mxu0 %v2380
    %2462 = vmatprep.subr.mxu0 %v2385
    %2463 = vmatpush1.msra.mxu0 %v2384
    %2464 = vmatprep.subr.mxu0 %v2389
    %2465 = vmatpush1.msra.mxu0 %v2388
    %2466 = vmatprep.subr.mxu0 %v2393
    %2467 = vmatpush1.msra.mxu0 %v2392
    %2468 = vmatprep.subr.mxu0 %v2397
    %2469 = vmatpush1.msra.mxu0 %v2396
    %2470 = vmatprep.subr.mxu0 %v2401
    %2471 = vmatpush1.msra.mxu0 %v2400
    %2472 = vmatprep.subr.mxu0 %v2405
    %2473 = vmatpush1.msra.mxu0 %v2404
    %2474 = vmatprep.subr.mxu0 %v2409
    %2475 = vmatpush1.msra.mxu0 %v2408
    %2476 = vmatprep.subr.mxu0 %v2413
    %2477 = vmatpush1.msra.mxu0 %v2412
    %2478 = vmatprep.subr.mxu0 %v2417
    %2479 = vmatpush1.msra.mxu0 %v2416
    %2480 = vmatprep.subr.mxu0 %v2421
    %2481 = vmatpush1.msra.mxu0 %v2420
    %2482 = vmatprep.subr.mxu0 %v2425
    %2483 = vmatpush1.msra.mxu0 %v2424
    %2484 = vmatprep.subr.mxu0 %v2429
    %2485 = vmatpush1.msra.mxu0 %v2428
    %2486 = vmatprep.subr.mxu0 0.0
    %2487 = vmatpush1.msra.mxu0 0.0
    %2488 = vmatprep.subr.mxu0 0.0
    %2489 = vmatpush1.msra.mxu0 0.0
    %2490 = vmatprep.subr.mxu0 0.0
    %2491 = vmatpush1.msra.mxu0 0.0
    %2492 = vmatprep.subr.mxu0 0.0
    %2493 = vmatpush1.msra.mxu0 0.0
    %2494 = vmatprep.subr.mxu0 0.0
    %2495 = vmatpush1.msra.mxu0 0.0
    %2496 = vmatprep.subr.mxu0 0.0
    %2497 = vmatpush1.msra.mxu0 0.0
    %2498 = vmatprep.subr.mxu0 0.0
    %2499 = vmatpush1.msra.mxu0 0.0
    %2500 = vmatprep.subr.mxu0 0.0
    %2501 = vmatpush1.msra.mxu0 0.0
    %2502 = vmatprep.subr.mxu0 0.0
    %2503 = vmatpush1.msra.mxu0 0.0
    %2504 = vmatprep.subr.mxu0 0.0
    %2505 = vmatpush1.msra.mxu0 0.0
    %2506 = vmatprep.subr.mxu0 0.0
    %2507 = vmatpush1.msra.mxu0 0.0
    %2508 = vmatprep.subr.mxu0 0.0
    %2509 = vmatpush1.msra.mxu0 0.0
    %2510 = vmatprep.subr.mxu0 0.0
    %2511 = vmatpush1.msra.mxu0 0.0
    %2512 = vmatprep.subr.mxu0 0.0
    %2513 = vmatpush1.msra.mxu0 0.0
    %2514 = vmatprep.subr.mxu0 0.0
    %2515 = vmatpush1.msra.mxu0 0.0
    %2516 = vmatprep.subr.mxu0 0.0
    %2517 = vmatpush1.msra.mxu0 0.0
    %2518 = vmatprep.mubr.f32.mxu0 0.0
    %2519 = vmatmul.mubr.f32.gmra.mrb[0].mxu0 %v2366
    %v2520 = vpop.f32.mrb[0].mxu0
    %v2521 = vadd.f32 %v2437, %v2520
    %v2522 = vpop.f32.mrb[0].mxu0
    %v2523 = vadd.f32 %v2441, %v2522
    %2524 = vmatprep.mubr.f32.mxu0 0.0
    %2525 = vmatmul.mubr.f32.gmra.mrb[0].mxu0 %v2367
    %v2526 = vpop.f32.mrb[0].mxu0
    %v2527 = vadd.f32 %v2437, %v2526
    %v2528 = vpop.f32.mrb[0].mxu0
    %v2529 = vadd.f32 %v2441, %v2528
    %2530 = vdwg.mxu0
    %2531 = vmatprep.subr.mxu0 %v2371
    %2532 = vmatpush1.msra.mxu0 %v2370
    %2533 = vmatprep.subr.mxu0 %v2375
    %2534 = vmatpush1.msra.mxu0 %v2374
    %2535 = vmatprep.subr.mxu0 %v2379
    %2536 = vmatpush1.msra.mxu0 %v2378
    %2537 = vmatprep.subr.mxu0 %v2383
    %2538 = vmatpush1.msra.mxu0 %v2382
    %2539 = vmatprep.subr.mxu0 %v2387
    %2540 = vmatpush1.msra.mxu0 %v2386
    %2541 = vmatprep.subr.mxu0 %v2391
    %2542 = vmatpush1.msra.mxu0 %v2390
    %2543 = vmatprep.subr.mxu0 %v2395
    %2544 = vmatpush1.msra.mxu0 %v2394
    %2545 = vmatprep.subr.mxu0 %v2399
    %2546 = vmatpush1.msra.mxu0 %v2398
    %2547 = vmatprep.subr.mxu0 %v2403
    %2548 = vmatpush1.msra.mxu0 %v2402
    %2549 = vmatprep.subr.mxu0 %v2407
    %2550 = vmatpush1.msra.mxu0 %v2406
    %2551 = vmatprep.subr.mxu0 %v2411
    %2552 = vmatpush1.msra.mxu0 %v2410
    %2553 = vmatprep.subr.mxu0 %v2415
    %2554 = vmatpush1.msra.mxu0 %v2414
    %2555 = vmatprep.subr.mxu0 %v2419
    %2556 = vmatpush1.msra.mxu0 %v2418
    %2557 = vmatprep.subr.mxu0 %v2423
    %2558 = vmatpush1.msra.mxu0 %v2422
    %2559 = vmatprep.subr.mxu0 %v2427
    %2560 = vmatpush1.msra.mxu0 %v2426
    %2561 = vmatprep.subr.mxu0 %v2431
    %2562 = vmatpush1.msra.mxu0 %v2430
    %2563 = vmatprep.subr.mxu0 0.0
    %2564 = vmatpush1.msra.mxu0 0.0
    %2565 = vmatprep.subr.mxu0 0.0
    %2566 = vmatpush1.msra.mxu0 0.0
    %2567 = vmatprep.subr.mxu0 0.0
    %2568 = vmatpush1.msra.mxu0 0.0
    %2569 = vmatprep.subr.mxu0 0.0
    %2570 = vmatpush1.msra.mxu0 0.0
    %2571 = vmatprep.subr.mxu0 0.0
    %2572 = vmatpush1.msra.mxu0 0.0
    %2573 = vmatprep.subr.mxu0 0.0
    %2574 = vmatpush1.msra.mxu0 0.0
    %2575 = vmatprep.subr.mxu0 0.0
    %2576 = vmatpush1.msra.mxu0 0.0
    %2577 = vmatprep.subr.mxu0 0.0
    %2578 = vmatpush1.msra.mxu0 0.0
    %2579 = vmatprep.subr.mxu0 0.0
    %2580 = vmatpush1.msra.mxu0 0.0
    %2581 = vmatprep.subr.mxu0 0.0
    %2582 = vmatpush1.msra.mxu0 0.0
    %2583 = vmatprep.subr.mxu0 0.0
    %2584 = vmatpush1.msra.mxu0 0.0
    %2585 = vmatprep.subr.mxu0 0.0
    %2586 = vmatpush1.msra.mxu0 0.0
    %2587 = vmatprep.subr.mxu0 0.0
    %2588 = vmatpush1.msra.mxu0 0.0
    %2589 = vmatprep.subr.mxu0 0.0
    %2590 = vmatpush1.msra.mxu0 0.0
    %2591 = vmatprep.subr.mxu0 0.0
    %2592 = vmatpush1.msra.mxu0 0.0
    %2593 = vmatprep.subr.mxu0 0.0
    %2594 = vmatpush1.msra.mxu0 0.0
    %2595 = vmatprep.mubr.f32.mxu0 0.0
    %2596 = vmatmul.mubr.f32.gmra.mrb[0].mxu0 %v2366
    %v2597 = vpop.f32.mrb[0].mxu0
    %v2598 = vadd.f32 %v2445, %v2597
    %v2599 = vpop.f32.mrb[0].mxu0
    %v2600 = vadd.f32 %v2449, %v2599
    %2601 = vmatprep.mubr.f32.mxu0 0.0
    %2602 = vmatmul.mubr.f32.gmra.mrb[0].mxu0 %v2367
    %v2603 = vpop.f32.mrb[0].mxu0
    %v2604 = vadd.f32 %v2445, %v2603
    %v2605 = vpop.f32.mrb[0].mxu0
    %v2606 = vadd.f32 %v2449, %v2605
    %2607 = vdwg.mxu0
    %2608 = vst [vmem:[#allocation2] sm:$0xff] %v2521
    %2609 = vst [vmem:[#allocation2 + $0x8] sm:$0xff] %v2523
    %2610 = vst [vmem:[#allocation2 + $0x10] sm:$0xff] %v2598
    %2611 = vst [vmem:[#allocation2 + $0x18] sm:$0xff] %v2600
    %2612 = vst [vmem:[#allocation2 + $0x20] sm:$0xff] %v2527
    %2613 = vst [vmem:[#allocation2 + $0x28] sm:$0xff] %v2529
    %2614 = vst [vmem:[#allocation2 + $0x30] sm:$0xff] %v2604
    %2615 = vst [vmem:[#allocation2 + $0x38] sm:$0xff] %v2606
    %v2616 = vld [vmem:[#allocation2] sm:$0x3]
    %v2617 = vld [vmem:[#allocation2 + $0x8] sm:$0x3]
    %v2618 = vld [vmem:[#allocation2 + $0x10] sm:$0x3]
    %v2619 = vld [vmem:[#allocation2 + $0x18] sm:$0x3]
    %v2620 = vld [vmem:[#allocation10] sm:$0xff]
    %v2621 = vld [vmem:[#allocation10 + $0x8] sm:$0xff]
    %v2622 = vld [vmem:[#allocation10 + $0x10] sm:$0xff]
    %v2623 = vld [vmem:[#allocation10 + $0x18] sm:$0xff]
    %v2624 = vld [vmem:[#allocation10 + $0x20] sm:$0xff]
    %v2625 = vld [vmem:[#allocation10 + $0x28] sm:$0xff]
    %v2626 = vld [vmem:[#allocation10 + $0x30] sm:$0xff]
    %v2627 = vld [vmem:[#allocation10 + $0x38] sm:$0xff]
    %v2628 = vld [vmem:[#allocation10 + $0x40] sm:$0xff]
    %v2629 = vld [vmem:[#allocation10 + $0x48] sm:$0xff]
    %v2630 = vld [vmem:[#allocation10 + $0x50] sm:$0xff]
    %v2631 = vld [vmem:[#allocation10 + $0x58] sm:$0xff]
    %v2632 = vld [vmem:[#allocation10 + $0x60] sm:$0xff]
    %v2633 = vld [vmem:[#allocation10 + $0x68] sm:$0xff]
    %v2634 = vld [vmem:[#allocation10 + $0x70] sm:$0xff]
    %v2635 = vld [vmem:[#allocation10 + $0x78] sm:$0xff]
    %v2636 = vld [vmem:[#allocation10 + $0x80] sm:$0xff]
    %v2637 = vld [vmem:[#allocation10 + $0x88] sm:$0xff]
    %v2638 = vld [vmem:[#allocation10 + $0x90] sm:$0xff]
    %v2639 = vld [vmem:[#allocation10 + $0x98] sm:$0xff]
    %v2640 = vld [vmem:[#allocation10 + $0xa0] sm:$0xff]
    %v2641 = vld [vmem:[#allocation10 + $0xa8] sm:$0xff]
    %v2642 = vld [vmem:[#allocation10 + $0xb0] sm:$0xff]
    %v2643 = vld [vmem:[#allocation10 + $0xb8] sm:$0xff]
    %v2644 = vld [vmem:[#allocation10 + $0xc0] sm:$0xff]
    %v2645 = vld [vmem:[#allocation10 + $0xc8] sm:$0xff]
    %v2646 = vld [vmem:[#allocation10 + $0xd0] sm:$0xff]
    %v2647 = vld [vmem:[#allocation10 + $0xd8] sm:$0xff]
    %v2648 = vld [vmem:[#allocation10 + $0xe0] sm:$0xff]
    %v2649 = vld [vmem:[#allocation10 + $0xe8] sm:$0xff]
    %v2650 = vld [vmem:[#allocation10 + $0xf0] sm:$0xff]
    %v2651 = vld [vmem:[#allocation10 + $0xf8] sm:$0xff]
    %v2652 = vld [vmem:[#allocation10 + $0x100] sm:$0xff]
    %v2653 = vld [vmem:[#allocation10 + $0x108] sm:$0xff]
    %v2654 = vld [vmem:[#allocation10 + $0x110] sm:$0xff]
    %v2655 = vld [vmem:[#allocation10 + $0x118] sm:$0xff]
    %v2656 = vld [vmem:[#allocation10 + $0x120] sm:$0xff]
    %v2657 = vld [vmem:[#allocation10 + $0x128] sm:$0xff]
    %v2658 = vld [vmem:[#allocation10 + $0x130] sm:$0xff]
    %v2659 = vld [vmem:[#allocation10 + $0x138] sm:$0xff]
    %v2660 = vld [vmem:[#allocation10 + $0x140] sm:$0xff]
    %v2661 = vld [vmem:[#allocation10 + $0x148] sm:$0xff]
    %v2662 = vld [vmem:[#allocation10 + $0x150] sm:$0xff]
    %v2663 = vld [vmem:[#allocation10 + $0x158] sm:$0xff]
    %v2664 = vld [vmem:[#allocation10 + $0x160] sm:$0xff]
    %v2665 = vld [vmem:[#allocation10 + $0x168] sm:$0xff]
    %v2666 = vld [vmem:[#allocation10 + $0x170] sm:$0xff]
    %v2667 = vld [vmem:[#allocation10 + $0x178] sm:$0xff]
    %v2668 = vld [vmem:[#allocation10 + $0x180] sm:$0xff]
    %v2669 = vld [vmem:[#allocation10 + $0x188] sm:$0xff]
    %v2670 = vld [vmem:[#allocation10 + $0x190] sm:$0xff]
    %v2671 = vld [vmem:[#allocation10 + $0x198] sm:$0xff]
    %v2672 = vld [vmem:[#allocation10 + $0x1a0] sm:$0xff]
    %v2673 = vld [vmem:[#allocation10 + $0x1a8] sm:$0xff]
    %v2674 = vld [vmem:[#allocation10 + $0x1b0] sm:$0xff]
    %v2675 = vld [vmem:[#allocation10 + $0x1b8] sm:$0xff]
    %v2676 = vld [vmem:[#allocation10 + $0x1c0] sm:$0xff]
    %v2677 = vld [vmem:[#allocation10 + $0x1c8] sm:$0xff]
    %v2678 = vld [vmem:[#allocation10 + $0x1d0] sm:$0xff]
    %v2679 = vld [vmem:[#allocation10 + $0x1d8] sm:$0xff]
    %v2680 = vld [vmem:[#allocation10 + $0x1e0] sm:$0xff]
    %v2681 = vld [vmem:[#allocation10 + $0x1e8] sm:$0xff]
    %v2682 = vld [vmem:[#allocation10 + $0x1f0] sm:$0xff]
    %v2683 = vld [vmem:[#allocation10 + $0x1f8] sm:$0xff]
    %2684 = vmatprep.subr.mxu0 %v2621
    %2685 = vmatpush1.msra.mxu0 %v2620
    %2686 = vmatprep.subr.mxu0 %v2625
    %2687 = vmatpush1.msra.mxu0 %v2624
    %2688 = vmatprep.subr.mxu0 %v2629
    %2689 = vmatpush1.msra.mxu0 %v2628
    %2690 = vmatprep.subr.mxu0 %v2633
    %2691 = vmatpush1.msra.mxu0 %v2632
    %2692 = vmatprep.subr.mxu0 %v2637
    %2693 = vmatpush1.msra.mxu0 %v2636
    %2694 = vmatprep.subr.mxu0 %v2641
    %2695 = vmatpush1.msra.mxu0 %v2640
    %2696 = vmatprep.subr.mxu0 %v2645
    %2697 = vmatpush1.msra.mxu0 %v2644
    %2698 = vmatprep.subr.mxu0 %v2649
    %2699 = vmatpush1.msra.mxu0 %v2648
    %2700 = vmatprep.subr.mxu0 %v2653
    %2701 = vmatpush1.msra.mxu0 %v2652
    %2702 = vmatprep.subr.mxu0 %v2657
    %2703 = vmatpush1.msra.mxu0 %v2656
    %2704 = vmatprep.subr.mxu0 %v2661
    %2705 = vmatpush1.msra.mxu0 %v2660
    %2706 = vmatprep.subr.mxu0 %v2665
    %2707 = vmatpush1.msra.mxu0 %v2664
    %2708 = vmatprep.subr.mxu0 %v2669
    %2709 = vmatpush1.msra.mxu0 %v2668
    %2710 = vmatprep.subr.mxu0 %v2673
    %2711 = vmatpush1.msra.mxu0 %v2672
    %2712 = vmatprep.subr.mxu0 %v2677
    %2713 = vmatpush1.msra.mxu0 %v2676
    %2714 = vmatprep.subr.mxu0 %v2681
    %2715 = vmatpush1.msra.mxu0 %v2680
    %2716 = vmatprep.subr.mxu0 0.0
    %2717 = vmatpush1.msra.mxu0 0.0
    %2718 = vmatprep.subr.mxu0 0.0
    %2719 = vmatpush1.msra.mxu0 0.0
    %2720 = vmatprep.subr.mxu0 0.0
    %2721 = vmatpush1.msra.mxu0 0.0
    %2722 = vmatprep.subr.mxu0 0.0
    %2723 = vmatpush1.msra.mxu0 0.0
    %2724 = vmatprep.subr.mxu0 0.0
    %2725 = vmatpush1.msra.mxu0 0.0
    %2726 = vmatprep.subr.mxu0 0.0
    %2727 = vmatpush1.msra.mxu0 0.0
    %2728 = vmatprep.subr.mxu0 0.0
    %2729 = vmatpush1.msra.mxu0 0.0
    %2730 = vmatprep.subr.mxu0 0.0
    %2731 = vmatpush1.msra.mxu0 0.0
    %2732 = vmatprep.subr.mxu0 0.0
    %2733 = vmatpush1.msra.mxu0 0.0
    %2734 = vmatprep.subr.mxu0 0.0
    %2735 = vmatpush1.msra.mxu0 0.0
    %2736 = vmatprep.subr.mxu0 0.0
    %2737 = vmatpush1.msra.mxu0 0.0
    %2738 = vmatprep.subr.mxu0 0.0
    %2739 = vmatpush1.msra.mxu0 0.0
    %2740 = vmatprep.subr.mxu0 0.0
    %2741 = vmatpush1.msra.mxu0 0.0
    %2742 = vmatprep.subr.mxu0 0.0
    %2743 = vmatpush1.msra.mxu0 0.0
    %2744 = vmatprep.subr.mxu0 0.0
    %2745 = vmatpush1.msra.mxu0 0.0
    %2746 = vmatprep.subr.mxu0 0.0
    %2747 = vmatpush1.msra.mxu0 0.0
    %2748 = vmatprep.mubr.f32.mxu0 0.0
    %2749 = vmatmul.mubr.f32.gmra.mrb[0].mxu0 0.0
    %v2750 = vpop.f32.mrb[0].mxu0
    %v2751 = vadd.f32 0.0, %v2750
    %v2752 = vpop.f32.mrb[0].mxu0
    %v2753 = vadd.f32 0.0, %v2752
    %2754 = vdwg.mxu0
    %2755 = vmatprep.subr.mxu0 %v2623
    %2756 = vmatpush1.msra.mxu0 %v2622
    %2757 = vmatprep.subr.mxu0 %v2627
    %2758 = vmatpush1.msra.mxu0 %v2626
    %2759 = vmatprep.subr.mxu0 %v2631
    %2760 = vmatpush1.msra.mxu0 %v2630
    %2761 = vmatprep.subr.mxu0 %v2635
    %2762 = vmatpush1.msra.mxu0 %v2634
    %2763 = vmatprep.subr.mxu0 %v2639
    %2764 = vmatpush1.msra.mxu0 %v2638
    %2765 = vmatprep.subr.mxu0 %v2643
    %2766 = vmatpush1.msra.mxu0 %v2642
    %2767 = vmatprep.subr.mxu0 %v2647
    %2768 = vmatpush1.msra.mxu0 %v2646
    %2769 = vmatprep.subr.mxu0 %v2651
    %2770 = vmatpush1.msra.mxu0 %v2650
    %2771 = vmatprep.subr.mxu0 %v2655
    %2772 = vmatpush1.msra.mxu0 %v2654
    %2773 = vmatprep.subr.mxu0 %v2659
    %2774 = vmatpush1.msra.mxu0 %v2658
    %2775 = vmatprep.subr.mxu0 %v2663
    %2776 = vmatpush1.msra.mxu0 %v2662
    %2777 = vmatprep.subr.mxu0 %v2667
    %2778 = vmatpush1.msra.mxu0 %v2666
    %2779 = vmatprep.subr.mxu0 %v2671
    %2780 = vmatpush1.msra.mxu0 %v2670
    %2781 = vmatprep.subr.mxu0 %v2675
    %2782 = vmatpush1.msra.mxu0 %v2674
    %2783 = vmatprep.subr.mxu0 %v2679
    %2784 = vmatpush1.msra.mxu0 %v2678
    %2785 = vmatprep.subr.mxu0 %v2683
    %2786 = vmatpush1.msra.mxu0 %v2682
    %2787 = vmatprep.subr.mxu0 0.0
    %2788 = vmatpush1.msra.mxu0 0.0
    %2789 = vmatprep.subr.mxu0 0.0
    %2790 = vmatpush1.msra.mxu0 0.0
    %2791 = vmatprep.subr.mxu0 0.0
    %2792 = vmatpush1.msra.mxu0 0.0
    %2793 = vmatprep.subr.mxu0 0.0
    %2794 = vmatpush1.msra.mxu0 0.0
    %2795 = vmatprep.subr.mxu0 0.0
    %2796 = vmatpush1.msra.mxu0 0.0
    %2797 = vmatprep.subr.mxu0 0.0
    %2798 = vmatpush1.msra.mxu0 0.0
    %2799 = vmatprep.subr.mxu0 0.0
    %2800 = vmatpush1.msra.mxu0 0.0
    %2801 = vmatprep.subr.mxu0 0.0
    %2802 = vmatpush1.msra.mxu0 0.0
    %2803 = vmatprep.subr.mxu0 0.0
    %2804 = vmatpush1.msra.mxu0 0.0
    %2805 = vmatprep.subr.mxu0 0.0
    %2806 = vmatpush1.msra.mxu0 0.0
    %2807 = vmatprep.subr.mxu0 0.0
    %2808 = vmatpush1.msra.mxu0 0.0
    %2809 = vmatprep.subr.mxu0 0.0
    %2810 = vmatpush1.msra.mxu0 0.0
    %2811 = vmatprep.subr.mxu0 0.0
    %2812 = vmatpush1.msra.mxu0 0.0
    %2813 = vmatprep.subr.mxu0 0.0
    %2814 = vmatpush1.msra.mxu0 0.0
    %2815 = vmatprep.subr.mxu0 0.0
    %2816 = vmatpush1.msra.mxu0 0.0
    %2817 = vmatprep.subr.mxu0 0.0
    %2818 = vmatpush1.msra.mxu0 0.0
    %2819 = vmatprep.mubr.f32.mxu0 0.0
    %2820 = vmatmul.mubr.f32.gmra.mrb[0].mxu0 0.0
    %v2821 = vpop.f32.mrb[0].mxu0
    %v2822 = vadd.f32 0.0, %v2821
    %v2823 = vpop.f32.mrb[0].mxu0
    %v2824 = vadd.f32 0.0, %v2823
    %2825 = vdwg.mxu0
    %v2826 = vadd.f32 %v2616, %v2751
    %v2827 = vadd.f32 %v2617, %v2753
    %v2828 = vadd.f32 %v2618, %v2822
    %v2829 = vadd.f32 %v2619, %v2824
    %v2830 = vxor.u32 %v2826, 2147483648
    %v2831 = vmul.f32 %v2830, 1.442695
    %v2832 = vpow.pop %v2831
    %v2833 = vadd.f32 %v2832, 1.0
    %v2834 = vrcp.pop %v2833
    %v2835 = vmul.f32 1.0, %v2834
    %v2836 = vxor.u32 %v2827, 2147483648
    %v2837 = vmul.f32 %v2836, 1.442695
    %v2838 = vpow.pop %v2837
    %v2839 = vadd.f32 %v2838, 1.0
    %v2840 = vrcp.pop %v2839
    %v2841 = vmul.f32 1.0, %v2840
    %v2842 = vtanh.pop %v2828
    %v2843 = vxor.u32 %v2829, 2147483648
    %v2844 = vmul.f32 %v2843, 1.442695
    %v2845 = vpow.pop %v2844
    %v2846 = vadd.f32 %v2845, 1.0
    %v2847 = vrcp.pop %v2846
    %v2848 = vmul.f32 1.0, %v2847
    %v2849 = vmul.f32 %v2841, 0.0
    %v2850 = vmul.f32 %v2835, %v2842
    %v2851 = vadd.f32 %v2849, %v2850
    %v2852 = vtanh.pop %v2851
    %v2853 = vmul.f32 %v2848, %v2852
    %2854 = vst [vmem:[%s7] sm:$0x3] %v2853
    %v2855 = vld [vmem:[#allocation2] sm:$0xc]
    %v2856 = vld [vmem:[#allocation2 + $0x8] sm:$0xc]
    %v2857 = vld [vmem:[#allocation2 + $0x10] sm:$0xc]
    %v2858 = vld [vmem:[#allocation2 + $0x18] sm:$0xc]
    %v2859 = vld [vmem:[#allocation10] sm:$0xff]
    %v2860 = vld [vmem:[#allocation10 + $0x8] sm:$0xff]
    %v2861 = vld [vmem:[#allocation10 + $0x10] sm:$0xff]
    %v2862 = vld [vmem:[#allocation10 + $0x18] sm:$0xff]
    %v2863 = vld [vmem:[#allocation10 + $0x20] sm:$0xff]
    %v2864 = vld [vmem:[#allocation10 + $0x28] sm:$0xff]
    %v2865 = vld [vmem:[#allocation10 + $0x30] sm:$0xff]
    %v2866 = vld [vmem:[#allocation10 + $0x38] sm:$0xff]
    %v2867 = vld [vmem:[#allocation10 + $0x40] sm:$0xff]
    %v2868 = vld [vmem:[#allocation10 + $0x48] sm:$0xff]
    %v2869 = vld [vmem:[#allocation10 + $0x50] sm:$0xff]
    %v2870 = vld [vmem:[#allocation10 + $0x58] sm:$0xff]
    %v2871 = vld [vmem:[#allocation10 + $0x60] sm:$0xff]
    %v2872 = vld [vmem:[#allocation10 + $0x68] sm:$0xff]
    %v2873 = vld [vmem:[#allocation10 + $0x70] sm:$0xff]
    %v2874 = vld [vmem:[#allocation10 + $0x78] sm:$0xff]
    %v2875 = vld [vmem:[#allocation10 + $0x80] sm:$0xff]
    %v2876 = vld [vmem:[#allocation10 + $0x88] sm:$0xff]
    %v2877 = vld [vmem:[#allocation10 + $0x90] sm:$0xff]
    %v2878 = vld [vmem:[#allocation10 + $0x98] sm:$0xff]
    %v2879 = vld [vmem:[#allocation10 + $0xa0] sm:$0xff]
    %v2880 = vld [vmem:[#allocation10 + $0xa8] sm:$0xff]
    %v2881 = vld [vmem:[#allocation10 + $0xb0] sm:$0xff]
    %v2882 = vld [vmem:[#allocation10 + $0xb8] sm:$0xff]
    %v2883 = vld [vmem:[#allocation10 + $0xc0] sm:$0xff]
    %v2884 = vld [vmem:[#allocation10 + $0xc8] sm:$0xff]
    %v2885 = vld [vmem:[#allocation10 + $0xd0] sm:$0xff]
    %v2886 = vld [vmem:[#allocation10 + $0xd8] sm:$0xff]
    %v2887 = vld [vmem:[#allocation10 + $0xe0] sm:$0xff]
    %v2888 = vld [vmem:[#allocation10 + $0xe8] sm:$0xff]
    %v2889 = vld [vmem:[#allocation10 + $0xf0] sm:$0xff]
    %v2890 = vld [vmem:[#allocation10 + $0xf8] sm:$0xff]
    %v2891 = vld [vmem:[#allocation10 + $0x100] sm:$0xff]
    %v2892 = vld [vmem:[#allocation10 + $0x108] sm:$0xff]
    %v2893 = vld [vmem:[#allocation10 + $0x110] sm:$0xff]
    %v2894 = vld [vmem:[#allocation10 + $0x118] sm:$0xff]
    %v2895 = vld [vmem:[#allocation10 + $0x120] sm:$0xff]
    %v2896 = vld [vmem:[#allocation10 + $0x128] sm:$0xff]
    %v2897 = vld [vmem:[#allocation10 + $0x130] sm:$0xff]
    %v2898 = vld [vmem:[#allocation10 + $0x138] sm:$0xff]
    %v2899 = vld [vmem:[#allocation10 + $0x140] sm:$0xff]
    %v2900 = vld [vmem:[#allocation10 + $0x148] sm:$0xff]
    %v2901 = vld [vmem:[#allocation10 + $0x150] sm:$0xff]
    %v2902 = vld [vmem:[#allocation10 + $0x158] sm:$0xff]
    %v2903 = vld [vmem:[#allocation10 + $0x160] sm:$0xff]
    %v2904 = vld [vmem:[#allocation10 + $0x168] sm:$0xff]
    %v2905 = vld [vmem:[#allocation10 + $0x170] sm:$0xff]
    %v2906 = vld [vmem:[#allocation10 + $0x178] sm:$0xff]
    %v2907 = vld [vmem:[#allocation10 + $0x180] sm:$0xff]
    %v2908 = vld [vmem:[#allocation10 + $0x188] sm:$0xff]
    %v2909 = vld [vmem:[#allocation10 + $0x190] sm:$0xff]
    %v2910 = vld [vmem:[#allocation10 + $0x198] sm:$0xff]
    %v2911 = vld [vmem:[#allocation10 + $0x1a0] sm:$0xff]
    %v2912 = vld [vmem:[#allocation10 + $0x1a8] sm:$0xff]
    %v2913 = vld [vmem:[#allocation10 + $0x1b0] sm:$0xff]
    %v2914 = vld [vmem:[#allocation10 + $0x1b8] sm:$0xff]
    %v2915 = vld [vmem:[#allocation10 + $0x1c0] sm:$0xff]
    %v2916 = vld [vmem:[#allocation10 + $0x1c8] sm:$0xff]
    %v2917 = vld [vmem:[#allocation10 + $0x1d0] sm:$0xff]
    %v2918 = vld [vmem:[#allocation10 + $0x1d8] sm:$0xff]
    %v2919 = vld [vmem:[#allocation10 + $0x1e0] sm:$0xff]
    %v2920 = vld [vmem:[#allocation10 + $0x1e8] sm:$0xff]
    %v2921 = vld [vmem:[#allocation10 + $0x1f0] sm:$0xff]
    %v2922 = vld [vmem:[#allocation10 + $0x1f8] sm:$0xff]
    %2923 = vmatprep.subr.mxu0 %v2860
    %2924 = vmatpush1.msra.mxu0 %v2859
    %2925 = vmatprep.subr.mxu0 %v2864
    %2926 = vmatpush1.msra.mxu0 %v2863
    %2927 = vmatprep.subr.mxu0 %v2868
    %2928 = vmatpush1.msra.mxu0 %v2867
    %2929 = vmatprep.subr.mxu0 %v2872
    %2930 = vmatpush1.msra.mxu0 %v2871
    %2931 = vmatprep.subr.mxu0 %v2876
    %2932 = vmatpush1.msra.mxu0 %v2875
    %2933 = vmatprep.subr.mxu0 %v2880
    %2934 = vmatpush1.msra.mxu0 %v2879
    %2935 = vmatprep.subr.mxu0 %v2884
    %2936 = vmatpush1.msra.mxu0 %v2883
    %2937 = vmatprep.subr.mxu0 %v2888
    %2938 = vmatpush1.msra.mxu0 %v2887
    %2939 = vmatprep.subr.mxu0 %v2892
    %2940 = vmatpush1.msra.mxu0 %v2891
    %2941 = vmatprep.subr.mxu0 %v2896
    %2942 = vmatpush1.msra.mxu0 %v2895
    %2943 = vmatprep.subr.mxu0 %v2900
    %2944 = vmatpush1.msra.mxu0 %v2899
    %2945 = vmatprep.subr.mxu0 %v2904
    %2946 = vmatpush1.msra.mxu0 %v2903
    %2947 = vmatprep.subr.mxu0 %v2908
    %2948 = vmatpush1.msra.mxu0 %v2907
    %2949 = vmatprep.subr.mxu0 %v2912
    %2950 = vmatpush1.msra.mxu0 %v2911
    %2951 = vmatprep.subr.mxu0 %v2916
    %2952 = vmatpush1.msra.mxu0 %v2915
    %2953 = vmatprep.subr.mxu0 %v2920
    %2954 = vmatpush1.msra.mxu0 %v2919
    %2955 = vmatprep.subr.mxu0 0.0
    %2956 = vmatpush1.msra.mxu0 0.0
    %2957 = vmatprep.subr.mxu0 0.0
    %2958 = vmatpush1.msra.mxu0 0.0
    %2959 = vmatprep.subr.mxu0 0.0
    %2960 = vmatpush1.msra.mxu0 0.0
    %2961 = vmatprep.subr.mxu0 0.0
    %2962 = vmatpush1.msra.mxu0 0.0
    %2963 = vmatprep.subr.mxu0 0.0
    %2964 = vmatpush1.msra.mxu0 0.0
    %2965 = vmatprep.subr.mxu0 0.0
    %2966 = vmatpush1.msra.mxu0 0.0
    %2967 = vmatprep.subr.mxu0 0.0
    %2968 = vmatpush1.msra.mxu0 0.0
    %2969 = vmatprep.subr.mxu0 0.0
    %2970 = vmatpush1.msra.mxu0 0.0
    %2971 = vmatprep.subr.mxu0 0.0
    %2972 = vmatpush1.msra.mxu0 0.0
    %2973 = vmatprep.subr.mxu0 0.0
    %2974 = vmatpush1.msra.mxu0 0.0
    %2975 = vmatprep.subr.mxu0 0.0
    %2976 = vmatpush1.msra.mxu0 0.0
    %2977 = vmatprep.subr.mxu0 0.0
    %2978 = vmatpush1.msra.mxu0 0.0
    %2979 = vmatprep.subr.mxu0 0.0
    %2980 = vmatpush1.msra.mxu0 0.0
    %2981 = vmatprep.subr.mxu0 0.0
    %2982 = vmatpush1.msra.mxu0 0.0
    %2983 = vmatprep.subr.mxu0 0.0
    %2984 = vmatpush1.msra.mxu0 0.0
    %2985 = vmatprep.subr.mxu0 0.0
    %2986 = vmatpush1.msra.mxu0 0.0
    %2987 = vmatprep.mubr.f32.mxu0 0.0
    %2988 = vmatmul.mubr.f32.gmra.mrb[0].mxu0 %v2853
    %v2989 = vpop.f32.mrb[0].mxu0
    %v2990 = vadd.f32 0.0, %v2989
    %v2991 = vpop.f32.mrb[0].mxu0
    %v2992 = vadd.f32 0.0, %v2991
    %2993 = vdwg.mxu0
    %2994 = vmatprep.subr.mxu0 %v2862
    %2995 = vmatpush1.msra.mxu0 %v2861
    %2996 = vmatprep.subr.mxu0 %v2866
    %2997 = vmatpush1.msra.mxu0 %v2865
    %2998 = vmatprep.subr.mxu0 %v2870
    %2999 = vmatpush1.msra.mxu0 %v2869
    %3000 = vmatprep.subr.mxu0 %v2874
    %3001 = vmatpush1.msra.mxu0 %v2873
    %3002 = vmatprep.subr.mxu0 %v2878
    %3003 = vmatpush1.msra.mxu0 %v2877
    %3004 = vmatprep.subr.mxu0 %v2882
    %3005 = vmatpush1.msra.mxu0 %v2881
    %3006 = vmatprep.subr.mxu0 %v2886
    %3007 = vmatpush1.msra.mxu0 %v2885
    %3008 = vmatprep.subr.mxu0 %v2890
    %3009 = vmatpush1.msra.mxu0 %v2889
    %3010 = vmatprep.subr.mxu0 %v2894
    %3011 = vmatpush1.msra.mxu0 %v2893
    %3012 = vmatprep.subr.mxu0 %v2898
    %3013 = vmatpush1.msra.mxu0 %v2897
    %3014 = vmatprep.subr.mxu0 %v2902
    %3015 = vmatpush1.msra.mxu0 %v2901
    %3016 = vmatprep.subr.mxu0 %v2906
    %3017 = vmatpush1.msra.mxu0 %v2905
    %3018 = vmatprep.subr.mxu0 %v2910
    %3019 = vmatpush1.msra.mxu0 %v2909
    %3020 = vmatprep.subr.mxu0 %v2914
    %3021 = vmatpush1.msra.mxu0 %v2913
    %3022 = vmatprep.subr.mxu0 %v2918
    %3023 = vmatpush1.msra.mxu0 %v2917
    %3024 = vmatprep.subr.mxu0 %v2922
    %3025 = vmatpush1.msra.mxu0 %v2921
    %3026 = vmatprep.subr.mxu0 0.0
    %3027 = vmatpush1.msra.mxu0 0.0
    %3028 = vmatprep.subr.mxu0 0.0
    %3029 = vmatpush1.msra.mxu0 0.0
    %3030 = vmatprep.subr.mxu0 0.0
    %3031 = vmatpush1.msra.mxu0 0.0
    %3032 = vmatprep.subr.mxu0 0.0
    %3033 = vmatpush1.msra.mxu0 0.0
    %3034 = vmatprep.subr.mxu0 0.0
    %3035 = vmatpush1.msra.mxu0 0.0
    %3036 = vmatprep.subr.mxu0 0.0
    %3037 = vmatpush1.msra.mxu0 0.0
    %3038 = vmatprep.subr.mxu0 0.0
    %3039 = vmatpush1.msra.mxu0 0.0
    %3040 = vmatprep.subr.mxu0 0.0
    %3041 = vmatpush1.msra.mxu0 0.0
    %3042 = vmatprep.subr.mxu0 0.0
    %3043 = vmatpush1.msra.mxu0 0.0
    %3044 = vmatprep.subr.mxu0 0.0
    %3045 = vmatpush1.msra.mxu0 0.0
    %3046 = vmatprep.subr.mxu0 0.0
    %3047 = vmatpush1.msra.mxu0 0.0
    %3048 = vmatprep.subr.mxu0 0.0
    %3049 = vmatpush1.msra.mxu0 0.0
    %3050 = vmatprep.subr.mxu0 0.0
    %3051 = vmatpush1.msra.mxu0 0.0
    %3052 = vmatprep.subr.mxu0 0.0
    %3053 = vmatpush1.msra.mxu0 0.0
    %3054 = vmatprep.subr.mxu0 0.0
    %3055 = vmatpush1.msra.mxu0 0.0
    %3056 = vmatprep.subr.mxu0 0.0
    %3057 = vmatpush1.msra.mxu0 0.0
    %3058 = vmatprep.mubr.f32.mxu0 0.0
    %3059 = vmatmul.mubr.f32.gmra.mrb[0].mxu0 %v2853
    %v3060 = vpop.f32.mrb[0].mxu0
    %v3061 = vadd.f32 0.0, %v3060
    %v3062 = vpop.f32.mrb[0].mxu0
    %v3063 = vadd.f32 0.0, %v3062
    %3064 = vdwg.mxu0
    %v3069 = vrot.slane %v2990, 6
    %v3070 = vrot.slane %v2992, 6
    %v3071 = vrot.slane %v3061, 6
    %v3072 = vrot.slane %v3063, 6
    %v3077 = vadd.f32 %v2855, %v3069
    %v3078 = vadd.f32 %v2856, %v3070
    %v3079 = vadd.f32 %v2857, %v3071
    %v3080 = vadd.f32 %v2858, %v3072
    %v3081 = vxor.u32 %v3077, 2147483648
    %v3082 = vmul.f32 %v3081, 1.442695
    %v3083 = vpow.pop %v3082
    %v3084 = vadd.f32 %v3083, 1.0
    %v3085 = vrcp.pop %v3084
    %v3086 = vmul.f32 1.0, %v3085
    %v3087 = vxor.u32 %v3078, 2147483648
    %v3088 = vmul.f32 %v3087, 1.442695
    %v3089 = vpow.pop %v3088
    %v3090 = vadd.f32 %v3089, 1.0
    %v3091 = vrcp.pop %v3090
    %v3092 = vmul.f32 1.0, %v3091
    %v3093 = vtanh.pop %v3079
    %v3094 = vxor.u32 %v3080, 2147483648
    %v3095 = vmul.f32 %v3094, 1.442695
    %v3096 = vpow.pop %v3095
    %v3097 = vadd.f32 %v3096, 1.0
    %v3098 = vrcp.pop %v3097
    %v3099 = vmul.f32 1.0, %v3098
    %v3101 = vrot.slane %v2851, 6
    %v3103 = vmul.f32 %v3092, %v3101
    %v3104 = vmul.f32 %v3086, %v3093
    %v3105 = vadd.f32 %v3103, %v3104
    %v3106 = vtanh.pop %v3105
    %v3107 = vmul.f32 %v3099, %v3106
    %3108 = vst [vmem:[%s7] sm:$0xc] %v3107
    %v3109 = vld [vmem:[#allocation2] sm:$0x30]
    %v3110 = vld [vmem:[#allocation2 + $0x8] sm:$0x30]
    %v3111 = vld [vmem:[#allocation2 + $0x10] sm:$0x30]
    %v3112 = vld [vmem:[#allocation2 + $0x18] sm:$0x30]
    %v3113 = vld [vmem:[#allocation10] sm:$0xff]
    %v3114 = vld [vmem:[#allocation10 + $0x8] sm:$0xff]
    %v3115 = vld [vmem:[#allocation10 + $0x10] sm:$0xff]
    %v3116 = vld [vmem:[#allocation10 + $0x18] sm:$0xff]
    %v3117 = vld [vmem:[#allocation10 + $0x20] sm:$0xff]
    %v3118 = vld [vmem:[#allocation10 + $0x28] sm:$0xff]
    %v3119 = vld [vmem:[#allocation10 + $0x30] sm:$0xff]
    %v3120 = vld [vmem:[#allocation10 + $0x38] sm:$0xff]
    %v3121 = vld [vmem:[#allocation10 + $0x40] sm:$0xff]
    %v3122 = vld [vmem:[#allocation10 + $0x48] sm:$0xff]
    %v3123 = vld [vmem:[#allocation10 + $0x50] sm:$0xff]
    %v3124 = vld [vmem:[#allocation10 + $0x58] sm:$0xff]
    %v3125 = vld [vmem:[#allocation10 + $0x60] sm:$0xff]
    %v3126 = vld [vmem:[#allocation10 + $0x68] sm:$0xff]
    %v3127 = vld [vmem:[#allocation10 + $0x70] sm:$0xff]
    %v3128 = vld [vmem:[#allocation10 + $0x78] sm:$0xff]
    %v3129 = vld [vmem:[#allocation10 + $0x80] sm:$0xff]
    %v3130 = vld [vmem:[#allocation10 + $0x88] sm:$0xff]
    %v3131 = vld [vmem:[#allocation10 + $0x90] sm:$0xff]
    %v3132 = vld [vmem:[#allocation10 + $0x98] sm:$0xff]
    %v3133 = vld [vmem:[#allocation10 + $0xa0] sm:$0xff]
    %v3134 = vld [vmem:[#allocation10 + $0xa8] sm:$0xff]
    %v3135 = vld [vmem:[#allocation10 + $0xb0] sm:$0xff]
    %v3136 = vld [vmem:[#allocation10 + $0xb8] sm:$0xff]
    %v3137 = vld [vmem:[#allocation10 + $0xc0] sm:$0xff]
    %v3138 = vld [vmem:[#allocation10 + $0xc8] sm:$0xff]
    %v3139 = vld [vmem:[#allocation10 + $0xd0] sm:$0xff]
    %v3140 = vld [vmem:[#allocation10 + $0xd8] sm:$0xff]
    %v3141 = vld [vmem:[#allocation10 + $0xe0] sm:$0xff]
    %v3142 = vld [vmem:[#allocation10 + $0xe8] sm:$0xff]
    %v3143 = vld [vmem:[#allocation10 + $0xf0] sm:$0xff]
    %v3144 = vld [vmem:[#allocation10 + $0xf8] sm:$0xff]
    %v3145 = vld [vmem:[#allocation10 + $0x100] sm:$0xff]
    %v3146 = vld [vmem:[#allocation10 + $0x108] sm:$0xff]
    %v3147 = vld [vmem:[#allocation10 + $0x110] sm:$0xff]
    %v3148 = vld [vmem:[#allocation10 + $0x118] sm:$0xff]
    %v3149 = vld [vmem:[#allocation10 + $0x120] sm:$0xff]
    %v3150 = vld [vmem:[#allocation10 + $0x128] sm:$0xff]
    %v3151 = vld [vmem:[#allocation10 + $0x130] sm:$0xff]
    %v3152 = vld [vmem:[#allocation10 + $0x138] sm:$0xff]
    %v3153 = vld [vmem:[#allocation10 + $0x140] sm:$0xff]
    %v3154 = vld [vmem:[#allocation10 + $0x148] sm:$0xff]
    %v3155 = vld [vmem:[#allocation10 + $0x150] sm:$0xff]
    %v3156 = vld [vmem:[#allocation10 + $0x158] sm:$0xff]
    %v3157 = vld [vmem:[#allocation10 + $0x160] sm:$0xff]
    %v3158 = vld [vmem:[#allocation10 + $0x168] sm:$0xff]
    %v3159 = vld [vmem:[#allocation10 + $0x170] sm:$0xff]
    %v3160 = vld [vmem:[#allocation10 + $0x178] sm:$0xff]
    %v3161 = vld [vmem:[#allocation10 + $0x180] sm:$0xff]
    %v3162 = vld [vmem:[#allocation10 + $0x188] sm:$0xff]
    %v3163 = vld [vmem:[#allocation10 + $0x190] sm:$0xff]
    %v3164 = vld [vmem:[#allocation10 + $0x198] sm:$0xff]
    %v3165 = vld [vmem:[#allocation10 + $0x1a0] sm:$0xff]
    %v3166 = vld [vmem:[#allocation10 + $0x1a8] sm:$0xff]
    %v3167 = vld [vmem:[#allocation10 + $0x1b0] sm:$0xff]
    %v3168 = vld [vmem:[#allocation10 + $0x1b8] sm:$0xff]
    %v3169 = vld [vmem:[#allocation10 + $0x1c0] sm:$0xff]
    %v3170 = vld [vmem:[#allocation10 + $0x1c8] sm:$0xff]
    %v3171 = vld [vmem:[#allocation10 + $0x1d0] sm:$0xff]
    %v3172 = vld [vmem:[#allocation10 + $0x1d8] sm:$0xff]
    %v3173 = vld [vmem:[#allocation10 + $0x1e0] sm:$0xff]
    %v3174 = vld [vmem:[#allocation10 + $0x1e8] sm:$0xff]
    %v3175 = vld [vmem:[#allocation10 + $0x1f0] sm:$0xff]
    %v3176 = vld [vmem:[#allocation10 + $0x1f8] sm:$0xff]
    %v3178 = vrot.slane %v3107, 2
    %3180 = vmatprep.subr.mxu0 %v3114
    %3181 = vmatpush1.msra.mxu0 %v3113
    %3182 = vmatprep.subr.mxu0 %v3118
    %3183 = vmatpush1.msra.mxu0 %v3117
    %3184 = vmatprep.subr.mxu0 %v3122
    %3185 = vmatpush1.msra.mxu0 %v3121
    %3186 = vmatprep.subr.mxu0 %v3126
    %3187 = vmatpush1.msra.mxu0 %v3125
    %3188 = vmatprep.subr.mxu0 %v3130
    %3189 = vmatpush1.msra.mxu0 %v3129
    %3190 = vmatprep.subr.mxu0 %v3134
    %3191 = vmatpush1.msra.mxu0 %v3133
    %3192 = vmatprep.subr.mxu0 %v3138
    %3193 = vmatpush1.msra.mxu0 %v3137
    %3194 = vmatprep.subr.mxu0 %v3142
    %3195 = vmatpush1.msra.mxu0 %v3141
    %3196 = vmatprep.subr.mxu0 %v3146
    %3197 = vmatpush1.msra.mxu0 %v3145
    %3198 = vmatprep.subr.mxu0 %v3150
    %3199 = vmatpush1.msra.mxu0 %v3149
    %3200 = vmatprep.subr.mxu0 %v3154
    %3201 = vmatpush1.msra.mxu0 %v3153
    %3202 = vmatprep.subr.mxu0 %v3158
    %3203 = vmatpush1.msra.mxu0 %v3157
    %3204 = vmatprep.subr.mxu0 %v3162
    %3205 = vmatpush1.msra.mxu0 %v3161
    %3206 = vmatprep.subr.mxu0 %v3166
    %3207 = vmatpush1.msra.mxu0 %v3165
    %3208 = vmatprep.subr.mxu0 %v3170
    %3209 = vmatpush1.msra.mxu0 %v3169
    %3210 = vmatprep.subr.mxu0 %v3174
    %3211 = vmatpush1.msra.mxu0 %v3173
    %3212 = vmatprep.subr.mxu0 0.0
    %3213 = vmatpush1.msra.mxu0 0.0
    %3214 = vmatprep.subr.mxu0 0.0
    %3215 = vmatpush1.msra.mxu0 0.0
    %3216 = vmatprep.subr.mxu0 0.0
    %3217 = vmatpush1.msra.mxu0 0.0
    %3218 = vmatprep.subr.mxu0 0.0
    %3219 = vmatpush1.msra.mxu0 0.0
    %3220 = vmatprep.subr.mxu0 0.0
    %3221 = vmatpush1.msra.mxu0 0.0
    %3222 = vmatprep.subr.mxu0 0.0
    %3223 = vmatpush1.msra.mxu0 0.0
    %3224 = vmatprep.subr.mxu0 0.0
    %3225 = vmatpush1.msra.mxu0 0.0
    %3226 = vmatprep.subr.mxu0 0.0
    %3227 = vmatpush1.msra.mxu0 0.0
    %3228 = vmatprep.subr.mxu0 0.0
    %3229 = vmatpush1.msra.mxu0 0.0
    %3230 = vmatprep.subr.mxu0 0.0
    %3231 = vmatpush1.msra.mxu0 0.0
    %3232 = vmatprep.subr.mxu0 0.0
    %3233 = vmatpush1.msra.mxu0 0.0
    %3234 = vmatprep.subr.mxu0 0.0
    %3235 = vmatpush1.msra.mxu0 0.0
    %3236 = vmatprep.subr.mxu0 0.0
    %3237 = vmatpush1.msra.mxu0 0.0
    %3238 = vmatprep.subr.mxu0 0.0
    %3239 = vmatpush1.msra.mxu0 0.0
    %3240 = vmatprep.subr.mxu0 0.0
    %3241 = vmatpush1.msra.mxu0 0.0
    %3242 = vmatprep.subr.mxu0 0.0
    %3243 = vmatpush1.msra.mxu0 0.0
    %3244 = vmatprep.mubr.f32.mxu0 0.0
    %3245 = vmatmul.mubr.f32.gmra.mrb[0].mxu0 %v3178
    %v3246 = vpop.f32.mrb[0].mxu0
    %v3247 = vadd.f32 0.0, %v3246
    %v3248 = vpop.f32.mrb[0].mxu0
    %v3249 = vadd.f32 0.0, %v3248
    %3250 = vdwg.mxu0
    %3251 = vmatprep.subr.mxu0 %v3116
    %3252 = vmatpush1.msra.mxu0 %v3115
    %3253 = vmatprep.subr.mxu0 %v3120
    %3254 = vmatpush1.msra.mxu0 %v3119
    %3255 = vmatprep.subr.mxu0 %v3124
    %3256 = vmatpush1.msra.mxu0 %v3123
    %3257 = vmatprep.subr.mxu0 %v3128
    %3258 = vmatpush1.msra.mxu0 %v3127
    %3259 = vmatprep.subr.mxu0 %v3132
    %3260 = vmatpush1.msra.mxu0 %v3131
    %3261 = vmatprep.subr.mxu0 %v3136
    %3262 = vmatpush1.msra.mxu0 %v3135
    %3263 = vmatprep.subr.mxu0 %v3140
    %3264 = vmatpush1.msra.mxu0 %v3139
    %3265 = vmatprep.subr.mxu0 %v3144
    %3266 = vmatpush1.msra.mxu0 %v3143
    %3267 = vmatprep.subr.mxu0 %v3148
    %3268 = vmatpush1.msra.mxu0 %v3147
    %3269 = vmatprep.subr.mxu0 %v3152
    %3270 = vmatpush1.msra.mxu0 %v3151
    %3271 = vmatprep.subr.mxu0 %v3156
    %3272 = vmatpush1.msra.mxu0 %v3155
    %3273 = vmatprep.subr.mxu0 %v3160
    %3274 = vmatpush1.msra.mxu0 %v3159
    %3275 = vmatprep.subr.mxu0 %v3164
    %3276 = vmatpush1.msra.mxu0 %v3163
    %3277 = vmatprep.subr.mxu0 %v3168
    %3278 = vmatpush1.msra.mxu0 %v3167
    %3279 = vmatprep.subr.mxu0 %v3172
    %3280 = vmatpush1.msra.mxu0 %v3171
    %3281 = vmatprep.subr.mxu0 %v3176
    %3282 = vmatpush1.msra.mxu0 %v3175
    %3283 = vmatprep.subr.mxu0 0.0
    %3284 = vmatpush1.msra.mxu0 0.0
    %3285 = vmatprep.subr.mxu0 0.0
    %3286 = vmatpush1.msra.mxu0 0.0
    %3287 = vmatprep.subr.mxu0 0.0
    %3288 = vmatpush1.msra.mxu0 0.0
    %3289 = vmatprep.subr.mxu0 0.0
    %3290 = vmatpush1.msra.mxu0 0.0
    %3291 = vmatprep.subr.mxu0 0.0
    %3292 = vmatpush1.msra.mxu0 0.0
    %3293 = vmatprep.subr.mxu0 0.0
    %3294 = vmatpush1.msra.mxu0 0.0
    %3295 = vmatprep.subr.mxu0 0.0
    %3296 = vmatpush1.msra.mxu0 0.0
    %3297 = vmatprep.subr.mxu0 0.0
    %3298 = vmatpush1.msra.mxu0 0.0
    %3299 = vmatprep.subr.mxu0 0.0
    %3300 = vmatpush1.msra.mxu0 0.0
    %3301 = vmatprep.subr.mxu0 0.0
    %3302 = vmatpush1.msra.mxu0 0.0
    %3303 = vmatprep.subr.mxu0 0.0
    %3304 = vmatpush1.msra.mxu0 0.0
    %3305 = vmatprep.subr.mxu0 0.0
    %3306 = vmatpush1.msra.mxu0 0.0
    %3307 = vmatprep.subr.mxu0 0.0
    %3308 = vmatpush1.msra.mxu0 0.0
    %3309 = vmatprep.subr.mxu0 0.0
    %3310 = vmatpush1.msra.mxu0 0.0
    %3311 = vmatprep.subr.mxu0 0.0
    %3312 = vmatpush1.msra.mxu0 0.0
    %3313 = vmatprep.subr.mxu0 0.0
    %3314 = vmatpush1.msra.mxu0 0.0
    %3315 = vmatprep.mubr.f32.mxu0 0.0
    %3316 = vmatmul.mubr.f32.gmra.mrb[0].mxu0 %v3178
    %v3317 = vpop.f32.mrb[0].mxu0
    %v3318 = vadd.f32 0.0, %v3317
    %v3319 = vpop.f32.mrb[0].mxu0
    %v3320 = vadd.f32 0.0, %v3319
    %3321 = vdwg.mxu0
    %v3326 = vrot.slane %v3247, 4
    %v3327 = vrot.slane %v3249, 4
    %v3328 = vrot.slane %v3318, 4
    %v3329 = vrot.slane %v3320, 4
    %v3334 = vadd.f32 %v3109, %v3326
    %v3335 = vadd.f32 %v3110, %v3327
    %v3336 = vadd.f32 %v3111, %v3328
    %v3337 = vadd.f32 %v3112, %v3329
    %v3338 = vxor.u32 %v3334, 2147483648
    %v3339 = vmul.f32 %v3338, 1.442695
    %v3340 = vpow.pop %v3339
    %v3341 = vadd.f32 %v3340, 1.0
    %v3342 = vrcp.pop %v3341
    %v3343 = vmul.f32 1.0, %v3342
    %v3344 = vxor.u32 %v3335, 2147483648
    %v3345 = vmul.f32 %v3344, 1.442695
    %v3346 = vpow.pop %v3345
    %v3347 = vadd.f32 %v3346, 1.0
    %v3348 = vrcp.pop %v3347
    %v3349 = vmul.f32 1.0, %v3348
    %v3350 = vtanh.pop %v3336
    %v3351 = vxor.u32 %v3337, 2147483648
    %v3352 = vmul.f32 %v3351, 1.442695
    %v3353 = vpow.pop %v3352
    %v3354 = vadd.f32 %v3353, 1.0
    %v3355 = vrcp.pop %v3354
    %v3356 = vmul.f32 1.0, %v3355
    %v3358 = vrot.slane %v3105, 6
    %v3360 = vmul.f32 %v3349, %v3358
    %v3361 = vmul.f32 %v3343, %v3350
    %v3362 = vadd.f32 %v3360, %v3361
    %v3363 = vtanh.pop %v3362
    %v3364 = vmul.f32 %v3356, %v3363
    %3365 = vst [vmem:[%s7] sm:$0x30] %v3364
    %v3366 = vld [vmem:[#allocation2] sm:$0xc0]
    %v3367 = vld [vmem:[#allocation2 + $0x8] sm:$0xc0]
    %v3368 = vld [vmem:[#allocation2 + $0x10] sm:$0xc0]
    %v3369 = vld [vmem:[#allocation2 + $0x18] sm:$0xc0]
    %v3370 = vld [vmem:[#allocation10] sm:$0xff]
    %v3371 = vld [vmem:[#allocation10 + $0x8] sm:$0xff]
    %v3372 = vld [vmem:[#allocation10 + $0x10] sm:$0xff]
    %v3373 = vld [vmem:[#allocation10 + $0x18] sm:$0xff]
    %v3374 = vld [vmem:[#allocation10 + $0x20] sm:$0xff]
    %v3375 = vld [vmem:[#allocation10 + $0x28] sm:$0xff]
    %v3376 = vld [vmem:[#allocation10 + $0x30] sm:$0xff]
    %v3377 = vld [vmem:[#allocation10 + $0x38] sm:$0xff]
    %v3378 = vld [vmem:[#allocation10 + $0x40] sm:$0xff]
    %v3379 = vld [vmem:[#allocation10 + $0x48] sm:$0xff]
    %v3380 = vld [vmem:[#allocation10 + $0x50] sm:$0xff]
    %v3381 = vld [vmem:[#allocation10 + $0x58] sm:$0xff]
    %v3382 = vld [vmem:[#allocation10 + $0x60] sm:$0xff]
    %v3383 = vld [vmem:[#allocation10 + $0x68] sm:$0xff]
    %v3384 = vld [vmem:[#allocation10 + $0x70] sm:$0xff]
    %v3385 = vld [vmem:[#allocation10 + $0x78] sm:$0xff]
    %v3386 = vld [vmem:[#allocation10 + $0x80] sm:$0xff]
    %v3387 = vld [vmem:[#allocation10 + $0x88] sm:$0xff]
    %v3388 = vld [vmem:[#allocation10 + $0x90] sm:$0xff]
    %v3389 = vld [vmem:[#allocation10 + $0x98] sm:$0xff]
    %v3390 = vld [vmem:[#allocation10 + $0xa0] sm:$0xff]
    %v3391 = vld [vmem:[#allocation10 + $0xa8] sm:$0xff]
    %v3392 = vld [vmem:[#allocation10 + $0xb0] sm:$0xff]
    %v3393 = vld [vmem:[#allocation10 + $0xb8] sm:$0xff]
    %v3394 = vld [vmem:[#allocation10 + $0xc0] sm:$0xff]
    %v3395 = vld [vmem:[#allocation10 + $0xc8] sm:$0xff]
    %v3396 = vld [vmem:[#allocation10 + $0xd0] sm:$0xff]
    %v3397 = vld [vmem:[#allocation10 + $0xd8] sm:$0xff]
    %v3398 = vld [vmem:[#allocation10 + $0xe0] sm:$0xff]
    %v3399 = vld [vmem:[#allocation10 + $0xe8] sm:$0xff]
    %v3400 = vld [vmem:[#allocation10 + $0xf0] sm:$0xff]
    %v3401 = vld [vmem:[#allocation10 + $0xf8] sm:$0xff]
    %v3402 = vld [vmem:[#allocation10 + $0x100] sm:$0xff]
    %v3403 = vld [vmem:[#allocation10 + $0x108] sm:$0xff]
    %v3404 = vld [vmem:[#allocation10 + $0x110] sm:$0xff]
    %v3405 = vld [vmem:[#allocation10 + $0x118] sm:$0xff]
    %v3406 = vld [vmem:[#allocation10 + $0x120] sm:$0xff]
    %v3407 = vld [vmem:[#allocation10 + $0x128] sm:$0xff]
    %v3408 = vld [vmem:[#allocation10 + $0x130] sm:$0xff]
    %v3409 = vld [vmem:[#allocation10 + $0x138] sm:$0xff]
    %v3410 = vld [vmem:[#allocation10 + $0x140] sm:$0xff]
    %v3411 = vld [vmem:[#allocation10 + $0x148] sm:$0xff]
    %v3412 = vld [vmem:[#allocation10 + $0x150] sm:$0xff]
    %v3413 = vld [vmem:[#allocation10 + $0x158] sm:$0xff]
    %v3414 = vld [vmem:[#allocation10 + $0x160] sm:$0xff]
    %v3415 = vld [vmem:[#allocation10 + $0x168] sm:$0xff]
    %v3416 = vld [vmem:[#allocation10 + $0x170] sm:$0xff]
    %v3417 = vld [vmem:[#allocation10 + $0x178] sm:$0xff]
    %v3418 = vld [vmem:[#allocation10 + $0x180] sm:$0xff]
    %v3419 = vld [vmem:[#allocation10 + $0x188] sm:$0xff]
    %v3420 = vld [vmem:[#allocation10 + $0x190] sm:$0xff]
    %v3421 = vld [vmem:[#allocation10 + $0x198] sm:$0xff]
    %v3422 = vld [vmem:[#allocation10 + $0x1a0] sm:$0xff]
    %v3423 = vld [vmem:[#allocation10 + $0x1a8] sm:$0xff]
    %v3424 = vld [vmem:[#allocation10 + $0x1b0] sm:$0xff]
    %v3425 = vld [vmem:[#allocation10 + $0x1b8] sm:$0xff]
    %v3426 = vld [vmem:[#allocation10 + $0x1c0] sm:$0xff]
    %v3427 = vld [vmem:[#allocation10 + $0x1c8] sm:$0xff]
    %v3428 = vld [vmem:[#allocation10 + $0x1d0] sm:$0xff]
    %v3429 = vld [vmem:[#allocation10 + $0x1d8] sm:$0xff]
    %v3430 = vld [vmem:[#allocation10 + $0x1e0] sm:$0xff]
    %v3431 = vld [vmem:[#allocation10 + $0x1e8] sm:$0xff]
    %v3432 = vld [vmem:[#allocation10 + $0x1f0] sm:$0xff]
    %v3433 = vld [vmem:[#allocation10 + $0x1f8] sm:$0xff]
    %v3435 = vrot.slane %v3364, 4
    %3437 = vmatprep.subr.mxu0 %v3371
    %3438 = vmatpush1.msra.mxu0 %v3370
    %3439 = vmatprep.subr.mxu0 %v3375
    %3440 = vmatpush1.msra.mxu0 %v3374
    %3441 = vmatprep.subr.mxu0 %v3379
    %3442 = vmatpush1.msra.mxu0 %v3378
    %3443 = vmatprep.subr.mxu0 %v3383
    %3444 = vmatpush1.msra.mxu0 %v3382
    %3445 = vmatprep.subr.mxu0 %v3387
    %3446 = vmatpush1.msra.mxu0 %v3386
    %3447 = vmatprep.subr.mxu0 %v3391
    %3448 = vmatpush1.msra.mxu0 %v3390
    %3449 = vmatprep.subr.mxu0 %v3395
    %3450 = vmatpush1.msra.mxu0 %v3394
    %3451 = vmatprep.subr.mxu0 %v3399
    %3452 = vmatpush1.msra.mxu0 %v3398
    %3453 = vmatprep.subr.mxu0 %v3403
    %3454 = vmatpush1.msra.mxu0 %v3402
    %3455 = vmatprep.subr.mxu0 %v3407
    %3456 = vmatpush1.msra.mxu0 %v3406
    %3457 = vmatprep.subr.mxu0 %v3411
    %3458 = vmatpush1.msra.mxu0 %v3410
    %3459 = vmatprep.subr.mxu0 %v3415
    %3460 = vmatpush1.msra.mxu0 %v3414
    %3461 = vmatprep.subr.mxu0 %v3419
    %3462 = vmatpush1.msra.mxu0 %v3418
    %3463 = vmatprep.subr.mxu0 %v3423
    %3464 = vmatpush1.msra.mxu0 %v3422
    %3465 = vmatprep.subr.mxu0 %v3427
    %3466 = vmatpush1.msra.mxu0 %v3426
    %3467 = vmatprep.subr.mxu0 %v3431
    %3468 = vmatpush1.msra.mxu0 %v3430
    %3469 = vmatprep.subr.mxu0 0.0
    %3470 = vmatpush1.msra.mxu0 0.0
    %3471 = vmatprep.subr.mxu0 0.0
    %3472 = vmatpush1.msra.mxu0 0.0
    %3473 = vmatprep.subr.mxu0 0.0
    %3474 = vmatpush1.msra.mxu0 0.0
    %3475 = vmatprep.subr.mxu0 0.0
    %3476 = vmatpush1.msra.mxu0 0.0
    %3477 = vmatprep.subr.mxu0 0.0
    %3478 = vmatpush1.msra.mxu0 0.0
    %3479 = vmatprep.subr.mxu0 0.0
    %3480 = vmatpush1.msra.mxu0 0.0
    %3481 = vmatprep.subr.mxu0 0.0
    %3482 = vmatpush1.msra.mxu0 0.0
    %3483 = vmatprep.subr.mxu0 0.0
    %3484 = vmatpush1.msra.mxu0 0.0
    %3485 = vmatprep.subr.mxu0 0.0
    %3486 = vmatpush1.msra.mxu0 0.0
    %3487 = vmatprep.subr.mxu0 0.0
    %3488 = vmatpush1.msra.mxu0 0.0
    %3489 = vmatprep.subr.mxu0 0.0
    %3490 = vmatpush1.msra.mxu0 0.0
    %3491 = vmatprep.subr.mxu0 0.0
    %3492 = vmatpush1.msra.mxu0 0.0
    %3493 = vmatprep.subr.mxu0 0.0
    %3494 = vmatpush1.msra.mxu0 0.0
    %3495 = vmatprep.subr.mxu0 0.0
    %3496 = vmatpush1.msra.mxu0 0.0
    %3497 = vmatprep.subr.mxu0 0.0
    %3498 = vmatpush1.msra.mxu0 0.0
    %3499 = vmatprep.subr.mxu0 0.0
    %3500 = vmatpush1.msra.mxu0 0.0
    %3501 = vmatprep.mubr.f32.mxu0 0.0
    %3502 = vmatmul.mubr.f32.gmra.mrb[0].mxu0 %v3435
    %v3503 = vpop.f32.mrb[0].mxu0
    %v3504 = vadd.f32 0.0, %v3503
    %v3505 = vpop.f32.mrb[0].mxu0
    %v3506 = vadd.f32 0.0, %v3505
    %3507 = vdwg.mxu0
    %3508 = vmatprep.subr.mxu0 %v3373
    %3509 = vmatpush1.msra.mxu0 %v3372
    %3510 = vmatprep.subr.mxu0 %v3377
    %3511 = vmatpush1.msra.mxu0 %v3376
    %3512 = vmatprep.subr.mxu0 %v3381
    %3513 = vmatpush1.msra.mxu0 %v3380
    %3514 = vmatprep.subr.mxu0 %v3385
    %3515 = vmatpush1.msra.mxu0 %v3384
    %3516 = vmatprep.subr.mxu0 %v3389
    %3517 = vmatpush1.msra.mxu0 %v3388
    %3518 = vmatprep.subr.mxu0 %v3393
    %3519 = vmatpush1.msra.mxu0 %v3392
    %3520 = vmatprep.subr.mxu0 %v3397
    %3521 = vmatpush1.msra.mxu0 %v3396
    %3522 = vmatprep.subr.mxu0 %v3401
    %3523 = vmatpush1.msra.mxu0 %v3400
    %3524 = vmatprep.subr.mxu0 %v3405
    %3525 = vmatpush1.msra.mxu0 %v3404
    %3526 = vmatprep.subr.mxu0 %v3409
    %3527 = vmatpush1.msra.mxu0 %v3408
    %3528 = vmatprep.subr.mxu0 %v3413
    %3529 = vmatpush1.msra.mxu0 %v3412
    %3530 = vmatprep.subr.mxu0 %v3417
    %3531 = vmatpush1.msra.mxu0 %v3416
    %3532 = vmatprep.subr.mxu0 %v3421
    %3533 = vmatpush1.msra.mxu0 %v3420
    %3534 = vmatprep.subr.mxu0 %v3425
    %3535 = vmatpush1.msra.mxu0 %v3424
    %3536 = vmatprep.subr.mxu0 %v3429
    %3537 = vmatpush1.msra.mxu0 %v3428
    %3538 = vmatprep.subr.mxu0 %v3433
    %3539 = vmatpush1.msra.mxu0 %v3432
    %3540 = vmatprep.subr.mxu0 0.0
    %3541 = vmatpush1.msra.mxu0 0.0
    %3542 = vmatprep.subr.mxu0 0.0
    %3543 = vmatpush1.msra.mxu0 0.0
    %3544 = vmatprep.subr.mxu0 0.0
    %3545 = vmatpush1.msra.mxu0 0.0
    %3546 = vmatprep.subr.mxu0 0.0
    %3547 = vmatpush1.msra.mxu0 0.0
    %3548 = vmatprep.subr.mxu0 0.0
    %3549 = vmatpush1.msra.mxu0 0.0
    %3550 = vmatprep.subr.mxu0 0.0
    %3551 = vmatpush1.msra.mxu0 0.0
    %3552 = vmatprep.subr.mxu0 0.0
    %3553 = vmatpush1.msra.mxu0 0.0
    %3554 = vmatprep.subr.mxu0 0.0
    %3555 = vmatpush1.msra.mxu0 0.0
    %3556 = vmatprep.subr.mxu0 0.0
    %3557 = vmatpush1.msra.mxu0 0.0
    %3558 = vmatprep.subr.mxu0 0.0
    %3559 = vmatpush1.msra.mxu0 0.0
    %3560 = vmatprep.subr.mxu0 0.0
    %3561 = vmatpush1.msra.mxu0 0.0
    %3562 = vmatprep.subr.mxu0 0.0
    %3563 = vmatpush1.msra.mxu0 0.0
    %3564 = vmatprep.subr.mxu0 0.0
    %3565 = vmatpush1.msra.mxu0 0.0
    %3566 = vmatprep.subr.mxu0 0.0
    %3567 = vmatpush1.msra.mxu0 0.0
    %3568 = vmatprep.subr.mxu0 0.0
    %3569 = vmatpush1.msra.mxu0 0.0
    %3570 = vmatprep.subr.mxu0 0.0
    %3571 = vmatpush1.msra.mxu0 0.0
    %3572 = vmatprep.mubr.f32.mxu0 0.0
    %3573 = vmatmul.mubr.f32.gmra.mrb[0].mxu0 %v3435
    %v3574 = vpop.f32.mrb[0].mxu0
    %v3575 = vadd.f32 0.0, %v3574
    %v3576 = vpop.f32.mrb[0].mxu0
    %v3577 = vadd.f32 0.0, %v3576
    %3578 = vdwg.mxu0
    %v3583 = vrot.slane %v3504, 2
    %v3584 = vrot.slane %v3506, 2
    %v3585 = vrot.slane %v3575, 2
    %v3586 = vrot.slane %v3577, 2
    %v3591 = vadd.f32 %v3366, %v3583
    %v3592 = vadd.f32 %v3367, %v3584
    %v3593 = vadd.f32 %v3368, %v3585
    %v3594 = vadd.f32 %v3369, %v3586
    %v3595 = vxor.u32 %v3591, 2147483648
    %v3596 = vmul.f32 %v3595, 1.442695
    %v3597 = vpow.pop %v3596
    %v3598 = vadd.f32 %v3597, 1.0
    %v3599 = vrcp.pop %v3598
    %v3600 = vmul.f32 1.0, %v3599
    %v3601 = vxor.u32 %v3592, 2147483648
    %v3602 = vmul.f32 %v3601, 1.442695
    %v3603 = vpow.pop %v3602
    %v3604 = vadd.f32 %v3603, 1.0
    %v3605 = vrcp.pop %v3604
    %v3606 = vmul.f32 1.0, %v3605
    %v3607 = vtanh.pop %v3593
    %v3608 = vxor.u32 %v3594, 2147483648
    %v3609 = vmul.f32 %v3608, 1.442695
    %v3610 = vpow.pop %v3609
    %v3611 = vadd.f32 %v3610, 1.0
    %v3612 = vrcp.pop %v3611
    %v3613 = vmul.f32 1.0, %v3612
    %v3615 = vrot.slane %v3362, 6
    %v3617 = vmul.f32 %v3606, %v3615
    %v3618 = vmul.f32 %v3600, %v3607
    %v3619 = vadd.f32 %v3617, %v3618
    %v3620 = vtanh.pop %v3619
    %v3621 = vmul.f32 %v3613, %v3620
    %3622 = vst [vmem:[%s7] sm:$0xc0] %v3621
    %v3623 = vld [vmem:[#allocation2 + $0x20] sm:$0x3]
    %v3624 = vld [vmem:[#allocation2 + $0x28] sm:$0x3]
    %v3625 = vld [vmem:[#allocation2 + $0x30] sm:$0x3]
    %v3626 = vld [vmem:[#allocation2 + $0x38] sm:$0x3]
    %v3627 = vld [vmem:[#allocation10] sm:$0xff]
    %v3628 = vld [vmem:[#allocation10 + $0x8] sm:$0xff]
    %v3629 = vld [vmem:[#allocation10 + $0x10] sm:$0xff]
    %v3630 = vld [vmem:[#allocation10 + $0x18] sm:$0xff]
    %v3631 = vld [vmem:[#allocation10 + $0x20] sm:$0xff]
    %v3632 = vld [vmem:[#allocation10 + $0x28] sm:$0xff]
    %v3633 = vld [vmem:[#allocation10 + $0x30] sm:$0xff]
    %v3634 = vld [vmem:[#allocation10 + $0x38] sm:$0xff]
    %v3635 = vld [vmem:[#allocation10 + $0x40] sm:$0xff]
    %v3636 = vld [vmem:[#allocation10 + $0x48] sm:$0xff]
    %v3637 = vld [vmem:[#allocation10 + $0x50] sm:$0xff]
    %v3638 = vld [vmem:[#allocation10 + $0x58] sm:$0xff]
    %v3639 = vld [vmem:[#allocation10 + $0x60] sm:$0xff]
    %v3640 = vld [vmem:[#allocation10 + $0x68] sm:$0xff]
    %v3641 = vld [vmem:[#allocation10 + $0x70] sm:$0xff]
    %v3642 = vld [vmem:[#allocation10 + $0x78] sm:$0xff]
    %v3643 = vld [vmem:[#allocation10 + $0x80] sm:$0xff]
    %v3644 = vld [vmem:[#allocation10 + $0x88] sm:$0xff]
    %v3645 = vld [vmem:[#allocation10 + $0x90] sm:$0xff]
    %v3646 = vld [vmem:[#allocation10 + $0x98] sm:$0xff]
    %v3647 = vld [vmem:[#allocation10 + $0xa0] sm:$0xff]
    %v3648 = vld [vmem:[#allocation10 + $0xa8] sm:$0xff]
    %v3649 = vld [vmem:[#allocation10 + $0xb0] sm:$0xff]
    %v3650 = vld [vmem:[#allocation10 + $0xb8] sm:$0xff]
    %v3651 = vld [vmem:[#allocation10 + $0xc0] sm:$0xff]
    %v3652 = vld [vmem:[#allocation10 + $0xc8] sm:$0xff]
    %v3653 = vld [vmem:[#allocation10 + $0xd0] sm:$0xff]
    %v3654 = vld [vmem:[#allocation10 + $0xd8] sm:$0xff]
    %v3655 = vld [vmem:[#allocation10 + $0xe0] sm:$0xff]
    %v3656 = vld [vmem:[#allocation10 + $0xe8] sm:$0xff]
    %v3657 = vld [vmem:[#allocation10 + $0xf0] sm:$0xff]
    %v3658 = vld [vmem:[#allocation10 + $0xf8] sm:$0xff]
    %v3659 = vld [vmem:[#allocation10 + $0x100] sm:$0xff]
    %v3660 = vld [vmem:[#allocation10 + $0x108] sm:$0xff]
    %v3661 = vld [vmem:[#allocation10 + $0x110] sm:$0xff]
    %v3662 = vld [vmem:[#allocation10 + $0x118] sm:$0xff]
    %v3663 = vld [vmem:[#allocation10 + $0x120] sm:$0xff]
    %v3664 = vld [vmem:[#allocation10 + $0x128] sm:$0xff]
    %v3665 = vld [vmem:[#allocation10 + $0x130] sm:$0xff]
    %v3666 = vld [vmem:[#allocation10 + $0x138] sm:$0xff]
    %v3667 = vld [vmem:[#allocation10 + $0x140] sm:$0xff]
    %v3668 = vld [vmem:[#allocation10 + $0x148] sm:$0xff]
    %v3669 = vld [vmem:[#allocation10 + $0x150] sm:$0xff]
    %v3670 = vld [vmem:[#allocation10 + $0x158] sm:$0xff]
    %v3671 = vld [vmem:[#allocation10 + $0x160] sm:$0xff]
    %v3672 = vld [vmem:[#allocation10 + $0x168] sm:$0xff]
    %v3673 = vld [vmem:[#allocation10 + $0x170] sm:$0xff]
    %v3674 = vld [vmem:[#allocation10 + $0x178] sm:$0xff]
    %v3675 = vld [vmem:[#allocation10 + $0x180] sm:$0xff]
    %v3676 = vld [vmem:[#allocation10 + $0x188] sm:$0xff]
    %v3677 = vld [vmem:[#allocation10 + $0x190] sm:$0xff]
    %v3678 = vld [vmem:[#allocation10 + $0x198] sm:$0xff]
    %v3679 = vld [vmem:[#allocation10 + $0x1a0] sm:$0xff]
    %v3680 = vld [vmem:[#allocation10 + $0x1a8] sm:$0xff]
    %v3681 = vld [vmem:[#allocation10 + $0x1b0] sm:$0xff]
    %v3682 = vld [vmem:[#allocation10 + $0x1b8] sm:$0xff]
    %v3683 = vld [vmem:[#allocation10 + $0x1c0] sm:$0xff]
    %v3684 = vld [vmem:[#allocation10 + $0x1c8] sm:$0xff]
    %v3685 = vld [vmem:[#allocation10 + $0x1d0] sm:$0xff]
    %v3686 = vld [vmem:[#allocation10 + $0x1d8] sm:$0xff]
    %v3687 = vld [vmem:[#allocation10 + $0x1e0] sm:$0xff]
    %v3688 = vld [vmem:[#allocation10 + $0x1e8] sm:$0xff]
    %v3689 = vld [vmem:[#allocation10 + $0x1f0] sm:$0xff]
    %v3690 = vld [vmem:[#allocation10 + $0x1f8] sm:$0xff]
    %v3692 = vrot.slane %v3621, 6
    %3694 = vmatprep.subr.mxu0 %v3628
    %3695 = vmatpush1.msra.mxu0 %v3627
    %3696 = vmatprep.subr.mxu0 %v3632
    %3697 = vmatpush1.msra.mxu0 %v3631
    %3698 = vmatprep.subr.mxu0 %v3636
    %3699 = vmatpush1.msra.mxu0 %v3635
    %3700 = vmatprep.subr.mxu0 %v3640
    %3701 = vmatpush1.msra.mxu0 %v3639
    %3702 = vmatprep.subr.mxu0 %v3644
    %3703 = vmatpush1.msra.mxu0 %v3643
    %3704 = vmatprep.subr.mxu0 %v3648
    %3705 = vmatpush1.msra.mxu0 %v3647
    %3706 = vmatprep.subr.mxu0 %v3652
    %3707 = vmatpush1.msra.mxu0 %v3651
    %3708 = vmatprep.subr.mxu0 %v3656
    %3709 = vmatpush1.msra.mxu0 %v3655
    %3710 = vmatprep.subr.mxu0 %v3660
    %3711 = vmatpush1.msra.mxu0 %v3659
    %3712 = vmatprep.subr.mxu0 %v3664
    %3713 = vmatpush1.msra.mxu0 %v3663
    %3714 = vmatprep.subr.mxu0 %v3668
    %3715 = vmatpush1.msra.mxu0 %v3667
    %3716 = vmatprep.subr.mxu0 %v3672
    %3717 = vmatpush1.msra.mxu0 %v3671
    %3718 = vmatprep.subr.mxu0 %v3676
    %3719 = vmatpush1.msra.mxu0 %v3675
    %3720 = vmatprep.subr.mxu0 %v3680
    %3721 = vmatpush1.msra.mxu0 %v3679
    %3722 = vmatprep.subr.mxu0 %v3684
    %3723 = vmatpush1.msra.mxu0 %v3683
    %3724 = vmatprep.subr.mxu0 %v3688
    %3725 = vmatpush1.msra.mxu0 %v3687
    %3726 = vmatprep.subr.mxu0 0.0
    %3727 = vmatpush1.msra.mxu0 0.0
    %3728 = vmatprep.subr.mxu0 0.0
    %3729 = vmatpush1.msra.mxu0 0.0
    %3730 = vmatprep.subr.mxu0 0.0
    %3731 = vmatpush1.msra.mxu0 0.0
    %3732 = vmatprep.subr.mxu0 0.0
    %3733 = vmatpush1.msra.mxu0 0.0
    %3734 = vmatprep.subr.mxu0 0.0
    %3735 = vmatpush1.msra.mxu0 0.0
    %3736 = vmatprep.subr.mxu0 0.0
    %3737 = vmatpush1.msra.mxu0 0.0
    %3738 = vmatprep.subr.mxu0 0.0
    %3739 = vmatpush1.msra.mxu0 0.0
    %3740 = vmatprep.subr.mxu0 0.0
    %3741 = vmatpush1.msra.mxu0 0.0
    %3742 = vmatprep.subr.mxu0 0.0
    %3743 = vmatpush1.msra.mxu0 0.0
    %3744 = vmatprep.subr.mxu0 0.0
    %3745 = vmatpush1.msra.mxu0 0.0
    %3746 = vmatprep.subr.mxu0 0.0
    %3747 = vmatpush1.msra.mxu0 0.0
    %3748 = vmatprep.subr.mxu0 0.0
    %3749 = vmatpush1.msra.mxu0 0.0
    %3750 = vmatprep.subr.mxu0 0.0
    %3751 = vmatpush1.msra.mxu0 0.0
    %3752 = vmatprep.subr.mxu0 0.0
    %3753 = vmatpush1.msra.mxu0 0.0
    %3754 = vmatprep.subr.mxu0 0.0
    %3755 = vmatpush1.msra.mxu0 0.0
    %3756 = vmatprep.subr.mxu0 0.0
    %3757 = vmatpush1.msra.mxu0 0.0
    %3758 = vmatprep.mubr.f32.mxu0 0.0
    %3759 = vmatmul.mubr.f32.gmra.mrb[0].mxu0 %v3692
    %v3760 = vpop.f32.mrb[0].mxu0
    %v3761 = vadd.f32 0.0, %v3760
    %v3762 = vpop.f32.mrb[0].mxu0
    %v3763 = vadd.f32 0.0, %v3762
    %3764 = vdwg.mxu0
    %3765 = vmatprep.subr.mxu0 %v3630
    %3766 = vmatpush1.msra.mxu0 %v3629
    %3767 = vmatprep.subr.mxu0 %v3634
    %3768 = vmatpush1.msra.mxu0 %v3633
    %3769 = vmatprep.subr.mxu0 %v3638
    %3770 = vmatpush1.msra.mxu0 %v3637
    %3771 = vmatprep.subr.mxu0 %v3642
    %3772 = vmatpush1.msra.mxu0 %v3641
    %3773 = vmatprep.subr.mxu0 %v3646
    %3774 = vmatpush1.msra.mxu0 %v3645
    %3775 = vmatprep.subr.mxu0 %v3650
    %3776 = vmatpush1.msra.mxu0 %v3649
    %3777 = vmatprep.subr.mxu0 %v3654
    %3778 = vmatpush1.msra.mxu0 %v3653
    %3779 = vmatprep.subr.mxu0 %v3658
    %3780 = vmatpush1.msra.mxu0 %v3657
    %3781 = vmatprep.subr.mxu0 %v3662
    %3782 = vmatpush1.msra.mxu0 %v3661
    %3783 = vmatprep.subr.mxu0 %v3666
    %3784 = vmatpush1.msra.mxu0 %v3665
    %3785 = vmatprep.subr.mxu0 %v3670
    %3786 = vmatpush1.msra.mxu0 %v3669
    %3787 = vmatprep.subr.mxu0 %v3674
    %3788 = vmatpush1.msra.mxu0 %v3673
    %3789 = vmatprep.subr.mxu0 %v3678
    %3790 = vmatpush1.msra.mxu0 %v3677
    %3791 = vmatprep.subr.mxu0 %v3682
    %3792 = vmatpush1.msra.mxu0 %v3681
    %3793 = vmatprep.subr.mxu0 %v3686
    %3794 = vmatpush1.msra.mxu0 %v3685
    %3795 = vmatprep.subr.mxu0 %v3690
    %3796 = vmatpush1.msra.mxu0 %v3689
    %3797 = vmatprep.subr.mxu0 0.0
    %3798 = vmatpush1.msra.mxu0 0.0
    %3799 = vmatprep.subr.mxu0 0.0
    %3800 = vmatpush1.msra.mxu0 0.0
    %3801 = vmatprep.subr.mxu0 0.0
    %3802 = vmatpush1.msra.mxu0 0.0
    %3803 = vmatprep.subr.mxu0 0.0
    %3804 = vmatpush1.msra.mxu0 0.0
    %3805 = vmatprep.subr.mxu0 0.0
    %3806 = vmatpush1.msra.mxu0 0.0
    %3807 = vmatprep.subr.mxu0 0.0
    %3808 = vmatpush1.msra.mxu0 0.0
    %3809 = vmatprep.subr.mxu0 0.0
    %3810 = vmatpush1.msra.mxu0 0.0
    %3811 = vmatprep.subr.mxu0 0.0
    %3812 = vmatpush1.msra.mxu0 0.0
    %3813 = vmatprep.subr.mxu0 0.0
    %3814 = vmatpush1.msra.mxu0 0.0
    %3815 = vmatprep.subr.mxu0 0.0
    %3816 = vmatpush1.msra.mxu0 0.0
    %3817 = vmatprep.subr.mxu0 0.0
    %3818 = vmatpush1.msra.mxu0 0.0
    %3819 = vmatprep.subr.mxu0 0.0
    %3820 = vmatpush1.msra.mxu0 0.0
    %3821 = vmatprep.subr.mxu0 0.0
    %3822 = vmatpush1.msra.mxu0 0.0
    %3823 = vmatprep.subr.mxu0 0.0
    %3824 = vmatpush1.msra.mxu0 0.0
    %3825 = vmatprep.subr.mxu0 0.0
    %3826 = vmatpush1.msra.mxu0 0.0
    %3827 = vmatprep.subr.mxu0 0.0
    %3828 = vmatpush1.msra.mxu0 0.0
    %3829 = vmatprep.mubr.f32.mxu0 0.0
    %3830 = vmatmul.mubr.f32.gmra.mrb[0].mxu0 %v3692
    %v3831 = vpop.f32.mrb[0].mxu0
    %v3832 = vadd.f32 0.0, %v3831
    %v3833 = vpop.f32.mrb[0].mxu0
    %v3834 = vadd.f32 0.0, %v3833
    %3835 = vdwg.mxu0
    %v3836 = vadd.f32 %v3623, %v3761
    %v3837 = vadd.f32 %v3624, %v3763
    %v3838 = vadd.f32 %v3625, %v3832
    %v3839 = vadd.f32 %v3626, %v3834
    %v3840 = vxor.u32 %v3836, 2147483648
    %v3841 = vmul.f32 %v3840, 1.442695
    %v3842 = vpow.pop %v3841
    %v3843 = vadd.f32 %v3842, 1.0
    %v3844 = vrcp.pop %v3843
    %v3845 = vmul.f32 1.0, %v3844
    %v3846 = vxor.u32 %v3837, 2147483648
    %v3847 = vmul.f32 %v3846, 1.442695
    %v3848 = vpow.pop %v3847
    %v3849 = vadd.f32 %v3848, 1.0
    %v3850 = vrcp.pop %v3849
    %v3851 = vmul.f32 1.0, %v3850
    %v3852 = vtanh.pop %v3838
    %v3853 = vxor.u32 %v3839, 2147483648
    %v3854 = vmul.f32 %v3853, 1.442695
    %v3855 = vpow.pop %v3854
    %v3856 = vadd.f32 %v3855, 1.0
    %v3857 = vrcp.pop %v3856
    %v3858 = vmul.f32 1.0, %v3857
    %v3860 = vrot.slane %v3619, 6
    %v3862 = vmul.f32 %v3851, %v3860
    %v3863 = vmul.f32 %v3845, %v3852
    %v3864 = vadd.f32 %v3862, %v3863
    %v3865 = vtanh.pop %v3864
    %v3866 = vmul.f32 %v3858, %v3865
    %3867 = vst [vmem:[%s7 + $0x8] sm:$0x3] %v3866
    %v3868 = vld [vmem:[#allocation2 + $0x20] sm:$0xc]
    %v3869 = vld [vmem:[#allocation2 + $0x28] sm:$0xc]
    %v3870 = vld [vmem:[#allocation2 + $0x30] sm:$0xc]
    %v3871 = vld [vmem:[#allocation2 + $0x38] sm:$0xc]
    %v3872 = vld [vmem:[#allocation10] sm:$0xff]
    %v3873 = vld [vmem:[#allocation10 + $0x8] sm:$0xff]
    %v3874 = vld [vmem:[#allocation10 + $0x10] sm:$0xff]
    %v3875 = vld [vmem:[#allocation10 + $0x18] sm:$0xff]
    %v3876 = vld [vmem:[#allocation10 + $0x20] sm:$0xff]
    %v3877 = vld [vmem:[#allocation10 + $0x28] sm:$0xff]
    %v3878 = vld [vmem:[#allocation10 + $0x30] sm:$0xff]
    %v3879 = vld [vmem:[#allocation10 + $0x38] sm:$0xff]
    %v3880 = vld [vmem:[#allocation10 + $0x40] sm:$0xff]
    %v3881 = vld [vmem:[#allocation10 + $0x48] sm:$0xff]
    %v3882 = vld [vmem:[#allocation10 + $0x50] sm:$0xff]
    %v3883 = vld [vmem:[#allocation10 + $0x58] sm:$0xff]
    %v3884 = vld [vmem:[#allocation10 + $0x60] sm:$0xff]
    %v3885 = vld [vmem:[#allocation10 + $0x68] sm:$0xff]
    %v3886 = vld [vmem:[#allocation10 + $0x70] sm:$0xff]
    %v3887 = vld [vmem:[#allocation10 + $0x78] sm:$0xff]
    %v3888 = vld [vmem:[#allocation10 + $0x80] sm:$0xff]
    %v3889 = vld [vmem:[#allocation10 + $0x88] sm:$0xff]
    %v3890 = vld [vmem:[#allocation10 + $0x90] sm:$0xff]
    %v3891 = vld [vmem:[#allocation10 + $0x98] sm:$0xff]
    %v3892 = vld [vmem:[#allocation10 + $0xa0] sm:$0xff]
    %v3893 = vld [vmem:[#allocation10 + $0xa8] sm:$0xff]
    %v3894 = vld [vmem:[#allocation10 + $0xb0] sm:$0xff]
    %v3895 = vld [vmem:[#allocation10 + $0xb8] sm:$0xff]
    %v3896 = vld [vmem:[#allocation10 + $0xc0] sm:$0xff]
    %v3897 = vld [vmem:[#allocation10 + $0xc8] sm:$0xff]
    %v3898 = vld [vmem:[#allocation10 + $0xd0] sm:$0xff]
    %v3899 = vld [vmem:[#allocation10 + $0xd8] sm:$0xff]
    %v3900 = vld [vmem:[#allocation10 + $0xe0] sm:$0xff]
    %v3901 = vld [vmem:[#allocation10 + $0xe8] sm:$0xff]
    %v3902 = vld [vmem:[#allocation10 + $0xf0] sm:$0xff]
    %v3903 = vld [vmem:[#allocation10 + $0xf8] sm:$0xff]
    %v3904 = vld [vmem:[#allocation10 + $0x100] sm:$0xff]
    %v3905 = vld [vmem:[#allocation10 + $0x108] sm:$0xff]
    %v3906 = vld [vmem:[#allocation10 + $0x110] sm:$0xff]
    %v3907 = vld [vmem:[#allocation10 + $0x118] sm:$0xff]
    %v3908 = vld [vmem:[#allocation10 + $0x120] sm:$0xff]
    %v3909 = vld [vmem:[#allocation10 + $0x128] sm:$0xff]
    %v3910 = vld [vmem:[#allocation10 + $0x130] sm:$0xff]
    %v3911 = vld [vmem:[#allocation10 + $0x138] sm:$0xff]
    %v3912 = vld [vmem:[#allocation10 + $0x140] sm:$0xff]
    %v3913 = vld [vmem:[#allocation10 + $0x148] sm:$0xff]
    %v3914 = vld [vmem:[#allocation10 + $0x150] sm:$0xff]
    %v3915 = vld [vmem:[#allocation10 + $0x158] sm:$0xff]
    %v3916 = vld [vmem:[#allocation10 + $0x160] sm:$0xff]
    %v3917 = vld [vmem:[#allocation10 + $0x168] sm:$0xff]
    %v3918 = vld [vmem:[#allocation10 + $0x170] sm:$0xff]
    %v3919 = vld [vmem:[#allocation10 + $0x178] sm:$0xff]
    %v3920 = vld [vmem:[#allocation10 + $0x180] sm:$0xff]
    %v3921 = vld [vmem:[#allocation10 + $0x188] sm:$0xff]
    %v3922 = vld [vmem:[#allocation10 + $0x190] sm:$0xff]
    %v3923 = vld [vmem:[#allocation10 + $0x198] sm:$0xff]
    %v3924 = vld [vmem:[#allocation10 + $0x1a0] sm:$0xff]
    %v3925 = vld [vmem:[#allocation10 + $0x1a8] sm:$0xff]
    %v3926 = vld [vmem:[#allocation10 + $0x1b0] sm:$0xff]
    %v3927 = vld [vmem:[#allocation10 + $0x1b8] sm:$0xff]
    %v3928 = vld [vmem:[#allocation10 + $0x1c0] sm:$0xff]
    %v3929 = vld [vmem:[#allocation10 + $0x1c8] sm:$0xff]
    %v3930 = vld [vmem:[#allocation10 + $0x1d0] sm:$0xff]
    %v3931 = vld [vmem:[#allocation10 + $0x1d8] sm:$0xff]
    %v3932 = vld [vmem:[#allocation10 + $0x1e0] sm:$0xff]
    %v3933 = vld [vmem:[#allocation10 + $0x1e8] sm:$0xff]
    %v3934 = vld [vmem:[#allocation10 + $0x1f0] sm:$0xff]
    %v3935 = vld [vmem:[#allocation10 + $0x1f8] sm:$0xff]
    %3936 = vmatprep.subr.mxu0 %v3873
    %3937 = vmatpush1.msra.mxu0 %v3872
    %3938 = vmatprep.subr.mxu0 %v3877
    %3939 = vmatpush1.msra.mxu0 %v3876
    %3940 = vmatprep.subr.mxu0 %v3881
    %3941 = vmatpush1.msra.mxu0 %v3880
    %3942 = vmatprep.subr.mxu0 %v3885
    %3943 = vmatpush1.msra.mxu0 %v3884
    %3944 = vmatprep.subr.mxu0 %v3889
    %3945 = vmatpush1.msra.mxu0 %v3888
    %3946 = vmatprep.subr.mxu0 %v3893
    %3947 = vmatpush1.msra.mxu0 %v3892
    %3948 = vmatprep.subr.mxu0 %v3897
    %3949 = vmatpush1.msra.mxu0 %v3896
    %3950 = vmatprep.subr.mxu0 %v3901
    %3951 = vmatpush1.msra.mxu0 %v3900
    %3952 = vmatprep.subr.mxu0 %v3905
    %3953 = vmatpush1.msra.mxu0 %v3904
    %3954 = vmatprep.subr.mxu0 %v3909
    %3955 = vmatpush1.msra.mxu0 %v3908
    %3956 = vmatprep.subr.mxu0 %v3913
    %3957 = vmatpush1.msra.mxu0 %v3912
    %3958 = vmatprep.subr.mxu0 %v3917
    %3959 = vmatpush1.msra.mxu0 %v3916
    %3960 = vmatprep.subr.mxu0 %v3921
    %3961 = vmatpush1.msra.mxu0 %v3920
    %3962 = vmatprep.subr.mxu0 %v3925
    %3963 = vmatpush1.msra.mxu0 %v3924
    %3964 = vmatprep.subr.mxu0 %v3929
    %3965 = vmatpush1.msra.mxu0 %v3928
    %3966 = vmatprep.subr.mxu0 %v3933
    %3967 = vmatpush1.msra.mxu0 %v3932
    %3968 = vmatprep.subr.mxu0 0.0
    %3969 = vmatpush1.msra.mxu0 0.0
    %3970 = vmatprep.subr.mxu0 0.0
    %3971 = vmatpush1.msra.mxu0 0.0
    %3972 = vmatprep.subr.mxu0 0.0
    %3973 = vmatpush1.msra.mxu0 0.0
    %3974 = vmatprep.subr.mxu0 0.0
    %3975 = vmatpush1.msra.mxu0 0.0
    %3976 = vmatprep.subr.mxu0 0.0
    %3977 = vmatpush1.msra.mxu0 0.0
    %3978 = vmatprep.subr.mxu0 0.0
    %3979 = vmatpush1.msra.mxu0 0.0
    %3980 = vmatprep.subr.mxu0 0.0
    %3981 = vmatpush1.msra.mxu0 0.0
    %3982 = vmatprep.subr.mxu0 0.0
    %3983 = vmatpush1.msra.mxu0 0.0
    %3984 = vmatprep.subr.mxu0 0.0
    %3985 = vmatpush1.msra.mxu0 0.0
    %3986 = vmatprep.subr.mxu0 0.0
    %3987 = vmatpush1.msra.mxu0 0.0
    %3988 = vmatprep.subr.mxu0 0.0
    %3989 = vmatpush1.msra.mxu0 0.0
    %3990 = vmatprep.subr.mxu0 0.0
    %3991 = vmatpush1.msra.mxu0 0.0
    %3992 = vmatprep.subr.mxu0 0.0
    %3993 = vmatpush1.msra.mxu0 0.0
    %3994 = vmatprep.subr.mxu0 0.0
    %3995 = vmatpush1.msra.mxu0 0.0
    %3996 = vmatprep.subr.mxu0 0.0
    %3997 = vmatpush1.msra.mxu0 0.0
    %3998 = vmatprep.subr.mxu0 0.0
    %3999 = vmatpush1.msra.mxu0 0.0
    %4000 = vmatprep.mubr.f32.mxu0 0.0
    %4001 = vmatmul.mubr.f32.gmra.mrb[0].mxu0 %v3866
    %v4002 = vpop.f32.mrb[0].mxu0
    %v4003 = vadd.f32 0.0, %v4002
    %v4004 = vpop.f32.mrb[0].mxu0
    %v4005 = vadd.f32 0.0, %v4004
    %4006 = vdwg.mxu0
    %4007 = vmatprep.subr.mxu0 %v3875
    %4008 = vmatpush1.msra.mxu0 %v3874
    %4009 = vmatprep.subr.mxu0 %v3879
    %4010 = vmatpush1.msra.mxu0 %v3878
    %4011 = vmatprep.subr.mxu0 %v3883
    %4012 = vmatpush1.msra.mxu0 %v3882
    %4013 = vmatprep.subr.mxu0 %v3887
    %4014 = vmatpush1.msra.mxu0 %v3886
    %4015 = vmatprep.subr.mxu0 %v3891
    %4016 = vmatpush1.msra.mxu0 %v3890
    %4017 = vmatprep.subr.mxu0 %v3895
    %4018 = vmatpush1.msra.mxu0 %v3894
    %4019 = vmatprep.subr.mxu0 %v3899
    %4020 = vmatpush1.msra.mxu0 %v3898
    %4021 = vmatprep.subr.mxu0 %v3903
    %4022 = vmatpush1.msra.mxu0 %v3902
    %4023 = vmatprep.subr.mxu0 %v3907
    %4024 = vmatpush1.msra.mxu0 %v3906
    %4025 = vmatprep.subr.mxu0 %v3911
    %4026 = vmatpush1.msra.mxu0 %v3910
    %4027 = vmatprep.subr.mxu0 %v3915
    %4028 = vmatpush1.msra.mxu0 %v3914
    %4029 = vmatprep.subr.mxu0 %v3919
    %4030 = vmatpush1.msra.mxu0 %v3918
    %4031 = vmatprep.subr.mxu0 %v3923
    %4032 = vmatpush1.msra.mxu0 %v3922
    %4033 = vmatprep.subr.mxu0 %v3927
    %4034 = vmatpush1.msra.mxu0 %v3926
    %4035 = vmatprep.subr.mxu0 %v3931
    %4036 = vmatpush1.msra.mxu0 %v3930
    %4037 = vmatprep.subr.mxu0 %v3935
    %4038 = vmatpush1.msra.mxu0 %v3934
    %4039 = vmatprep.subr.mxu0 0.0
    %4040 = vmatpush1.msra.mxu0 0.0
    %4041 = vmatprep.subr.mxu0 0.0
    %4042 = vmatpush1.msra.mxu0 0.0
    %4043 = vmatprep.subr.mxu0 0.0
    %4044 = vmatpush1.msra.mxu0 0.0
    %4045 = vmatprep.subr.mxu0 0.0
    %4046 = vmatpush1.msra.mxu0 0.0
    %4047 = vmatprep.subr.mxu0 0.0
    %4048 = vmatpush1.msra.mxu0 0.0
    %4049 = vmatprep.subr.mxu0 0.0
    %4050 = vmatpush1.msra.mxu0 0.0
    %4051 = vmatprep.subr.mxu0 0.0
    %4052 = vmatpush1.msra.mxu0 0.0
    %4053 = vmatprep.subr.mxu0 0.0
    %4054 = vmatpush1.msra.mxu0 0.0
    %4055 = vmatprep.subr.mxu0 0.0
    %4056 = vmatpush1.msra.mxu0 0.0
    %4057 = vmatprep.subr.mxu0 0.0
    %4058 = vmatpush1.msra.mxu0 0.0
    %4059 = vmatprep.subr.mxu0 0.0
    %4060 = vmatpush1.msra.mxu0 0.0
    %4061 = vmatprep.subr.mxu0 0.0
    %4062 = vmatpush1.msra.mxu0 0.0
    %4063 = vmatprep.subr.mxu0 0.0
    %4064 = vmatpush1.msra.mxu0 0.0
    %4065 = vmatprep.subr.mxu0 0.0
    %4066 = vmatpush1.msra.mxu0 0.0
    %4067 = vmatprep.subr.mxu0 0.0
    %4068 = vmatpush1.msra.mxu0 0.0
    %4069 = vmatprep.subr.mxu0 0.0
    %4070 = vmatpush1.msra.mxu0 0.0
    %4071 = vmatprep.mubr.f32.mxu0 0.0
    %4072 = vmatmul.mubr.f32.gmra.mrb[0].mxu0 %v3866
    %v4073 = vpop.f32.mrb[0].mxu0
    %v4074 = vadd.f32 0.0, %v4073
    %v4075 = vpop.f32.mrb[0].mxu0
    %v4076 = vadd.f32 0.0, %v4075
    %4077 = vdwg.mxu0
    %v4082 = vrot.slane %v4003, 6
    %v4083 = vrot.slane %v4005, 6
    %v4084 = vrot.slane %v4074, 6
    %v4085 = vrot.slane %v4076, 6
    %v4090 = vadd.f32 %v3868, %v4082
    %v4091 = vadd.f32 %v3869, %v4083
    %v4092 = vadd.f32 %v3870, %v4084
    %v4093 = vadd.f32 %v3871, %v4085
    %v4094 = vxor.u32 %v4090, 2147483648
    %v4095 = vmul.f32 %v4094, 1.442695
    %v4096 = vpow.pop %v4095
    %v4097 = vadd.f32 %v4096, 1.0
    %v4098 = vrcp.pop %v4097
    %v4099 = vmul.f32 1.0, %v4098
    %v4100 = vxor.u32 %v4091, 2147483648
    %v4101 = vmul.f32 %v4100, 1.442695
    %v4102 = vpow.pop %v4101
    %v4103 = vadd.f32 %v4102, 1.0
    %v4104 = vrcp.pop %v4103
    %v4105 = vmul.f32 1.0, %v4104
    %v4106 = vtanh.pop %v4092
    %v4107 = vxor.u32 %v4093, 2147483648
    %v4108 = vmul.f32 %v4107, 1.442695
    %v4109 = vpow.pop %v4108
    %v4110 = vadd.f32 %v4109, 1.0
    %v4111 = vrcp.pop %v4110
    %v4112 = vmul.f32 1.0, %v4111
    %v4114 = vrot.slane %v3864, 6
    %v4116 = vmul.f32 %v4105, %v4114
    %v4117 = vmul.f32 %v4099, %v4106
    %v4118 = vadd.f32 %v4116, %v4117
    %v4119 = vtanh.pop %v4118
    %v4120 = vmul.f32 %v4112, %v4119
    %4121 = vst [vmem:[%s7 + $0x8] sm:$0xc] %v4120
    %v4122 = vld [vmem:[#allocation2 + $0x20] sm:$0x30]
    %v4123 = vld [vmem:[#allocation2 + $0x28] sm:$0x30]
    %v4124 = vld [vmem:[#allocation2 + $0x30] sm:$0x30]
    %v4125 = vld [vmem:[#allocation2 + $0x38] sm:$0x30]
    %v4126 = vld [vmem:[#allocation10] sm:$0xff]
    %v4127 = vld [vmem:[#allocation10 + $0x8] sm:$0xff]
    %v4128 = vld [vmem:[#allocation10 + $0x10] sm:$0xff]
    %v4129 = vld [vmem:[#allocation10 + $0x18] sm:$0xff]
    %v4130 = vld [vmem:[#allocation10 + $0x20] sm:$0xff]
    %v4131 = vld [vmem:[#allocation10 + $0x28] sm:$0xff]
    %v4132 = vld [vmem:[#allocation10 + $0x30] sm:$0xff]
    %v4133 = vld [vmem:[#allocation10 + $0x38] sm:$0xff]
    %v4134 = vld [vmem:[#allocation10 + $0x40] sm:$0xff]
    %v4135 = vld [vmem:[#allocation10 + $0x48] sm:$0xff]
    %v4136 = vld [vmem:[#allocation10 + $0x50] sm:$0xff]
    %v4137 = vld [vmem:[#allocation10 + $0x58] sm:$0xff]
    %v4138 = vld [vmem:[#allocation10 + $0x60] sm:$0xff]
    %v4139 = vld [vmem:[#allocation10 + $0x68] sm:$0xff]
    %v4140 = vld [vmem:[#allocation10 + $0x70] sm:$0xff]
    %v4141 = vld [vmem:[#allocation10 + $0x78] sm:$0xff]
    %v4142 = vld [vmem:[#allocation10 + $0x80] sm:$0xff]
    %v4143 = vld [vmem:[#allocation10 + $0x88] sm:$0xff]
    %v4144 = vld [vmem:[#allocation10 + $0x90] sm:$0xff]
    %v4145 = vld [vmem:[#allocation10 + $0x98] sm:$0xff]
    %v4146 = vld [vmem:[#allocation10 + $0xa0] sm:$0xff]
    %v4147 = vld [vmem:[#allocation10 + $0xa8] sm:$0xff]
    %v4148 = vld [vmem:[#allocation10 + $0xb0] sm:$0xff]
    %v4149 = vld [vmem:[#allocation10 + $0xb8] sm:$0xff]
    %v4150 = vld [vmem:[#allocation10 + $0xc0] sm:$0xff]
    %v4151 = vld [vmem:[#allocation10 + $0xc8] sm:$0xff]
    %v4152 = vld [vmem:[#allocation10 + $0xd0] sm:$0xff]
    %v4153 = vld [vmem:[#allocation10 + $0xd8] sm:$0xff]
    %v4154 = vld [vmem:[#allocation10 + $0xe0] sm:$0xff]
    %v4155 = vld [vmem:[#allocation10 + $0xe8] sm:$0xff]
    %v4156 = vld [vmem:[#allocation10 + $0xf0] sm:$0xff]
    %v4157 = vld [vmem:[#allocation10 + $0xf8] sm:$0xff]
    %v4158 = vld [vmem:[#allocation10 + $0x100] sm:$0xff]
    %v4159 = vld [vmem:[#allocation10 + $0x108] sm:$0xff]
    %v4160 = vld [vmem:[#allocation10 + $0x110] sm:$0xff]
    %v4161 = vld [vmem:[#allocation10 + $0x118] sm:$0xff]
    %v4162 = vld [vmem:[#allocation10 + $0x120] sm:$0xff]
    %v4163 = vld [vmem:[#allocation10 + $0x128] sm:$0xff]
    %v4164 = vld [vmem:[#allocation10 + $0x130] sm:$0xff]
    %v4165 = vld [vmem:[#allocation10 + $0x138] sm:$0xff]
    %v4166 = vld [vmem:[#allocation10 + $0x140] sm:$0xff]
    %v4167 = vld [vmem:[#allocation10 + $0x148] sm:$0xff]
    %v4168 = vld [vmem:[#allocation10 + $0x150] sm:$0xff]
    %v4169 = vld [vmem:[#allocation10 + $0x158] sm:$0xff]
    %v4170 = vld [vmem:[#allocation10 + $0x160] sm:$0xff]
    %v4171 = vld [vmem:[#allocation10 + $0x168] sm:$0xff]
    %v4172 = vld [vmem:[#allocation10 + $0x170] sm:$0xff]
    %v4173 = vld [vmem:[#allocation10 + $0x178] sm:$0xff]
    %v4174 = vld [vmem:[#allocation10 + $0x180] sm:$0xff]
    %v4175 = vld [vmem:[#allocation10 + $0x188] sm:$0xff]
    %v4176 = vld [vmem:[#allocation10 + $0x190] sm:$0xff]
    %v4177 = vld [vmem:[#allocation10 + $0x198] sm:$0xff]
    %v4178 = vld [vmem:[#allocation10 + $0x1a0] sm:$0xff]
    %v4179 = vld [vmem:[#allocation10 + $0x1a8] sm:$0xff]
    %v4180 = vld [vmem:[#allocation10 + $0x1b0] sm:$0xff]
    %v4181 = vld [vmem:[#allocation10 + $0x1b8] sm:$0xff]
    %v4182 = vld [vmem:[#allocation10 + $0x1c0] sm:$0xff]
    %v4183 = vld [vmem:[#allocation10 + $0x1c8] sm:$0xff]
    %v4184 = vld [vmem:[#allocation10 + $0x1d0] sm:$0xff]
    %v4185 = vld [vmem:[#allocation10 + $0x1d8] sm:$0xff]
    %v4186 = vld [vmem:[#allocation10 + $0x1e0] sm:$0xff]
    %v4187 = vld [vmem:[#allocation10 + $0x1e8] sm:$0xff]
    %v4188 = vld [vmem:[#allocation10 + $0x1f0] sm:$0xff]
    %v4189 = vld [vmem:[#allocation10 + $0x1f8] sm:$0xff]
    %v4191 = vrot.slane %v4120, 2
    %4193 = vmatprep.subr.mxu0 %v4127
    %4194 = vmatpush1.msra.mxu0 %v4126
    %4195 = vmatprep.subr.mxu0 %v4131
    %4196 = vmatpush1.msra.mxu0 %v4130
    %4197 = vmatprep.subr.mxu0 %v4135
    %4198 = vmatpush1.msra.mxu0 %v4134
    %4199 = vmatprep.subr.mxu0 %v4139
    %4200 = vmatpush1.msra.mxu0 %v4138
    %4201 = vmatprep.subr.mxu0 %v4143
    %4202 = vmatpush1.msra.mxu0 %v4142
    %4203 = vmatprep.subr.mxu0 %v4147
    %4204 = vmatpush1.msra.mxu0 %v4146
    %4205 = vmatprep.subr.mxu0 %v4151
    %4206 = vmatpush1.msra.mxu0 %v4150
    %4207 = vmatprep.subr.mxu0 %v4155
    %4208 = vmatpush1.msra.mxu0 %v4154
    %4209 = vmatprep.subr.mxu0 %v4159
    %4210 = vmatpush1.msra.mxu0 %v4158
    %4211 = vmatprep.subr.mxu0 %v4163
    %4212 = vmatpush1.msra.mxu0 %v4162
    %4213 = vmatprep.subr.mxu0 %v4167
    %4214 = vmatpush1.msra.mxu0 %v4166
    %4215 = vmatprep.subr.mxu0 %v4171
    %4216 = vmatpush1.msra.mxu0 %v4170
    %4217 = vmatprep.subr.mxu0 %v4175
    %4218 = vmatpush1.msra.mxu0 %v4174
    %4219 = vmatprep.subr.mxu0 %v4179
    %4220 = vmatpush1.msra.mxu0 %v4178
    %4221 = vmatprep.subr.mxu0 %v4183
    %4222 = vmatpush1.msra.mxu0 %v4182
    %4223 = vmatprep.subr.mxu0 %v4187
    %4224 = vmatpush1.msra.mxu0 %v4186
    %4225 = vmatprep.subr.mxu0 0.0
    %4226 = vmatpush1.msra.mxu0 0.0
    %4227 = vmatprep.subr.mxu0 0.0
    %4228 = vmatpush1.msra.mxu0 0.0
    %4229 = vmatprep.subr.mxu0 0.0
    %4230 = vmatpush1.msra.mxu0 0.0
    %4231 = vmatprep.subr.mxu0 0.0
    %4232 = vmatpush1.msra.mxu0 0.0
    %4233 = vmatprep.subr.mxu0 0.0
    %4234 = vmatpush1.msra.mxu0 0.0
    %4235 = vmatprep.subr.mxu0 0.0
    %4236 = vmatpush1.msra.mxu0 0.0
    %4237 = vmatprep.subr.mxu0 0.0
    %4238 = vmatpush1.msra.mxu0 0.0
    %4239 = vmatprep.subr.mxu0 0.0
    %4240 = vmatpush1.msra.mxu0 0.0
    %4241 = vmatprep.subr.mxu0 0.0
    %4242 = vmatpush1.msra.mxu0 0.0
    %4243 = vmatprep.subr.mxu0 0.0
    %4244 = vmatpush1.msra.mxu0 0.0
    %4245 = vmatprep.subr.mxu0 0.0
    %4246 = vmatpush1.msra.mxu0 0.0
    %4247 = vmatprep.subr.mxu0 0.0
    %4248 = vmatpush1.msra.mxu0 0.0
    %4249 = vmatprep.subr.mxu0 0.0
    %4250 = vmatpush1.msra.mxu0 0.0
    %4251 = vmatprep.subr.mxu0 0.0
    %4252 = vmatpush1.msra.mxu0 0.0
    %4253 = vmatprep.subr.mxu0 0.0
    %4254 = vmatpush1.msra.mxu0 0.0
    %4255 = vmatprep.subr.mxu0 0.0
    %4256 = vmatpush1.msra.mxu0 0.0
    %4257 = vmatprep.mubr.f32.mxu0 0.0
    %4258 = vmatmul.mubr.f32.gmra.mrb[0].mxu0 %v4191
    %v4259 = vpop.f32.mrb[0].mxu0
    %v4260 = vadd.f32 0.0, %v4259
    %v4261 = vpop.f32.mrb[0].mxu0
    %v4262 = vadd.f32 0.0, %v4261
    %4263 = vdwg.mxu0
    %4264 = vmatprep.subr.mxu0 %v4129
    %4265 = vmatpush1.msra.mxu0 %v4128
    %4266 = vmatprep.subr.mxu0 %v4133
    %4267 = vmatpush1.msra.mxu0 %v4132
    %4268 = vmatprep.subr.mxu0 %v4137
    %4269 = vmatpush1.msra.mxu0 %v4136
    %4270 = vmatprep.subr.mxu0 %v4141
    %4271 = vmatpush1.msra.mxu0 %v4140
    %4272 = vmatprep.subr.mxu0 %v4145
    %4273 = vmatpush1.msra.mxu0 %v4144
    %4274 = vmatprep.subr.mxu0 %v4149
    %4275 = vmatpush1.msra.mxu0 %v4148
    %4276 = vmatprep.subr.mxu0 %v4153
    %4277 = vmatpush1.msra.mxu0 %v4152
    %4278 = vmatprep.subr.mxu0 %v4157
    %4279 = vmatpush1.msra.mxu0 %v4156
    %4280 = vmatprep.subr.mxu0 %v4161
    %4281 = vmatpush1.msra.mxu0 %v4160
    %4282 = vmatprep.subr.mxu0 %v4165
    %4283 = vmatpush1.msra.mxu0 %v4164
    %4284 = vmatprep.subr.mxu0 %v4169
    %4285 = vmatpush1.msra.mxu0 %v4168
    %4286 = vmatprep.subr.mxu0 %v4173
    %4287 = vmatpush1.msra.mxu0 %v4172
    %4288 = vmatprep.subr.mxu0 %v4177
    %4289 = vmatpush1.msra.mxu0 %v4176
    %4290 = vmatprep.subr.mxu0 %v4181
    %4291 = vmatpush1.msra.mxu0 %v4180
    %4292 = vmatprep.subr.mxu0 %v4185
    %4293 = vmatpush1.msra.mxu0 %v4184
    %4294 = vmatprep.subr.mxu0 %v4189
    %4295 = vmatpush1.msra.mxu0 %v4188
    %4296 = vmatprep.subr.mxu0 0.0
    %4297 = vmatpush1.msra.mxu0 0.0
    %4298 = vmatprep.subr.mxu0 0.0
    %4299 = vmatpush1.msra.mxu0 0.0
    %4300 = vmatprep.subr.mxu0 0.0
    %4301 = vmatpush1.msra.mxu0 0.0
    %4302 = vmatprep.subr.mxu0 0.0
    %4303 = vmatpush1.msra.mxu0 0.0
    %4304 = vmatprep.subr.mxu0 0.0
    %4305 = vmatpush1.msra.mxu0 0.0
    %4306 = vmatprep.subr.mxu0 0.0
    %4307 = vmatpush1.msra.mxu0 0.0
    %4308 = vmatprep.subr.mxu0 0.0
    %4309 = vmatpush1.msra.mxu0 0.0
    %4310 = vmatprep.subr.mxu0 0.0
    %4311 = vmatpush1.msra.mxu0 0.0
    %4312 = vmatprep.subr.mxu0 0.0
    %4313 = vmatpush1.msra.mxu0 0.0
    %4314 = vmatprep.subr.mxu0 0.0
    %4315 = vmatpush1.msra.mxu0 0.0
    %4316 = vmatprep.subr.mxu0 0.0
    %4317 = vmatpush1.msra.mxu0 0.0
    %4318 = vmatprep.subr.mxu0 0.0
    %4319 = vmatpush1.msra.mxu0 0.0
    %4320 = vmatprep.subr.mxu0 0.0
    %4321 = vmatpush1.msra.mxu0 0.0
    %4322 = vmatprep.subr.mxu0 0.0
    %4323 = vmatpush1.msra.mxu0 0.0
    %4324 = vmatprep.subr.mxu0 0.0
    %4325 = vmatpush1.msra.mxu0 0.0
    %4326 = vmatprep.subr.mxu0 0.0
    %4327 = vmatpush1.msra.mxu0 0.0
    %4328 = vmatprep.mubr.f32.mxu0 0.0
    %4329 = vmatmul.mubr.f32.gmra.mrb[0].mxu0 %v4191
    %v4330 = vpop.f32.mrb[0].mxu0
    %v4331 = vadd.f32 0.0, %v4330
    %v4332 = vpop.f32.mrb[0].mxu0
    %v4333 = vadd.f32 0.0, %v4332
    %4334 = vdwg.mxu0
    %v4339 = vrot.slane %v4260, 4
    %v4340 = vrot.slane %v4262, 4
    %v4341 = vrot.slane %v4331, 4
    %v4342 = vrot.slane %v4333, 4
    %v4347 = vadd.f32 %v4122, %v4339
    %v4348 = vadd.f32 %v4123, %v4340
    %v4349 = vadd.f32 %v4124, %v4341
    %v4350 = vadd.f32 %v4125, %v4342
    %v4351 = vxor.u32 %v4347, 2147483648
    %v4352 = vmul.f32 %v4351, 1.442695
    %v4353 = vpow.pop %v4352
    %v4354 = vadd.f32 %v4353, 1.0
    %v4355 = vrcp.pop %v4354
    %v4356 = vmul.f32 1.0, %v4355
    %v4357 = vxor.u32 %v4348, 2147483648
    %v4358 = vmul.f32 %v4357, 1.442695
    %v4359 = vpow.pop %v4358
    %v4360 = vadd.f32 %v4359, 1.0
    %v4361 = vrcp.pop %v4360
    %v4362 = vmul.f32 1.0, %v4361
    %v4363 = vtanh.pop %v4349
    %v4364 = vxor.u32 %v4350, 2147483648
    %v4365 = vmul.f32 %v4364, 1.442695
    %v4366 = vpow.pop %v4365
    %v4367 = vadd.f32 %v4366, 1.0
    %v4368 = vrcp.pop %v4367
    %v4369 = vmul.f32 1.0, %v4368
    %v4371 = vrot.slane %v4118, 6
    %v4373 = vmul.f32 %v4362, %v4371
    %v4374 = vmul.f32 %v4356, %v4363
    %v4375 = vadd.f32 %v4373, %v4374
    %v4376 = vtanh.pop %v4375
    %v4377 = vmul.f32 %v4369, %v4376
    %4378 = vst [vmem:[%s7 + $0x8] sm:$0x30] %v4377
    %v4379 = vld [vmem:[#allocation2 + $0x20] sm:$0xc0]
    %v4380 = vld [vmem:[#allocation2 + $0x28] sm:$0xc0]
    %v4381 = vld [vmem:[#allocation2 + $0x30] sm:$0xc0]
    %v4382 = vld [vmem:[#allocation2 + $0x38] sm:$0xc0]
    %v4383 = vld [vmem:[#allocation10] sm:$0xff]
    %v4384 = vld [vmem:[#allocation10 + $0x8] sm:$0xff]
    %v4385 = vld [vmem:[#allocation10 + $0x10] sm:$0xff]
    %v4386 = vld [vmem:[#allocation10 + $0x18] sm:$0xff]
    %v4387 = vld [vmem:[#allocation10 + $0x20] sm:$0xff]
    %v4388 = vld [vmem:[#allocation10 + $0x28] sm:$0xff]
    %v4389 = vld [vmem:[#allocation10 + $0x30] sm:$0xff]
    %v4390 = vld [vmem:[#allocation10 + $0x38] sm:$0xff]
    %v4391 = vld [vmem:[#allocation10 + $0x40] sm:$0xff]
    %v4392 = vld [vmem:[#allocation10 + $0x48] sm:$0xff]
    %v4393 = vld [vmem:[#allocation10 + $0x50] sm:$0xff]
    %v4394 = vld [vmem:[#allocation10 + $0x58] sm:$0xff]
    %v4395 = vld [vmem:[#allocation10 + $0x60] sm:$0xff]
    %v4396 = vld [vmem:[#allocation10 + $0x68] sm:$0xff]
    %v4397 = vld [vmem:[#allocation10 + $0x70] sm:$0xff]
    %v4398 = vld [vmem:[#allocation10 + $0x78] sm:$0xff]
    %v4399 = vld [vmem:[#allocation10 + $0x80] sm:$0xff]
    %v4400 = vld [vmem:[#allocation10 + $0x88] sm:$0xff]
    %v4401 = vld [vmem:[#allocation10 + $0x90] sm:$0xff]
    %v4402 = vld [vmem:[#allocation10 + $0x98] sm:$0xff]
    %v4403 = vld [vmem:[#allocation10 + $0xa0] sm:$0xff]
    %v4404 = vld [vmem:[#allocation10 + $0xa8] sm:$0xff]
    %v4405 = vld [vmem:[#allocation10 + $0xb0] sm:$0xff]
    %v4406 = vld [vmem:[#allocation10 + $0xb8] sm:$0xff]
    %v4407 = vld [vmem:[#allocation10 + $0xc0] sm:$0xff]
    %v4408 = vld [vmem:[#allocation10 + $0xc8] sm:$0xff]
    %v4409 = vld [vmem:[#allocation10 + $0xd0] sm:$0xff]
    %v4410 = vld [vmem:[#allocation10 + $0xd8] sm:$0xff]
    %v4411 = vld [vmem:[#allocation10 + $0xe0] sm:$0xff]
    %v4412 = vld [vmem:[#allocation10 + $0xe8] sm:$0xff]
    %v4413 = vld [vmem:[#allocation10 + $0xf0] sm:$0xff]
    %v4414 = vld [vmem:[#allocation10 + $0xf8] sm:$0xff]
    %v4415 = vld [vmem:[#allocation10 + $0x100] sm:$0xff]
    %v4416 = vld [vmem:[#allocation10 + $0x108] sm:$0xff]
    %v4417 = vld [vmem:[#allocation10 + $0x110] sm:$0xff]
    %v4418 = vld [vmem:[#allocation10 + $0x118] sm:$0xff]
    %v4419 = vld [vmem:[#allocation10 + $0x120] sm:$0xff]
    %v4420 = vld [vmem:[#allocation10 + $0x128] sm:$0xff]
    %v4421 = vld [vmem:[#allocation10 + $0x130] sm:$0xff]
    %v4422 = vld [vmem:[#allocation10 + $0x138] sm:$0xff]
    %v4423 = vld [vmem:[#allocation10 + $0x140] sm:$0xff]
    %v4424 = vld [vmem:[#allocation10 + $0x148] sm:$0xff]
    %v4425 = vld [vmem:[#allocation10 + $0x150] sm:$0xff]
    %v4426 = vld [vmem:[#allocation10 + $0x158] sm:$0xff]
    %v4427 = vld [vmem:[#allocation10 + $0x160] sm:$0xff]
    %v4428 = vld [vmem:[#allocation10 + $0x168] sm:$0xff]
    %v4429 = vld [vmem:[#allocation10 + $0x170] sm:$0xff]
    %v4430 = vld [vmem:[#allocation10 + $0x178] sm:$0xff]
    %v4431 = vld [vmem:[#allocation10 + $0x180] sm:$0xff]
    %v4432 = vld [vmem:[#allocation10 + $0x188] sm:$0xff]
    %v4433 = vld [vmem:[#allocation10 + $0x190] sm:$0xff]
    %v4434 = vld [vmem:[#allocation10 + $0x198] sm:$0xff]
    %v4435 = vld [vmem:[#allocation10 + $0x1a0] sm:$0xff]
    %v4436 = vld [vmem:[#allocation10 + $0x1a8] sm:$0xff]
    %v4437 = vld [vmem:[#allocation10 + $0x1b0] sm:$0xff]
    %v4438 = vld [vmem:[#allocation10 + $0x1b8] sm:$0xff]
    %v4439 = vld [vmem:[#allocation10 + $0x1c0] sm:$0xff]
    %v4440 = vld [vmem:[#allocation10 + $0x1c8] sm:$0xff]
    %v4441 = vld [vmem:[#allocation10 + $0x1d0] sm:$0xff]
    %v4442 = vld [vmem:[#allocation10 + $0x1d8] sm:$0xff]
    %v4443 = vld [vmem:[#allocation10 + $0x1e0] sm:$0xff]
    %v4444 = vld [vmem:[#allocation10 + $0x1e8] sm:$0xff]
    %v4445 = vld [vmem:[#allocation10 + $0x1f0] sm:$0xff]
    %v4446 = vld [vmem:[#allocation10 + $0x1f8] sm:$0xff]
    %v4448 = vrot.slane %v4377, 4
    %4450 = vmatprep.subr.mxu0 %v4384
    %4451 = vmatpush1.msra.mxu0 %v4383
    %4452 = vmatprep.subr.mxu0 %v4388
    %4453 = vmatpush1.msra.mxu0 %v4387
    %4454 = vmatprep.subr.mxu0 %v4392
    %4455 = vmatpush1.msra.mxu0 %v4391
    %4456 = vmatprep.subr.mxu0 %v4396
    %4457 = vmatpush1.msra.mxu0 %v4395
    %4458 = vmatprep.subr.mxu0 %v4400
    %4459 = vmatpush1.msra.mxu0 %v4399
    %4460 = vmatprep.subr.mxu0 %v4404
    %4461 = vmatpush1.msra.mxu0 %v4403
    %4462 = vmatprep.subr.mxu0 %v4408
    %4463 = vmatpush1.msra.mxu0 %v4407
    %4464 = vmatprep.subr.mxu0 %v4412
    %4465 = vmatpush1.msra.mxu0 %v4411
    %4466 = vmatprep.subr.mxu0 %v4416
    %4467 = vmatpush1.msra.mxu0 %v4415
    %4468 = vmatprep.subr.mxu0 %v4420
    %4469 = vmatpush1.msra.mxu0 %v4419
    %4470 = vmatprep.subr.mxu0 %v4424
    %4471 = vmatpush1.msra.mxu0 %v4423
    %4472 = vmatprep.subr.mxu0 %v4428
    %4473 = vmatpush1.msra.mxu0 %v4427
    %4474 = vmatprep.subr.mxu0 %v4432
    %4475 = vmatpush1.msra.mxu0 %v4431
    %4476 = vmatprep.subr.mxu0 %v4436
    %4477 = vmatpush1.msra.mxu0 %v4435
    %4478 = vmatprep.subr.mxu0 %v4440
    %4479 = vmatpush1.msra.mxu0 %v4439
    %4480 = vmatprep.subr.mxu0 %v4444
    %4481 = vmatpush1.msra.mxu0 %v4443
    %4482 = vmatprep.subr.mxu0 0.0
    %4483 = vmatpush1.msra.mxu0 0.0
    %4484 = vmatprep.subr.mxu0 0.0
    %4485 = vmatpush1.msra.mxu0 0.0
    %4486 = vmatprep.subr.mxu0 0.0
    %4487 = vmatpush1.msra.mxu0 0.0
    %4488 = vmatprep.subr.mxu0 0.0
    %4489 = vmatpush1.msra.mxu0 0.0
    %4490 = vmatprep.subr.mxu0 0.0
    %4491 = vmatpush1.msra.mxu0 0.0
    %4492 = vmatprep.subr.mxu0 0.0
    %4493 = vmatpush1.msra.mxu0 0.0
    %4494 = vmatprep.subr.mxu0 0.0
    %4495 = vmatpush1.msra.mxu0 0.0
    %4496 = vmatprep.subr.mxu0 0.0
    %4497 = vmatpush1.msra.mxu0 0.0
    %4498 = vmatprep.subr.mxu0 0.0
    %4499 = vmatpush1.msra.mxu0 0.0
    %4500 = vmatprep.subr.mxu0 0.0
    %4501 = vmatpush1.msra.mxu0 0.0
    %4502 = vmatprep.subr.mxu0 0.0
    %4503 = vmatpush1.msra.mxu0 0.0
    %4504 = vmatprep.subr.mxu0 0.0
    %4505 = vmatpush1.msra.mxu0 0.0
    %4506 = vmatprep.subr.mxu0 0.0
    %4507 = vmatpush1.msra.mxu0 0.0
    %4508 = vmatprep.subr.mxu0 0.0
    %4509 = vmatpush1.msra.mxu0 0.0
    %4510 = vmatprep.subr.mxu0 0.0
    %4511 = vmatpush1.msra.mxu0 0.0
    %4512 = vmatprep.subr.mxu0 0.0
    %4513 = vmatpush1.msra.mxu0 0.0
    %4514 = vmatprep.mubr.f32.mxu0 0.0
    %4515 = vmatmul.mubr.f32.gmra.mrb[0].mxu0 %v4448
    %v4516 = vpop.f32.mrb[0].mxu0
    %v4517 = vadd.f32 0.0, %v4516
    %v4518 = vpop.f32.mrb[0].mxu0
    %v4519 = vadd.f32 0.0, %v4518
    %4520 = vdwg.mxu0
    %4521 = vmatprep.subr.mxu0 %v4386
    %4522 = vmatpush1.msra.mxu0 %v4385
    %4523 = vmatprep.subr.mxu0 %v4390
    %4524 = vmatpush1.msra.mxu0 %v4389
    %4525 = vmatprep.subr.mxu0 %v4394
    %4526 = vmatpush1.msra.mxu0 %v4393
    %4527 = vmatprep.subr.mxu0 %v4398
    %4528 = vmatpush1.msra.mxu0 %v4397
    %4529 = vmatprep.subr.mxu0 %v4402
    %4530 = vmatpush1.msra.mxu0 %v4401
    %4531 = vmatprep.subr.mxu0 %v4406
    %4532 = vmatpush1.msra.mxu0 %v4405
    %4533 = vmatprep.subr.mxu0 %v4410
    %4534 = vmatpush1.msra.mxu0 %v4409
    %4535 = vmatprep.subr.mxu0 %v4414
    %4536 = vmatpush1.msra.mxu0 %v4413
    %4537 = vmatprep.subr.mxu0 %v4418
    %4538 = vmatpush1.msra.mxu0 %v4417
    %4539 = vmatprep.subr.mxu0 %v4422
    %4540 = vmatpush1.msra.mxu0 %v4421
    %4541 = vmatprep.subr.mxu0 %v4426
    %4542 = vmatpush1.msra.mxu0 %v4425
    %4543 = vmatprep.subr.mxu0 %v4430
    %4544 = vmatpush1.msra.mxu0 %v4429
    %4545 = vmatprep.subr.mxu0 %v4434
    %4546 = vmatpush1.msra.mxu0 %v4433
    %4547 = vmatprep.subr.mxu0 %v4438
    %4548 = vmatpush1.msra.mxu0 %v4437
    %4549 = vmatprep.subr.mxu0 %v4442
    %4550 = vmatpush1.msra.mxu0 %v4441
    %4551 = vmatprep.subr.mxu0 %v4446
    %4552 = vmatpush1.msra.mxu0 %v4445
    %4553 = vmatprep.subr.mxu0 0.0
    %4554 = vmatpush1.msra.mxu0 0.0
    %4555 = vmatprep.subr.mxu0 0.0
    %4556 = vmatpush1.msra.mxu0 0.0
    %4557 = vmatprep.subr.mxu0 0.0
    %4558 = vmatpush1.msra.mxu0 0.0
    %4559 = vmatprep.subr.mxu0 0.0
    %4560 = vmatpush1.msra.mxu0 0.0
    %4561 = vmatprep.subr.mxu0 0.0
    %4562 = vmatpush1.msra.mxu0 0.0
    %4563 = vmatprep.subr.mxu0 0.0
    %4564 = vmatpush1.msra.mxu0 0.0
    %4565 = vmatprep.subr.mxu0 0.0
    %4566 = vmatpush1.msra.mxu0 0.0
    %4567 = vmatprep.subr.mxu0 0.0
    %4568 = vmatpush1.msra.mxu0 0.0
    %4569 = vmatprep.subr.mxu0 0.0
    %4570 = vmatpush1.msra.mxu0 0.0
    %4571 = vmatprep.subr.mxu0 0.0
    %4572 = vmatpush1.msra.mxu0 0.0
    %4573 = vmatprep.subr.mxu0 0.0
    %4574 = vmatpush1.msra.mxu0 0.0
    %4575 = vmatprep.subr.mxu0 0.0
    %4576 = vmatpush1.msra.mxu0 0.0
    %4577 = vmatprep.subr.mxu0 0.0
    %4578 = vmatpush1.msra.mxu0 0.0
    %4579 = vmatprep.subr.mxu0 0.0
    %4580 = vmatpush1.msra.mxu0 0.0
    %4581 = vmatprep.subr.mxu0 0.0
    %4582 = vmatpush1.msra.mxu0 0.0
    %4583 = vmatprep.subr.mxu0 0.0
    %4584 = vmatpush1.msra.mxu0 0.0
    %4585 = vmatprep.mubr.f32.mxu0 0.0
    %4586 = vmatmul.mubr.f32.gmra.mrb[0].mxu0 %v4448
    %v4587 = vpop.f32.mrb[0].mxu0
    %v4588 = vadd.f32 0.0, %v4587
    %v4589 = vpop.f32.mrb[0].mxu0
    %v4590 = vadd.f32 0.0, %v4589
    %4591 = vdwg.mxu0
    %v4596 = vrot.slane %v4517, 2
    %v4597 = vrot.slane %v4519, 2
    %v4598 = vrot.slane %v4588, 2
    %v4599 = vrot.slane %v4590, 2
    %v4604 = vadd.f32 %v4379, %v4596
    %v4605 = vadd.f32 %v4380, %v4597
    %v4606 = vadd.f32 %v4381, %v4598
    %v4607 = vadd.f32 %v4382, %v4599
    %v4608 = vxor.u32 %v4604, 2147483648
    %v4609 = vmul.f32 %v4608, 1.442695
    %v4610 = vpow.pop %v4609
    %v4611 = vadd.f32 %v4610, 1.0
    %v4612 = vrcp.pop %v4611
    %v4613 = vmul.f32 1.0, %v4612
    %v4614 = vxor.u32 %v4605, 2147483648
    %v4615 = vmul.f32 %v4614, 1.442695
    %v4616 = vpow.pop %v4615
    %v4617 = vadd.f32 %v4616, 1.0
    %v4618 = vrcp.pop %v4617
    %v4619 = vmul.f32 1.0, %v4618
    %v4620 = vtanh.pop %v4606
    %v4621 = vxor.u32 %v4607, 2147483648
    %v4622 = vmul.f32 %v4621, 1.442695
    %v4623 = vpow.pop %v4622
    %v4624 = vadd.f32 %v4623, 1.0
    %v4625 = vrcp.pop %v4624
    %v4626 = vmul.f32 1.0, %v4625
    %v4628 = vrot.slane %v4375, 6
    %v4630 = vmul.f32 %v4619, %v4628
    %v4631 = vmul.f32 %v4613, %v4620
    %v4632 = vadd.f32 %v4630, %v4631
    %v4633 = vtanh.pop %v4632
    %v4634 = vmul.f32 %v4626, %v4633
    %4635 = vst [vmem:[%s7 + $0x8] sm:$0xc0] %v4634
    %s4636 = scalar_lea.vmem [#allocation12], 2
    %4637 = vst [vmem:[%s4636 - $0x6] sm:$0xc0] %v4634
    %s4638 = scalar_lea.vmem [#allocation13], 2
    %4639 = vst [vmem:[%s4638 - $0x6] sm:$0xc0] %v4632
    // Predicated region
    $region46: #{encoder_forward.1} parent=1 // pred_check
      _
    $region47: #{encoder_forward.1} parent=1 // pred_check_branch
      %4641 = sbr.rel (0) target = $region49
    $region48: #{encoder_forward.1} parent=1 // pred_region
      _
    $region49: #{encoder_forward.1} parent=1 // pred_fallthru
      _
    // Predicated region
    $region50: #{encoder_forward.1} parent=1 // pred_check
      _
    $region51: #{encoder_forward.1} parent=1 // pred_check_branch
      %4643 = sbr.rel (0) target = $region53
    $region52: #{encoder_forward.1} parent=1 // pred_region
      %s4645 = ssub.s32 64, 64
      %4646 = vsyncadd [#allocation6], %s4645
      %s4647 = sshll.u32 [#allocation12], 4
      %s4648 = int_to_ptr.vmem [resolvable:$true] %s4647
      %4653 = dma.vmem_to_hbm [thread:$0]  %s4648, 64, %s8, [#allocation6], 32, 32, 2
    $region53: #{encoder_forward.1} parent=1 // pred_fallthru
      _
    // Predicated region
    $region54: #{encoder_forward.1} parent=1 // pred_check
      _
    $region55: #{encoder_forward.1} parent=1 // pred_check_branch
      %4655 = sbr.rel (0) target = $region57
    $region56: #{encoder_forward.1} parent=1 // pred_region
      %s4657 = ssub.s32 64, 64
      %4658 = vsyncadd [#allocation14], %s4657
      %s4659 = sshll.u32 [#allocation13], 4
      %s4660 = int_to_ptr.vmem [resolvable:$true] %s4659
      %4665 = dma.vmem_to_hbm [thread:$0]  %s4660, 64, %s9, [#allocation14], 32, 32, 2
    $region57: #{encoder_forward.1} parent=1 // pred_fallthru
      _
    // Predicated region
    $region58: #{encoder_forward.1} parent=1 // pred_check
      _
    $region59: #{encoder_forward.1} parent=1 // pred_check_branch
      %4667 = sbr.rel (0) target = $region61
    $region60: #{encoder_forward.1} parent=1 // pred_region
      _
    $region61: #{encoder_forward.1} parent=1 // pred_fallthru
      _
    // Predicated region
    $region62: #{encoder_forward.1} parent=1 // pred_check
      _
    $region63: #{encoder_forward.1} parent=1 // pred_check_branch
      %4669 = sbr.rel (0) target = $region65
    $region64: #{encoder_forward.1} parent=1 // pred_region
      %4670 = dma.done [#allocation6], 64
    $region65: #{encoder_forward.1} parent=1 // pred_fallthru
      _
    // Predicated region
    $region66: #{encoder_forward.1} parent=1 // pred_check
      _
    $region67: #{encoder_forward.1} parent=1 // pred_check_branch
      %4672 = sbr.rel (0) target = $region69
    $region68: #{encoder_forward.1} parent=1 // pred_region
      %4673 = dma.done [#allocation14], 64
    $region69: #{encoder_forward.1} parent=1 // pred_fallthru
      _
    %4674 = vsyncpa [#allocation5], 1
    %4675 = vsyncpa [#allocation8], 1
    %4676 = vsyncpa [#allocation11], 1
    %4677 = vsyncpa [#allocation6], 1
    %4678 = vsyncpa [#allocation14], 1

</llo_original>
